<compile_context>
chip_gen: v7x
topology: tpu7x:2x2x1
jax: 0.10.0
libtpu: 0.0.40
codegen_flags: <defaults>
</compile_context>

<pallas_src>
import functools

import jax
import jax.numpy as jnp
import numpy as np
from jax.experimental import pallas as pl
from jax.experimental.pallas import tpu as pltpu


# ------------------------------ fused kernel ------------------------------- #

def _lenet_fused_kernel(x_ref, a1e_ref, a1o_ref, b1_ref,
                        a2e_ref, a2o_ref, b2_ref,
                        w3_ref, b3_ref, w4_ref, b4_ref, out_ref, *, bt):
    """One batch tile of `bt` images (bt % 16 == 0), everything in VMEM."""

    def mm(a, b):
        return jnp.dot(a, b, preferred_element_type=jnp.float32)

    def pool_rows(a, h, lanes):
        # rows are (h, bt)-merged (row = oh*bt + b); bt % 16 == 0 keeps every
        # split / merge below aligned to the (8, 128) register tiling.
        a3 = a.reshape(h // 2, 2 * bt, lanes)
        m = jnp.maximum(a3[:, :bt, :], a3[:, bt:, :])
        return m.reshape((h // 2) * bt, lanes)

    def conv_bands(act, even_ref, odd_ref, h_out):
        # 5 width-banded matmuls per parity (one per kernel row); the stride-2
        # width selection of the 2x2 pool is baked into the band matrices, so
        # max(acc_even, acc_odd) IS the width pool.
        acc_e = mm(act[0:h_out * bt, :], even_ref[0])
        acc_o = mm(act[0:h_out * bt, :], odd_ref[0])
        for kh in range(1, 5):
            sl = act[kh * bt:(kh + h_out) * bt, :]
            acc_e = acc_e + mm(sl, even_ref[kh])
            acc_o = acc_o + mm(sl, odd_ref[kh])
        return jnp.maximum(acc_e, acc_o)

    # ---- conv1 + 2x2 max-pool + bias + relu --------------------------------
    x2 = x_ref[0]                                # (28*bt, 28) bf16, row = h*bt + b
    t1 = conv_bands(x2, a1e_ref, a1o_ref, 24)    # (24*bt, 120) f32, lane = oc*12 + j
    t1 = pool_rows(t1, 24, 120)                  # (12*bt, 120)  (height pool)
    p1 = jnp.maximum(t1 + b1_ref[...], 0.0)      # bias + relu, f32
    p1 = p1.astype(a2e_ref.dtype)                # bf16 MXU operand

    # ---- conv2 + pool + bias + relu (Dropout2d is identity in eval mode) ---
    t2 = conv_bands(p1, a2e_ref, a2o_ref, 8)     # (8*bt, 80) f32, lane = oc*4 + j
    t2 = pool_rows(t2, 8, 80)                    # (4*bt, 80)
    p2 = jnp.maximum(t2 + b2_ref[...], 0.0)
    p2 = p2.astype(w3_ref.dtype)

    # ---- fc1 + relu (NCHW flatten folded into w3's row permutation) --------
    h1 = mm(p2[0:bt, :], w3_ref[0])
    for oh in range(1, 4):
        h1 = h1 + mm(p2[oh * bt:(oh + 1) * bt, :], w3_ref[oh])
    h1 = jnp.maximum(h1 + b3_ref[...], 0.0)      # (bt, 128); F.dropout = identity
    h1 = h1.astype(w4_ref.dtype)

    # ---- fc2 + log_softmax (padded classes carry -1e30 bias -> exp() == 0) -
    z = mm(h1, w4_ref[...]) + b4_ref[...]        # (bt, 128) f32
    m = jnp.max(z, axis=-1, keepdims=True)
    lse = jnp.log(jnp.sum(jnp.exp(z - m), axis=-1, keepdims=True))
    out_ref[...] = z - m - lse


# ------------------------------ host wrapper -------------------------------- #

def _round_up(v, m):
    return (v + m - 1) // m * m


def lenet_forward(x_nchw, kp, *, block_b=256):
    """x_nchw: (N, 1, 28, 28) float32 -> (N, 10) log-probabilities."""
    n = x_nchw.shape[0]
    assert x_nchw.shape[1:] == (1, 28, 28), x_nchw.shape

    # Batch tile: multiple of 16 so bf16 sublane slices stay aligned.  Large
    # batches use block_b; smaller batches are split into >= 2 tiles where
    # possible so ("parallel",) can use both TensorCores (v7x megacore).
    if n >= 2 * block_b:
        bt = block_b
    else:
        bt = max(16, _round_up((n + 1) // 2, 16))
    n_pad = _round_up(n, bt)
    t = n_pad // bt

    # bf16 cast BEFORE the h-major relayout (halves its bytes); cast + pad +
    # transpose fuse into a single XLA pass under jit.
    x = x_nchw.reshape(n, 28, 28).astype(jnp.bfloat16)
    if n_pad != n:
        x = jnp.pad(x, ((0, n_pad - n), (0, 0), (0, 0)))
    # (T, 28*bt, 28): row = h*bt + (b within tile); batch on sublanes, width
    # on lanes.
    xt = x.reshape(t, bt, 28, 28).transpose(0, 2, 1, 3).reshape(t, 28 * bt, 28)

    def const_spec(arr):
        nz = (0,) * arr.ndim
        # Constant index_map => weights stay resident in VMEM; the pipeliner
        # skips re-DMA when the block index is unchanged between grid steps.
        return pl.BlockSpec(arr.shape, lambda i, z=nz: z)

    weight_names = ("a1e", "a1o", "b1", "a2e", "a2o", "b2",
                    "w3", "b3", "w4", "b4")
    weights = [kp[name] for name in weight_names]

    out = pl.pallas_call(
        functools.partial(_lenet_fused_kernel, bt=bt),
        out_shape=jax.ShapeDtypeStruct((n_pad, 128), jnp.float32),
        grid=(t,),
        in_specs=[pl.BlockSpec((1, 28 * bt, 28), lambda i: (i, 0, 0))]
                 + [const_spec(w) for w in weights],
        out_specs=pl.BlockSpec((bt, 128), lambda i: (i, 0)),
        compiler_params=pltpu.CompilerParams(
            dimension_semantics=("parallel",),
            vmem_limit_bytes=48 * 1024 * 1024),
    )(xt, *weights)

    return out[:n, :10]


# ------------------------------ weight packing ------------------------------ #

def init_params(key):
    """Synthetic weights in PyTorch layout (stand-in for the .pth checkpoint)."""
    ks = jax.random.split(key, 8)

    def u(k, shape, fan_in):
        bound = 1.0 / (fan_in ** 0.5)
        return jax.random.uniform(k, shape, jnp.float32, -bound, bound)

    return {
        "conv1_w": u(ks[0], (10, 1, 5, 5), 25),
        "conv1_b": u(ks[1], (10,), 25),
        "conv2_w": u(ks[2], (20, 10, 5, 5), 250),
        "conv2_b": u(ks[3], (20,), 250),
        "fc1_w": u(ks[4], (50, 320), 320),
        "fc1_b": u(ks[5], (50,), 320),
        "fc2_w": u(ks[6], (10, 50), 50),
        "fc2_b": u(ks[7], (10,), 50),
    }


def prepare_params(tp):
    """Pack torch-layout weights into the fused kernel's matmul constants."""
    w1 = np.asarray(tp["conv1_w"], np.float32)
    b1 = np.asarray(tp["conv1_b"], np.float32)
    w2 = np.asarray(tp["conv2_w"], np.float32)
    b2 = np.asarray(tp["conv2_b"], np.float32)
    f1w = np.asarray(tp["fc1_w"], np.float32)
    f1b = np.asarray(tp["fc1_b"], np.float32)
    f2w = np.asarray(tp["fc2_w"], np.float32)
    f2b = np.asarray(tp["fc2_b"], np.float32)

    # conv1: even/odd width-banded matrices (kernel row kh, pooled width j);
    # out lane = oc*12 + j; even/odd parity of the pre-pool width index.
    a1e = np.zeros((5, 28, 120), np.float32)
    a1o = np.zeros((5, 28, 120), np.float32)
    for kh in range(5):
        for oc in range(10):
            for j in range(12):
                for kw in range(5):
                    a1e[kh, 2 * j + kw, oc * 12 + j] = w1[oc, 0, kh, kw]
                    a1o[kh, 2 * j + 1 + kw, oc * 12 + j] = w1[oc, 0, kh, kw]
    b1p = np.repeat(b1, 12)[None, :]                       # (1, 120), lane = oc*12 + j

    # conv2: in lane = ic*12 + iw, out lane = oc*4 + j (pooled width j).
    a2e = np.zeros((5, 120, 80), np.float32)
    a2o = np.zeros((5, 120, 80), np.float32)
    for kh in range(5):
        for oc in range(20):
            for ic in range(10):
                for j in range(4):
                    for kw in range(5):
                        a2e[kh, ic * 12 + 2 * j + kw, oc * 4 + j] = w2[oc, ic, kh, kw]
                        a2o[kh, ic * 12 + 2 * j + 1 + kw, oc * 4 + j] = w2[oc, ic, kh, kw]
    b2p = np.repeat(b2, 4)[None, :]                        # (1, 80), lane = oc*4 + j

    # fc1: fold the channel-major .view(-1, 320) flatten into a row
    # permutation; pad out-features 50 -> 128 lanes with zeros.
    w3 = np.zeros((4, 80, 128), np.float32)
    for oh in range(4):
        for oc in range(20):
            for ow in range(4):
                w3[oh, oc * 4 + ow, :50] = f1w[:, oc * 16 + oh * 4 + ow]
    b3 = np.zeros((1, 128), np.float32)
    b3[0, :50] = f1b

    # fc2: pad to 128x128; padded classes get a -1e30 bias so they contribute
    # exp(-inf) = 0 to the softmax and can simply be sliced away afterwards.
    w4 = np.zeros((128, 128), np.float32)
    w4[:50, :10] = f2w.T
    b4 = np.full((1, 128), -1e30, np.float32)
    b4[0, :10] = f2b

    packed = dict(a1e=a1e, a1o=a1o, b1=b1p, a2e=a2e, a2o=a2o, b2=b2p,
                  w3=w3, b3=b3, w4=w4, b4=b4)
    # MXU operands in bf16 (f32 accumulation happens in-kernel); biases and
    # the -1e30 padded-class bias stay f32.
    mxu = {"a1e", "a1o", "a2e", "a2o", "w3", "w4"}
    return {k: jnp.asarray(v, dtype=jnp.bfloat16 if k in mxu else jnp.float32)
            for k, v in packed.items()}


# --------------------------- pure-JAX reference ----------------------------- #

def _reference_forward(x_nchw, tp):
    dn = ("NCHW", "OIHW", "NCHW")
    y = jax.lax.conv_general_dilated(x_nchw.astype(jnp.float32), tp["conv1_w"],
                                     (1, 1), "VALID", dimension_numbers=dn)
    y = y + tp["conv1_b"][None, :, None, None]
    y = jax.lax.reduce_window(y, -jnp.inf, jax.lax.max,
                              (1, 1, 2, 2), (1, 1, 2, 2), "VALID")
    y = jnp.maximum(y, 0.0)
    y = jax.lax.conv_general_dilated(y, tp["conv2_w"], (1, 1), "VALID",
                                     dimension_numbers=dn)
    y = y + tp["conv2_b"][None, :, None, None]
    y = jax.lax.reduce_window(y, -jnp.inf, jax.lax.max,
                              (1, 1, 2, 2), (1, 1, 2, 2), "VALID")
    y = jnp.maximum(y, 0.0)
    y = y.reshape(y.shape[0], 320)
    y = jnp.maximum(y @ tp["fc1_w"].T + tp["fc1_b"], 0.0)
    z = y @ tp["fc2_w"].T + tp["fc2_b"]
    return jax.nn.log_softmax(z, axis=-1)


# ----------------------------------- main ----------------------------------- #

if __name__ == "__main__":
    key = jax.random.PRNGKey(0)
    pkey, xkey = jax.random.split(key)
    torch_params = init_params(pkey)
    kparams = prepare_params(torch_params)

    # MNIST-shaped input (fc1's 320 = 20*4*4 features requires 28x28 spatial).
    x = jax.random.normal(xkey, (4, 1, 28, 28), dtype=jnp.float32)

    fwd = jax.jit(lenet_forward)
    out = jax.block_until_ready(fwd(x, kparams))

    assert out.shape == (4, 10), out.shape
    assert bool(jnp.all(jnp.isfinite(out)))
    # log_softmax sanity: rows sum to ~1 after exp.
    assert bool(jnp.allclose(jnp.sum(jnp.exp(out), axis=1), 1.0, atol=1e-4))

    # Cross-check against a plain-JAX/XLA f32 reference of the same network
    # (bf16 MXU operands with f32 accumulation stay well inside 5e-2).
    ref = _reference_forward(x, torch_params)
    max_err = float(jnp.max(jnp.abs(out - ref)))
    assert max_err < 5e-2, max_err

    print("KERNEL_OK")
</pallas_src>

<mosaic_0001>
module attributes {stable_mosaic.version = 11 : i64} {
  func.func @_lenet_fused_kernel(%arg0: i32, %arg1: memref<1x448x28xbf16, #tpu.memory_space<vmem>>, %arg2: memref<5x28x120xbf16, #tpu.memory_space<vmem>>, %arg3: memref<5x28x120xbf16, #tpu.memory_space<vmem>>, %arg4: memref<1x120xf32, #tpu.memory_space<vmem>>, %arg5: memref<5x120x80xbf16, #tpu.memory_space<vmem>>, %arg6: memref<5x120x80xbf16, #tpu.memory_space<vmem>>, %arg7: memref<1x80xf32, #tpu.memory_space<vmem>>, %arg8: memref<4x80x128xbf16, #tpu.memory_space<vmem>>, %arg9: memref<1x128xf32, #tpu.memory_space<vmem>>, %arg10: memref<128x128xbf16, #tpu.memory_space<vmem>>, %arg11: memref<1x128xf32, #tpu.memory_space<vmem>>, %arg12: memref<16x128xf32, #tpu.memory_space<vmem>>) attributes {dimension_semantics = [#tpu.dimension_semantics<parallel>], iteration_bounds = array<i64: 1>, scalar_prefetch = 0 : i64, scratch_operands = 0 : i64, tpu.core_type = #tpu.core_type<tc>, window_params = [{transform_indices = @transform_0, window_bounds = array<i64: 1, 448, 28>}, {pipeline_mode = #tpu.pipeline_mode<synchronous>, transform_indices = @transform_1, window_bounds = array<i64: 5, 28, 120>}, {pipeline_mode = #tpu.pipeline_mode<synchronous>, transform_indices = @transform_2, window_bounds = array<i64: 5, 28, 120>}, {pipeline_mode = #tpu.pipeline_mode<synchronous>, transform_indices = @transform_3, window_bounds = array<i64: 1, 120>}, {pipeline_mode = #tpu.pipeline_mode<synchronous>, transform_indices = @transform_4, window_bounds = array<i64: 5, 120, 80>}, {pipeline_mode = #tpu.pipeline_mode<synchronous>, transform_indices = @transform_5, window_bounds = array<i64: 5, 120, 80>}, {pipeline_mode = #tpu.pipeline_mode<synchronous>, transform_indices = @transform_6, window_bounds = array<i64: 1, 80>}, {pipeline_mode = #tpu.pipeline_mode<synchronous>, transform_indices = @transform_7, window_bounds = array<i64: 4, 80, 128>}, {pipeline_mode = #tpu.pipeline_mode<synchronous>, transform_indices = @transform_8, window_bounds = array<i64: 1, 128>}, {pipeline_mode = #tpu.pipeline_mode<synchronous>, transform_indices = @transform_9, window_bounds = array<i64: 128, 128>}, {pipeline_mode = #tpu.pipeline_mode<synchronous>, transform_indices = @transform_10, window_bounds = array<i64: 1, 128>}, {transform_indices = @transform_11, window_bounds = array<i64: 16, 128>}]} {
    %c0 = arith.constant 0 : index
    %c0_0 = arith.constant 0 : index
    %c0_1 = arith.constant 0 : index
    %0 = vector.load %arg1[%c0, %c0_0, %c0_1] : memref<1x448x28xbf16, #tpu.memory_space<vmem>>, vector<1x448x28xbf16>
    %1 = vector.shape_cast %0 : vector<1x448x28xbf16> to vector<448x28xbf16>
    %2 = vector.extract_strided_slice %1 {offsets = [0, 0], sizes = [384, 28], strides = [1, 1]} : vector<448x28xbf16> to vector<384x28xbf16>
    %c0_2 = arith.constant 0 : index
    %c0_3 = arith.constant 0 : index
    %c0_4 = arith.constant 0 : index
    %3 = vector.load %arg2[%c0_2, %c0_3, %c0_4] : memref<5x28x120xbf16, #tpu.memory_space<vmem>>, vector<1x28x120xbf16>
    %4 = vector.shape_cast %3 : vector<1x28x120xbf16> to vector<28x120xbf16>
    %cst = arith.constant dense<0.000000e+00> : vector<384x120xf32>
    %5 = tpu.matmul %2, %4, %cst {dimension_numbers = #tpu.dot_dimension_numbers<[1], [0], [0], [1], [0, 0, 1, 1], [], []>} : vector<384x28xbf16>, vector<28x120xbf16>, vector<384x120xf32> -> vector<384x120xf32>
    %6 = vector.extract_strided_slice %1 {offsets = [0, 0], sizes = [384, 28], strides = [1, 1]} : vector<448x28xbf16> to vector<384x28xbf16>
    %c0_5 = arith.constant 0 : index
    %c0_6 = arith.constant 0 : index
    %c0_7 = arith.constant 0 : index
    %7 = vector.load %arg3[%c0_5, %c0_6, %c0_7] : memref<5x28x120xbf16, #tpu.memory_space<vmem>>, vector<1x28x120xbf16>
    %8 = vector.shape_cast %7 : vector<1x28x120xbf16> to vector<28x120xbf16>
    %cst_8 = arith.constant dense<0.000000e+00> : vector<384x120xf32>
    %9 = tpu.matmul %6, %8, %cst_8 {dimension_numbers = #tpu.dot_dimension_numbers<[1], [0], [0], [1], [0, 0, 1, 1], [], []>} : vector<384x28xbf16>, vector<28x120xbf16>, vector<384x120xf32> -> vector<384x120xf32>
    %10 = vector.extract_strided_slice %1 {offsets = [16, 0], sizes = [384, 28], strides = [1, 1]} : vector<448x28xbf16> to vector<384x28xbf16>
    %c1 = arith.constant 1 : index
    %c0_9 = arith.constant 0 : index
    %c0_10 = arith.constant 0 : index
    %11 = vector.load %arg2[%c1, %c0_9, %c0_10] : memref<5x28x120xbf16, #tpu.memory_space<vmem>>, vector<1x28x120xbf16>
    %12 = vector.shape_cast %11 : vector<1x28x120xbf16> to vector<28x120xbf16>
    %cst_11 = arith.constant dense<0.000000e+00> : vector<384x120xf32>
    %13 = tpu.matmul %10, %12, %cst_11 {dimension_numbers = #tpu.dot_dimension_numbers<[1], [0], [0], [1], [0, 0, 1, 1], [], []>} : vector<384x28xbf16>, vector<28x120xbf16>, vector<384x120xf32> -> vector<384x120xf32>
    %14 = arith.addf %5, %13 : vector<384x120xf32>
    %c1_12 = arith.constant 1 : index
    %c0_13 = arith.constant 0 : index
    %c0_14 = arith.constant 0 : index
    %15 = vector.load %arg3[%c1_12, %c0_13, %c0_14] : memref<5x28x120xbf16, #tpu.memory_space<vmem>>, vector<1x28x120xbf16>
    %16 = vector.shape_cast %15 : vector<1x28x120xbf16> to vector<28x120xbf16>
    %cst_15 = arith.constant dense<0.000000e+00> : vector<384x120xf32>
    %17 = tpu.matmul %10, %16, %cst_15 {dimension_numbers = #tpu.dot_dimension_numbers<[1], [0], [0], [1], [0, 0, 1, 1], [], []>} : vector<384x28xbf16>, vector<28x120xbf16>, vector<384x120xf32> -> vector<384x120xf32>
    %18 = arith.addf %9, %17 : vector<384x120xf32>
    %19 = vector.extract_strided_slice %1 {offsets = [32, 0], sizes = [384, 28], strides = [1, 1]} : vector<448x28xbf16> to vector<384x28xbf16>
    %c2 = arith.constant 2 : index
    %c0_16 = arith.constant 0 : index
    %c0_17 = arith.constant 0 : index
    %20 = vector.load %arg2[%c2, %c0_16, %c0_17] : memref<5x28x120xbf16, #tpu.memory_space<vmem>>, vector<1x28x120xbf16>
    %21 = vector.shape_cast %20 : vector<1x28x120xbf16> to vector<28x120xbf16>
    %cst_18 = arith.constant dense<0.000000e+00> : vector<384x120xf32>
    %22 = tpu.matmul %19, %21, %cst_18 {dimension_numbers = #tpu.dot_dimension_numbers<[1], [0], [0], [1], [0, 0, 1, 1], [], []>} : vector<384x28xbf16>, vector<28x120xbf16>, vector<384x120xf32> -> vector<384x120xf32>
    %23 = arith.addf %14, %22 : vector<384x120xf32>
    %c2_19 = arith.constant 2 : index
    %c0_20 = arith.constant 0 : index
    %c0_21 = arith.constant 0 : index
    %24 = vector.load %arg3[%c2_19, %c0_20, %c0_21] : memref<5x28x120xbf16, #tpu.memory_space<vmem>>, vector<1x28x120xbf16>
    %25 = vector.shape_cast %24 : vector<1x28x120xbf16> to vector<28x120xbf16>
    %cst_22 = arith.constant dense<0.000000e+00> : vector<384x120xf32>
    %26 = tpu.matmul %19, %25, %cst_22 {dimension_numbers = #tpu.dot_dimension_numbers<[1], [0], [0], [1], [0, 0, 1, 1], [], []>} : vector<384x28xbf16>, vector<28x120xbf16>, vector<384x120xf32> -> vector<384x120xf32>
    %27 = arith.addf %18, %26 : vector<384x120xf32>
    %28 = vector.extract_strided_slice %1 {offsets = [48, 0], sizes = [384, 28], strides = [1, 1]} : vector<448x28xbf16> to vector<384x28xbf16>
    %c3 = arith.constant 3 : index
    %c0_23 = arith.constant 0 : index
    %c0_24 = arith.constant 0 : index
    %29 = vector.load %arg2[%c3, %c0_23, %c0_24] : memref<5x28x120xbf16, #tpu.memory_space<vmem>>, vector<1x28x120xbf16>
    %30 = vector.shape_cast %29 : vector<1x28x120xbf16> to vector<28x120xbf16>
    %cst_25 = arith.constant dense<0.000000e+00> : vector<384x120xf32>
    %31 = tpu.matmul %28, %30, %cst_25 {dimension_numbers = #tpu.dot_dimension_numbers<[1], [0], [0], [1], [0, 0, 1, 1], [], []>} : vector<384x28xbf16>, vector<28x120xbf16>, vector<384x120xf32> -> vector<384x120xf32>
    %32 = arith.addf %23, %31 : vector<384x120xf32>
    %c3_26 = arith.constant 3 : index
    %c0_27 = arith.constant 0 : index
    %c0_28 = arith.constant 0 : index
    %33 = vector.load %arg3[%c3_26, %c0_27, %c0_28] : memref<5x28x120xbf16, #tpu.memory_space<vmem>>, vector<1x28x120xbf16>
    %34 = vector.shape_cast %33 : vector<1x28x120xbf16> to vector<28x120xbf16>
    %cst_29 = arith.constant dense<0.000000e+00> : vector<384x120xf32>
    %35 = tpu.matmul %28, %34, %cst_29 {dimension_numbers = #tpu.dot_dimension_numbers<[1], [0], [0], [1], [0, 0, 1, 1], [], []>} : vector<384x28xbf16>, vector<28x120xbf16>, vector<384x120xf32> -> vector<384x120xf32>
    %36 = arith.addf %27, %35 : vector<384x120xf32>
    %37 = vector.extract_strided_slice %1 {offsets = [64, 0], sizes = [384, 28], strides = [1, 1]} : vector<448x28xbf16> to vector<384x28xbf16>
    %c4 = arith.constant 4 : index
    %c0_30 = arith.constant 0 : index
    %c0_31 = arith.constant 0 : index
    %38 = vector.load %arg2[%c4, %c0_30, %c0_31] : memref<5x28x120xbf16, #tpu.memory_space<vmem>>, vector<1x28x120xbf16>
    %39 = vector.shape_cast %38 : vector<1x28x120xbf16> to vector<28x120xbf16>
    %cst_32 = arith.constant dense<0.000000e+00> : vector<384x120xf32>
    %40 = tpu.matmul %37, %39, %cst_32 {dimension_numbers = #tpu.dot_dimension_numbers<[1], [0], [0], [1], [0, 0, 1, 1], [], []>} : vector<384x28xbf16>, vector<28x120xbf16>, vector<384x120xf32> -> vector<384x120xf32>
    %41 = arith.addf %32, %40 : vector<384x120xf32>
    %c4_33 = arith.constant 4 : index
    %c0_34 = arith.constant 0 : index
    %c0_35 = arith.constant 0 : index
    %42 = vector.load %arg3[%c4_33, %c0_34, %c0_35] : memref<5x28x120xbf16, #tpu.memory_space<vmem>>, vector<1x28x120xbf16>
    %43 = vector.shape_cast %42 : vector<1x28x120xbf16> to vector<28x120xbf16>
    %cst_36 = arith.constant dense<0.000000e+00> : vector<384x120xf32>
    %44 = tpu.matmul %37, %43, %cst_36 {dimension_numbers = #tpu.dot_dimension_numbers<[1], [0], [0], [1], [0, 0, 1, 1], [], []>} : vector<384x28xbf16>, vector<28x120xbf16>, vector<384x120xf32> -> vector<384x120xf32>
    %45 = arith.addf %36, %44 : vector<384x120xf32>
    %46 = arith.maximumf %41, %45 : vector<384x120xf32>
    %47 = vector.shape_cast %46 : vector<384x120xf32> to vector<12x32x120xf32>
    %48 = vector.extract_strided_slice %47 {offsets = [0, 0, 0], sizes = [12, 16, 120], strides = [1, 1, 1]} : vector<12x32x120xf32> to vector<12x16x120xf32>
    %49 = vector.extract_strided_slice %47 {offsets = [0, 16, 0], sizes = [12, 16, 120], strides = [1, 1, 1]} : vector<12x32x120xf32> to vector<12x16x120xf32>
    %50 = arith.maximumf %48, %49 : vector<12x16x120xf32>
    %51 = vector.shape_cast %50 : vector<12x16x120xf32> to vector<192x120xf32>
    %c0_37 = arith.constant 0 : index
    %c0_38 = arith.constant 0 : index
    %52 = vector.load %arg4[%c0_37, %c0_38] : memref<1x120xf32, #tpu.memory_space<vmem>>, vector<1x120xf32>
    %53 = vector.broadcast %52 : vector<1x120xf32> to vector<192x120xf32>
    %54 = arith.addf %51, %53 : vector<192x120xf32>
    %cst_39 = arith.constant 0.000000e+00 : f32
    %55 = vector.broadcast %cst_39 : f32 to vector<192x120xf32>
    %56 = arith.maximumf %54, %55 : vector<192x120xf32>
    %57 = arith.truncf %56 : vector<192x120xf32> to vector<192x120xbf16>
    %58 = vector.extract_strided_slice %57 {offsets = [0, 0], sizes = [128, 120], strides = [1, 1]} : vector<192x120xbf16> to vector<128x120xbf16>
    %c0_40 = arith.constant 0 : index
    %c0_41 = arith.constant 0 : index
    %c0_42 = arith.constant 0 : index
    %59 = vector.load %arg5[%c0_40, %c0_41, %c0_42] : memref<5x120x80xbf16, #tpu.memory_space<vmem>>, vector<1x120x80xbf16>
    %60 = vector.shape_cast %59 : vector<1x120x80xbf16> to vector<120x80xbf16>
    %cst_43 = arith.constant dense<0.000000e+00> : vector<128x80xf32>
    %61 = tpu.matmul %58, %60, %cst_43 {dimension_numbers = #tpu.dot_dimension_numbers<[1], [0], [0], [1], [0, 0, 1, 1], [], []>} : vector<128x120xbf16>, vector<120x80xbf16>, vector<128x80xf32> -> vector<128x80xf32>
    %62 = vector.extract_strided_slice %57 {offsets = [0, 0], sizes = [128, 120], strides = [1, 1]} : vector<192x120xbf16> to vector<128x120xbf16>
    %c0_44 = arith.constant 0 : index
    %c0_45 = arith.constant 0 : index
    %c0_46 = arith.constant 0 : index
    %63 = vector.load %arg6[%c0_44, %c0_45, %c0_46] : memref<5x120x80xbf16, #tpu.memory_space<vmem>>, vector<1x120x80xbf16>
    %64 = vector.shape_cast %63 : vector<1x120x80xbf16> to vector<120x80xbf16>
    %cst_47 = arith.constant dense<0.000000e+00> : vector<128x80xf32>
    %65 = tpu.matmul %62, %64, %cst_47 {dimension_numbers = #tpu.dot_dimension_numbers<[1], [0], [0], [1], [0, 0, 1, 1], [], []>} : vector<128x120xbf16>, vector<120x80xbf16>, vector<128x80xf32> -> vector<128x80xf32>
    %66 = vector.extract_strided_slice %57 {offsets = [16, 0], sizes = [128, 120], strides = [1, 1]} : vector<192x120xbf16> to vector<128x120xbf16>
    %c1_48 = arith.constant 1 : index
    %c0_49 = arith.constant 0 : index
    %c0_50 = arith.constant 0 : index
    %67 = vector.load %arg5[%c1_48, %c0_49, %c0_50] : memref<5x120x80xbf16, #tpu.memory_space<vmem>>, vector<1x120x80xbf16>
    %68 = vector.shape_cast %67 : vector<1x120x80xbf16> to vector<120x80xbf16>
    %cst_51 = arith.constant dense<0.000000e+00> : vector<128x80xf32>
    %69 = tpu.matmul %66, %68, %cst_51 {dimension_numbers = #tpu.dot_dimension_numbers<[1], [0], [0], [1], [0, 0, 1, 1], [], []>} : vector<128x120xbf16>, vector<120x80xbf16>, vector<128x80xf32> -> vector<128x80xf32>
    %70 = arith.addf %61, %69 : vector<128x80xf32>
    %c1_52 = arith.constant 1 : index
    %c0_53 = arith.constant 0 : index
    %c0_54 = arith.constant 0 : index
    %71 = vector.load %arg6[%c1_52, %c0_53, %c0_54] : memref<5x120x80xbf16, #tpu.memory_space<vmem>>, vector<1x120x80xbf16>
    %72 = vector.shape_cast %71 : vector<1x120x80xbf16> to vector<120x80xbf16>
    %cst_55 = arith.constant dense<0.000000e+00> : vector<128x80xf32>
    %73 = tpu.matmul %66, %72, %cst_55 {dimension_numbers = #tpu.dot_dimension_numbers<[1], [0], [0], [1], [0, 0, 1, 1], [], []>} : vector<128x120xbf16>, vector<120x80xbf16>, vector<128x80xf32> -> vector<128x80xf32>
    %74 = arith.addf %65, %73 : vector<128x80xf32>
    %75 = vector.extract_strided_slice %57 {offsets = [32, 0], sizes = [128, 120], strides = [1, 1]} : vector<192x120xbf16> to vector<128x120xbf16>
    %c2_56 = arith.constant 2 : index
    %c0_57 = arith.constant 0 : index
    %c0_58 = arith.constant 0 : index
    %76 = vector.load %arg5[%c2_56, %c0_57, %c0_58] : memref<5x120x80xbf16, #tpu.memory_space<vmem>>, vector<1x120x80xbf16>
    %77 = vector.shape_cast %76 : vector<1x120x80xbf16> to vector<120x80xbf16>
    %cst_59 = arith.constant dense<0.000000e+00> : vector<128x80xf32>
    %78 = tpu.matmul %75, %77, %cst_59 {dimension_numbers = #tpu.dot_dimension_numbers<[1], [0], [0], [1], [0, 0, 1, 1], [], []>} : vector<128x120xbf16>, vector<120x80xbf16>, vector<128x80xf32> -> vector<128x80xf32>
    %79 = arith.addf %70, %78 : vector<128x80xf32>
    %c2_60 = arith.constant 2 : index
    %c0_61 = arith.constant 0 : index
    %c0_62 = arith.constant 0 : index
    %80 = vector.load %arg6[%c2_60, %c0_61, %c0_62] : memref<5x120x80xbf16, #tpu.memory_space<vmem>>, vector<1x120x80xbf16>
    %81 = vector.shape_cast %80 : vector<1x120x80xbf16> to vector<120x80xbf16>
    %cst_63 = arith.constant dense<0.000000e+00> : vector<128x80xf32>
    %82 = tpu.matmul %75, %81, %cst_63 {dimension_numbers = #tpu.dot_dimension_numbers<[1], [0], [0], [1], [0, 0, 1, 1], [], []>} : vector<128x120xbf16>, vector<120x80xbf16>, vector<128x80xf32> -> vector<128x80xf32>
    %83 = arith.addf %74, %82 : vector<128x80xf32>
    %84 = vector.extract_strided_slice %57 {offsets = [48, 0], sizes = [128, 120], strides = [1, 1]} : vector<192x120xbf16> to vector<128x120xbf16>
    %c3_64 = arith.constant 3 : index
    %c0_65 = arith.constant 0 : index
    %c0_66 = arith.constant 0 : index
    %85 = vector.load %arg5[%c3_64, %c0_65, %c0_66] : memref<5x120x80xbf16, #tpu.memory_space<vmem>>, vector<1x120x80xbf16>
    %86 = vector.shape_cast %85 : vector<1x120x80xbf16> to vector<120x80xbf16>
    %cst_67 = arith.constant dense<0.000000e+00> : vector<128x80xf32>
    %87 = tpu.matmul %84, %86, %cst_67 {dimension_numbers = #tpu.dot_dimension_numbers<[1], [0], [0], [1], [0, 0, 1, 1], [], []>} : vector<128x120xbf16>, vector<120x80xbf16>, vector<128x80xf32> -> vector<128x80xf32>
    %88 = arith.addf %79, %87 : vector<128x80xf32>
    %c3_68 = arith.constant 3 : index
    %c0_69 = arith.constant 0 : index
    %c0_70 = arith.constant 0 : index
    %89 = vector.load %arg6[%c3_68, %c0_69, %c0_70] : memref<5x120x80xbf16, #tpu.memory_space<vmem>>, vector<1x120x80xbf16>
    %90 = vector.shape_cast %89 : vector<1x120x80xbf16> to vector<120x80xbf16>
    %cst_71 = arith.constant dense<0.000000e+00> : vector<128x80xf32>
    %91 = tpu.matmul %84, %90, %cst_71 {dimension_numbers = #tpu.dot_dimension_numbers<[1], [0], [0], [1], [0, 0, 1, 1], [], []>} : vector<128x120xbf16>, vector<120x80xbf16>, vector<128x80xf32> -> vector<128x80xf32>
    %92 = arith.addf %83, %91 : vector<128x80xf32>
    %93 = vector.extract_strided_slice %57 {offsets = [64, 0], sizes = [128, 120], strides = [1, 1]} : vector<192x120xbf16> to vector<128x120xbf16>
    %c4_72 = arith.constant 4 : index
    %c0_73 = arith.constant 0 : index
    %c0_74 = arith.constant 0 : index
    %94 = vector.load %arg5[%c4_72, %c0_73, %c0_74] : memref<5x120x80xbf16, #tpu.memory_space<vmem>>, vector<1x120x80xbf16>
    %95 = vector.shape_cast %94 : vector<1x120x80xbf16> to vector<120x80xbf16>
    %cst_75 = arith.constant dense<0.000000e+00> : vector<128x80xf32>
    %96 = tpu.matmul %93, %95, %cst_75 {dimension_numbers = #tpu.dot_dimension_numbers<[1], [0], [0], [1], [0, 0, 1, 1], [], []>} : vector<128x120xbf16>, vector<120x80xbf16>, vector<128x80xf32> -> vector<128x80xf32>
    %97 = arith.addf %88, %96 : vector<128x80xf32>
    %c4_76 = arith.constant 4 : index
    %c0_77 = arith.constant 0 : index
    %c0_78 = arith.constant 0 : index
    %98 = vector.load %arg6[%c4_76, %c0_77, %c0_78] : memref<5x120x80xbf16, #tpu.memory_space<vmem>>, vector<1x120x80xbf16>
    %99 = vector.shape_cast %98 : vector<1x120x80xbf16> to vector<120x80xbf16>
    %cst_79 = arith.constant dense<0.000000e+00> : vector<128x80xf32>
    %100 = tpu.matmul %93, %99, %cst_79 {dimension_numbers = #tpu.dot_dimension_numbers<[1], [0], [0], [1], [0, 0, 1, 1], [], []>} : vector<128x120xbf16>, vector<120x80xbf16>, vector<128x80xf32> -> vector<128x80xf32>
    %101 = arith.addf %92, %100 : vector<128x80xf32>
    %102 = arith.maximumf %97, %101 : vector<128x80xf32>
    %103 = vector.shape_cast %102 : vector<128x80xf32> to vector<4x32x80xf32>
    %104 = vector.extract_strided_slice %103 {offsets = [0, 0, 0], sizes = [4, 16, 80], strides = [1, 1, 1]} : vector<4x32x80xf32> to vector<4x16x80xf32>
    %105 = vector.extract_strided_slice %103 {offsets = [0, 16, 0], sizes = [4, 16, 80], strides = [1, 1, 1]} : vector<4x32x80xf32> to vector<4x16x80xf32>
    %106 = arith.maximumf %104, %105 : vector<4x16x80xf32>
    %107 = vector.shape_cast %106 : vector<4x16x80xf32> to vector<64x80xf32>
    %c0_80 = arith.constant 0 : index
    %c0_81 = arith.constant 0 : index
    %108 = vector.load %arg7[%c0_80, %c0_81] : memref<1x80xf32, #tpu.memory_space<vmem>>, vector<1x80xf32>
    %109 = vector.broadcast %108 : vector<1x80xf32> to vector<64x80xf32>
    %110 = arith.addf %107, %109 : vector<64x80xf32>
    %cst_82 = arith.constant 0.000000e+00 : f32
    %111 = vector.broadcast %cst_82 : f32 to vector<64x80xf32>
    %112 = arith.maximumf %110, %111 : vector<64x80xf32>
    %113 = arith.truncf %112 : vector<64x80xf32> to vector<64x80xbf16>
    %114 = vector.extract_strided_slice %113 {offsets = [0, 0], sizes = [16, 80], strides = [1, 1]} : vector<64x80xbf16> to vector<16x80xbf16>
    %c0_83 = arith.constant 0 : index
    %c0_84 = arith.constant 0 : index
    %c0_85 = arith.constant 0 : index
    %115 = vector.load %arg8[%c0_83, %c0_84, %c0_85] : memref<4x80x128xbf16, #tpu.memory_space<vmem>>, vector<1x80x128xbf16>
    %116 = vector.shape_cast %115 : vector<1x80x128xbf16> to vector<80x128xbf16>
    %cst_86 = arith.constant dense<0.000000e+00> : vector<16x128xf32>
    %117 = tpu.matmul %114, %116, %cst_86 {dimension_numbers = #tpu.dot_dimension_numbers<[1], [0], [0], [1], [0, 0, 1, 1], [], []>} : vector<16x80xbf16>, vector<80x128xbf16>, vector<16x128xf32> -> vector<16x128xf32>
    %118 = vector.extract_strided_slice %113 {offsets = [16, 0], sizes = [16, 80], strides = [1, 1]} : vector<64x80xbf16> to vector<16x80xbf16>
    %c1_87 = arith.constant 1 : index
    %c0_88 = arith.constant 0 : index
    %c0_89 = arith.constant 0 : index
    %119 = vector.load %arg8[%c1_87, %c0_88, %c0_89] : memref<4x80x128xbf16, #tpu.memory_space<vmem>>, vector<1x80x128xbf16>
    %120 = vector.shape_cast %119 : vector<1x80x128xbf16> to vector<80x128xbf16>
    %cst_90 = arith.constant dense<0.000000e+00> : vector<16x128xf32>
    %121 = tpu.matmul %118, %120, %cst_90 {dimension_numbers = #tpu.dot_dimension_numbers<[1], [0], [0], [1], [0, 0, 1, 1], [], []>} : vector<16x80xbf16>, vector<80x128xbf16>, vector<16x128xf32> -> vector<16x128xf32>
    %122 = arith.addf %117, %121 : vector<16x128xf32>
    %123 = vector.extract_strided_slice %113 {offsets = [32, 0], sizes = [16, 80], strides = [1, 1]} : vector<64x80xbf16> to vector<16x80xbf16>
    %c2_91 = arith.constant 2 : index
    %c0_92 = arith.constant 0 : index
    %c0_93 = arith.constant 0 : index
    %124 = vector.load %arg8[%c2_91, %c0_92, %c0_93] : memref<4x80x128xbf16, #tpu.memory_space<vmem>>, vector<1x80x128xbf16>
    %125 = vector.shape_cast %124 : vector<1x80x128xbf16> to vector<80x128xbf16>
    %cst_94 = arith.constant dense<0.000000e+00> : vector<16x128xf32>
    %126 = tpu.matmul %123, %125, %cst_94 {dimension_numbers = #tpu.dot_dimension_numbers<[1], [0], [0], [1], [0, 0, 1, 1], [], []>} : vector<16x80xbf16>, vector<80x128xbf16>, vector<16x128xf32> -> vector<16x128xf32>
    %127 = arith.addf %122, %126 : vector<16x128xf32>
    %128 = vector.extract_strided_slice %113 {offsets = [48, 0], sizes = [16, 80], strides = [1, 1]} : vector<64x80xbf16> to vector<16x80xbf16>
    %c3_95 = arith.constant 3 : index
    %c0_96 = arith.constant 0 : index
    %c0_97 = arith.constant 0 : index
    %129 = vector.load %arg8[%c3_95, %c0_96, %c0_97] : memref<4x80x128xbf16, #tpu.memory_space<vmem>>, vector<1x80x128xbf16>
    %130 = vector.shape_cast %129 : vector<1x80x128xbf16> to vector<80x128xbf16>
    %cst_98 = arith.constant dense<0.000000e+00> : vector<16x128xf32>
    %131 = tpu.matmul %128, %130, %cst_98 {dimension_numbers = #tpu.dot_dimension_numbers<[1], [0], [0], [1], [0, 0, 1, 1], [], []>} : vector<16x80xbf16>, vector<80x128xbf16>, vector<16x128xf32> -> vector<16x128xf32>
    %132 = arith.addf %127, %131 : vector<16x128xf32>
    %c0_99 = arith.constant 0 : index
    %c0_100 = arith.constant 0 : index
    %133 = vector.load %arg9[%c0_99, %c0_100] : memref<1x128xf32, #tpu.memory_space<vmem>>, vector<1x128xf32>
    %134 = vector.broadcast %133 : vector<1x128xf32> to vector<16x128xf32>
    %135 = arith.addf %132, %134 : vector<16x128xf32>
    %cst_101 = arith.constant 0.000000e+00 : f32
    %136 = vector.broadcast %cst_101 : f32 to vector<16x128xf32>
    %137 = arith.maximumf %135, %136 : vector<16x128xf32>
    %138 = arith.truncf %137 : vector<16x128xf32> to vector<16x128xbf16>
    %c0_102 = arith.constant 0 : index
    %c0_103 = arith.constant 0 : index
    %139 = vector.load %arg10[%c0_102, %c0_103] : memref<128x128xbf16, #tpu.memory_space<vmem>>, vector<128x128xbf16>
    %cst_104 = arith.constant dense<0.000000e+00> : vector<16x128xf32>
    %140 = tpu.matmul %138, %139, %cst_104 {dimension_numbers = #tpu.dot_dimension_numbers<[1], [0], [0], [1], [0, 0, 1, 1], [], []>} : vector<16x128xbf16>, vector<128x128xbf16>, vector<16x128xf32> -> vector<16x128xf32>
    %c0_105 = arith.constant 0 : index
    %c0_106 = arith.constant 0 : index
    %141 = vector.load %arg11[%c0_105, %c0_106] : memref<1x128xf32, #tpu.memory_space<vmem>>, vector<1x128xf32>
    %142 = vector.broadcast %141 : vector<1x128xf32> to vector<16x128xf32>
    %143 = arith.addf %140, %142 : vector<16x128xf32>
    %cst_107 = arith.constant dense<0xFF800000> : vector<16xf32>
    %144 = vector.multi_reduction <maximumf>, %143, %cst_107 [1] : vector<16x128xf32> to vector<16xf32>
    %145 = vector.shape_cast %144 : vector<16xf32> to vector<16x1xf32>
    %146 = vector.broadcast %145 : vector<16x1xf32> to vector<16x128xf32>
    %147 = arith.subf %143, %146 : vector<16x128xf32>
    %148 = math.exp %147 : vector<16x128xf32>
    %cst_108 = arith.constant dense<0.000000e+00> : vector<16xf32>
    %149 = vector.multi_reduction <add>, %148, %cst_108 [1] : vector<16x128xf32> to vector<16xf32>
    %150 = vector.shape_cast %149 : vector<16xf32> to vector<16x1xf32>
    %151 = math.log %150 : vector<16x1xf32>
    %152 = vector.broadcast %145 : vector<16x1xf32> to vector<16x128xf32>
    %153 = arith.subf %143, %152 : vector<16x128xf32>
    %154 = vector.broadcast %151 : vector<16x1xf32> to vector<16x128xf32>
    %155 = arith.subf %153, %154 : vector<16x128xf32>
    %c0_109 = arith.constant 0 : index
    %c0_110 = arith.constant 0 : index
    %156 = vector.load %arg12[%c0_109, %c0_110] : memref<16x128xf32, #tpu.memory_space<vmem>>, vector<16x128xf32>
    tpu.vector_store %arg12[%c0_109, %c0_110], %155 {strides = array<i32>} : memref<16x128xf32, #tpu.memory_space<vmem>>, vector<16x128xf32>,
    return
  }
  func.func @transform_0(%arg0: i32) -> (i32, i32, i32) {
    %c0_i32 = arith.constant 0 : i32
    %c0_i32_0 = arith.constant 0 : i32
    %c0_i32_1 = arith.constant 0 : i32
    return %arg0, %c0_i32, %c0_i32_0 : i32, i32, i32
  }
  func.func @transform_1(%arg0: i32) -> (i32, i32, i32) {
    %c0_i32 = arith.constant 0 : i32
    %c0_i32_0 = arith.constant 0 : i32
    %c0_i32_1 = arith.constant 0 : i32
    %c0_i32_2 = arith.constant 0 : i32
    return %c0_i32, %c0_i32_0, %c0_i32_1 : i32, i32, i32
  }
  func.func @transform_2(%arg0: i32) -> (i32, i32, i32) {
    %c0_i32 = arith.constant 0 : i32
    %c0_i32_0 = arith.constant 0 : i32
    %c0_i32_1 = arith.constant 0 : i32
    %c0_i32_2 = arith.constant 0 : i32
    return %c0_i32, %c0_i32_0, %c0_i32_1 : i32, i32, i32
  }
  func.func @transform_3(%arg0: i32) -> (i32, i32) {
    %c0_i32 = arith.constant 0 : i32
    %c0_i32_0 = arith.constant 0 : i32
    %c0_i32_1 = arith.constant 0 : i32
    return %c0_i32, %c0_i32_0 : i32, i32
  }
  func.func @transform_4(%arg0: i32) -> (i32, i32, i32) {
    %c0_i32 = arith.constant 0 : i32
    %c0_i32_0 = arith.constant 0 : i32
    %c0_i32_1 = arith.constant 0 : i32
    %c0_i32_2 = arith.constant 0 : i32
    return %c0_i32, %c0_i32_0, %c0_i32_1 : i32, i32, i32
  }
  func.func @transform_5(%arg0: i32) -> (i32, i32, i32) {
    %c0_i32 = arith.constant 0 : i32
    %c0_i32_0 = arith.constant 0 : i32
    %c0_i32_1 = arith.constant 0 : i32
    %c0_i32_2 = arith.constant 0 : i32
    return %c0_i32, %c0_i32_0, %c0_i32_1 : i32, i32, i32
  }
  func.func @transform_6(%arg0: i32) -> (i32, i32) {
    %c0_i32 = arith.constant 0 : i32
    %c0_i32_0 = arith.constant 0 : i32
    %c0_i32_1 = arith.constant 0 : i32
    return %c0_i32, %c0_i32_0 : i32, i32
  }
  func.func @transform_7(%arg0: i32) -> (i32, i32, i32) {
    %c0_i32 = arith.constant 0 : i32
    %c0_i32_0 = arith.constant 0 : i32
    %c0_i32_1 = arith.constant 0 : i32
    %c0_i32_2 = arith.constant 0 : i32
    return %c0_i32, %c0_i32_0, %c0_i32_1 : i32, i32, i32
  }
  func.func @transform_8(%arg0: i32) -> (i32, i32) {
    %c0_i32 = arith.constant 0 : i32
    %c0_i32_0 = arith.constant 0 : i32
    %c0_i32_1 = arith.constant 0 : i32
    return %c0_i32, %c0_i32_0 : i32, i32
  }
  func.func @transform_9(%arg0: i32) -> (i32, i32) {
    %c0_i32 = arith.constant 0 : i32
    %c0_i32_0 = arith.constant 0 : i32
    %c0_i32_1 = arith.constant 0 : i32
    return %c0_i32, %c0_i32_0 : i32, i32
  }
  func.func @transform_10(%arg0: i32) -> (i32, i32) {
    %c0_i32 = arith.constant 0 : i32
    %c0_i32_0 = arith.constant 0 : i32
    %c0_i32_1 = arith.constant 0 : i32
    return %c0_i32, %c0_i32_0 : i32, i32
  }
  func.func @transform_11(%arg0: i32) -> (i32, i32) {
    %c0_i32 = arith.constant 0 : i32
    %c0_i32_0 = arith.constant 0 : i32
    return %arg0, %c0_i32 : i32, i32
  }
}

</mosaic_0001>

<llo_original>
// kernel: lenet_forward.1
$region0: #{lenet_forward.1}
  #allocation0 [shape = 'u32[]', space=smem, size = 0x4, offset = 0x4, fixed_abs, tag = 'smem constant byte address 0x4 - core index']
  #allocation1 [shape = 'u32[144,128]{1,0:T(1,128)}', space=vmem, size = 0x12000, scoped, tag = 'internal scratch']
  %s0 = inlined_call_operand.vmem [shape: bf16[1,448,28], index: 0, kind: input, shape index: {}]
  %s1 = inlined_call_operand.vmem [shape: bf16[5,28,120], index: 1, kind: input, shape index: {}]
  %s2 = inlined_call_operand.vmem [shape: bf16[5,28,120], index: 2, kind: input, shape index: {}]
  %s3 = inlined_call_operand.vmem [shape: f32[1,120], index: 3, kind: input, shape index: {}]
  %s4 = inlined_call_operand.vmem [shape: bf16[5,120,80], index: 4, kind: input, shape index: {}]
  %s5 = inlined_call_operand.vmem [shape: bf16[5,120,80], index: 5, kind: input, shape index: {}]
  %s6 = inlined_call_operand.vmem [shape: f32[1,80], index: 6, kind: input, shape index: {}]
  %s7 = inlined_call_operand.vmem [shape: bf16[4,80,128], index: 7, kind: input, shape index: {}]
  %s8 = inlined_call_operand.vmem [shape: f32[1,128], index: 8, kind: input, shape index: {}]
  %s9 = inlined_call_operand.vmem [shape: bf16[128,128], index: 9, kind: input, shape index: {}]
  %s10 = inlined_call_operand.vmem [shape: f32[1,128], index: 10, kind: input, shape index: {}]
  %s11 = inlined_call_operand.vmem [shape: f32[16,128], index: 11, kind: output, shape index: {}]
  %s12 = sld [smem:[#allocation0]]
  $region54: #{lenet_forward.1} parent=0
    _
  %s14 = ssub.s32 1, %s12
  %s15 = scalar_select 0, %s14, %s12
  // Predicated region
  $region2: #{lenet_forward.1} parent=0 // pred_check
    _
  $region3: #{lenet_forward.1} parent=0 // pred_check_branch
    %17 = sbr.rel (0) target = $region5
  $region4: #{lenet_forward.1} parent=0 // pred_region
    _
  $region5: #{lenet_forward.1} parent=0 // pred_fallthru
    _
  // Predicated region
  $region6: #{lenet_forward.1} parent=0 // pred_check
    _
  $region7: #{lenet_forward.1} parent=0 // pred_check_branch
    %19 = sbr.rel (0) target = $region9
  $region8: #{lenet_forward.1} parent=0 // pred_region
    _
  $region9: #{lenet_forward.1} parent=0 // pred_fallthru
    _
  // Predicated region
  $region10: #{lenet_forward.1} parent=0 // pred_check
    _
  $region11: #{lenet_forward.1} parent=0 // pred_check_branch
    %21 = sbr.rel (0) target = $region13
  $region12: #{lenet_forward.1} parent=0 // pred_region
    _
  $region13: #{lenet_forward.1} parent=0 // pred_fallthru
    _
  // Predicated region
  $region14: #{lenet_forward.1} parent=0 // pred_check
    _
  $region15: #{lenet_forward.1} parent=0 // pred_check_branch
    %23 = sbr.rel (0) target = $region17
  $region16: #{lenet_forward.1} parent=0 // pred_region
    _
  $region17: #{lenet_forward.1} parent=0 // pred_fallthru
    _
  // Predicated region
  $region18: #{lenet_forward.1} parent=0 // pred_check
    _
  $region19: #{lenet_forward.1} parent=0 // pred_check_branch
    %25 = sbr.rel (0) target = $region21
  $region20: #{lenet_forward.1} parent=0 // pred_region
    _
  $region21: #{lenet_forward.1} parent=0 // pred_fallthru
    _
  // Predicated region
  $region22: #{lenet_forward.1} parent=0 // pred_check
    _
  $region23: #{lenet_forward.1} parent=0 // pred_check_branch
    %27 = sbr.rel (0) target = $region25
  $region24: #{lenet_forward.1} parent=0 // pred_region
    _
  $region25: #{lenet_forward.1} parent=0 // pred_fallthru
    _
  // Predicated region
  $region26: #{lenet_forward.1} parent=0 // pred_check
    _
  $region27: #{lenet_forward.1} parent=0 // pred_check_branch
    %29 = sbr.rel (0) target = $region29
  $region28: #{lenet_forward.1} parent=0 // pred_region
    _
  $region29: #{lenet_forward.1} parent=0 // pred_fallthru
    _
  // Predicated region
  $region30: #{lenet_forward.1} parent=0 // pred_check
    _
  $region31: #{lenet_forward.1} parent=0 // pred_check_branch
    %31 = sbr.rel (0) target = $region33
  $region32: #{lenet_forward.1} parent=0 // pred_region
    _
  $region33: #{lenet_forward.1} parent=0 // pred_fallthru
    _
  // Predicated region
  $region34: #{lenet_forward.1} parent=0 // pred_check
    _
  $region35: #{lenet_forward.1} parent=0 // pred_check_branch
    %33 = sbr.rel (0) target = $region37
  $region36: #{lenet_forward.1} parent=0 // pred_region
    _
  $region37: #{lenet_forward.1} parent=0 // pred_fallthru
    _
  // Predicated region
  $region38: #{lenet_forward.1} parent=0 // pred_check
    _
  $region39: #{lenet_forward.1} parent=0 // pred_check_branch
    %35 = sbr.rel (0) target = $region41
  $region40: #{lenet_forward.1} parent=0 // pred_region
    _
  $region41: #{lenet_forward.1} parent=0 // pred_fallthru
    _
  // Predicated region
  $region42: #{lenet_forward.1} parent=0 // pred_check
    _
  $region43: #{lenet_forward.1} parent=0 // pred_check_branch
    %37 = sbr.rel (0) target = $region45
  $region44: #{lenet_forward.1} parent=0 // pred_region
    _
  $region45: #{lenet_forward.1} parent=0 // pred_fallthru
    _
  %v39 = vld [vmem:[%s0] sm:$0xf]
  %v40 = vld [vmem:[%s0 + $0x4] sm:$0xf]
  %v41 = vld [vmem:[%s0 + $0x8] sm:$0xf]
  %v42 = vld [vmem:[%s0 + $0xc] sm:$0xf]
  %v43 = vld [vmem:[%s0 + $0x10] sm:$0xf]
  %v44 = vld [vmem:[%s0 + $0x14] sm:$0xf]
  %v45 = vld [vmem:[%s0 + $0x18] sm:$0xf]
  %v46 = vld [vmem:[%s0 + $0x1c] sm:$0xf]
  %v47 = vld [vmem:[%s0 + $0x20] sm:$0xf]
  %v48 = vld [vmem:[%s0 + $0x24] sm:$0xf]
  %v49 = vld [vmem:[%s0 + $0x28] sm:$0xf]
  %v50 = vld [vmem:[%s0 + $0x2c] sm:$0xf]
  %v51 = vld [vmem:[%s0 + $0x30] sm:$0xf]
  %v52 = vld [vmem:[%s0 + $0x34] sm:$0xf]
  %v53 = vld [vmem:[%s0 + $0x38] sm:$0xf]
  %v54 = vld [vmem:[%s0 + $0x3c] sm:$0xf]
  %v55 = vld [vmem:[%s0 + $0x40] sm:$0xf]
  %v56 = vld [vmem:[%s0 + $0x44] sm:$0xf]
  %v57 = vld [vmem:[%s0 + $0x48] sm:$0xf]
  %v58 = vld [vmem:[%s0 + $0x4c] sm:$0xf]
  %v59 = vld [vmem:[%s0 + $0x50] sm:$0xf]
  %v60 = vld [vmem:[%s0 + $0x54] sm:$0xf]
  %v61 = vld [vmem:[%s0 + $0x58] sm:$0xf]
  %v62 = vld [vmem:[%s0 + $0x5c] sm:$0xf]
  %v63 = vld [vmem:[%s0 + $0x60] sm:$0xf]
  %v64 = vld [vmem:[%s0 + $0x64] sm:$0xf]
  %v65 = vld [vmem:[%s0 + $0x68] sm:$0xf]
  %v66 = vld [vmem:[%s0 + $0x6c] sm:$0xf]
  %v67 = vld [vmem:[%s0 + $0x70] sm:$0xf]
  %v68 = vld [vmem:[%s0 + $0x74] sm:$0xf]
  %v69 = vld [vmem:[%s0 + $0x78] sm:$0xf]
  %v70 = vld [vmem:[%s0 + $0x7c] sm:$0xf]
  %v71 = vld [vmem:[%s0 + $0x80] sm:$0xf]
  %v72 = vld [vmem:[%s0 + $0x84] sm:$0xf]
  %v73 = vld [vmem:[%s0 + $0x88] sm:$0xf]
  %v74 = vld [vmem:[%s0 + $0x8c] sm:$0xf]
  %v75 = vld [vmem:[%s0 + $0x90] sm:$0xf]
  %v76 = vld [vmem:[%s0 + $0x94] sm:$0xf]
  %v77 = vld [vmem:[%s0 + $0x98] sm:$0xf]
  %v78 = vld [vmem:[%s0 + $0x9c] sm:$0xf]
  %v79 = vld [vmem:[%s0 + $0xa0] sm:$0xf]
  %v80 = vld [vmem:[%s0 + $0xa4] sm:$0xf]
  %v81 = vld [vmem:[%s0 + $0xa8] sm:$0xf]
  %v82 = vld [vmem:[%s0 + $0xac] sm:$0xf]
  %v83 = vld [vmem:[%s0 + $0xb0] sm:$0xf]
  %v84 = vld [vmem:[%s0 + $0xb4] sm:$0xf]
  %v85 = vld [vmem:[%s0 + $0xb8] sm:$0xf]
  %v86 = vld [vmem:[%s0 + $0xbc] sm:$0xf]
  %v87 = vld [vmem:[%s0 + $0xc0] sm:$0xf]
  %v88 = vld [vmem:[%s0 + $0xc4] sm:$0xf]
  %v89 = vld [vmem:[%s0 + $0xc8] sm:$0xf]
  %v90 = vld [vmem:[%s0 + $0xcc] sm:$0xf]
  %v91 = vld [vmem:[%s0 + $0xd0] sm:$0xf]
  %v92 = vld [vmem:[%s0 + $0xd4] sm:$0xf]
  %v93 = vld [vmem:[%s0 + $0xd8] sm:$0xf]
  %v94 = vld [vmem:[%s0 + $0xdc] sm:$0xf]
  %v95 = vld [vmem:[%s1] sm:$0xf]
  %v96 = vld [vmem:[%s1 + $0x4] sm:$0xf]
  %v97 = vld [vmem:[%s1 + $0x8] sm:$0xf]
  %v98 = vld [vmem:[%s1 + $0xc] sm:$0x3]
  %v99 = vld [vmem:[%s2] sm:$0xf]
  %v100 = vld [vmem:[%s2 + $0x4] sm:$0xf]
  %v101 = vld [vmem:[%s2 + $0x8] sm:$0xf]
  %v102 = vld [vmem:[%s2 + $0xc] sm:$0x3]
  %s103 = scalar_lea.vmem %s1, 16
  %v104 = vld [vmem:[%s103] sm:$0xf]
  %v105 = vld [vmem:[%s103 + $0x4] sm:$0xf]
  %v106 = vld [vmem:[%s103 + $0x8] sm:$0xf]
  %v107 = vld [vmem:[%s103 + $0xc] sm:$0x3]
  %v156 = vunpack.c.l.b16 %v41
  %v157 = vunpack.c.l.b16 %v42
  %v158 = vunpack.c.l.b16 %v43
  %v159 = vunpack.c.l.b16 %v44
  %v160 = vunpack.c.l.b16 %v45
  %v161 = vunpack.c.l.b16 %v46
  %v162 = vunpack.c.l.b16 %v47
  %v163 = vunpack.c.l.b16 %v48
  %v164 = vunpack.c.l.b16 %v49
  %v165 = vunpack.c.l.b16 %v50
  %v166 = vunpack.c.l.b16 %v51
  %v167 = vunpack.c.l.b16 %v52
  %v168 = vunpack.c.l.b16 %v53
  %v169 = vunpack.c.l.b16 %v54
  %v170 = vunpack.c.l.b16 %v55
  %v171 = vunpack.c.l.b16 %v56
  %v172 = vunpack.c.l.b16 %v57
  %v173 = vunpack.c.l.b16 %v58
  %v174 = vunpack.c.l.b16 %v59
  %v175 = vunpack.c.l.b16 %v60
  %v176 = vunpack.c.l.b16 %v61
  %v177 = vunpack.c.l.b16 %v62
  %v178 = vunpack.c.l.b16 %v63
  %v179 = vunpack.c.l.b16 %v64
  %v180 = vunpack.c.l.b16 %v65
  %v181 = vunpack.c.l.b16 %v66
  %v182 = vunpack.c.l.b16 %v67
  %v183 = vunpack.c.l.b16 %v68
  %v184 = vunpack.c.l.b16 %v69
  %v185 = vunpack.c.l.b16 %v70
  %v186 = vunpack.c.l.b16 %v71
  %v187 = vunpack.c.l.b16 %v72
  %v188 = vunpack.c.l.b16 %v73
  %v189 = vunpack.c.l.b16 %v74
  %v190 = vunpack.c.l.b16 %v75
  %v191 = vunpack.c.l.b16 %v76
  %v192 = vunpack.c.l.b16 %v77
  %v193 = vunpack.c.l.b16 %v78
  %v194 = vunpack.c.l.b16 %v79
  %v195 = vunpack.c.l.b16 %v80
  %v196 = vunpack.c.l.b16 %v81
  %v197 = vunpack.c.l.b16 %v82
  %v198 = vunpack.c.l.b16 %v83
  %v199 = vunpack.c.l.b16 %v84
  %v200 = vunpack.c.l.b16 %v85
  %v201 = vunpack.c.l.b16 %v86
  %v202 = vunpack.c.l.b16 %v87
  %v203 = vunpack.c.l.b16 %v88
  %v204 = vpack.c.b16 %v157, %v156
  %v205 = vpack.c.b16 %v159, %v158
  %v206 = vpack.c.b16 %v161, %v160
  %v207 = vpack.c.b16 %v163, %v162
  %v208 = vpack.c.b16 %v165, %v164
  %v209 = vpack.c.b16 %v167, %v166
  %v210 = vpack.c.b16 %v169, %v168
  %v211 = vpack.c.b16 %v171, %v170
  %v212 = vpack.c.b16 %v173, %v172
  %v213 = vpack.c.b16 %v175, %v174
  %v214 = vpack.c.b16 %v177, %v176
  %v215 = vpack.c.b16 %v179, %v178
  %v216 = vpack.c.b16 %v181, %v180
  %v217 = vpack.c.b16 %v183, %v182
  %v218 = vpack.c.b16 %v185, %v184
  %v219 = vpack.c.b16 %v187, %v186
  %v220 = vpack.c.b16 %v189, %v188
  %v221 = vpack.c.b16 %v191, %v190
  %v222 = vpack.c.b16 %v193, %v192
  %v223 = vpack.c.b16 %v195, %v194
  %v224 = vpack.c.b16 %v197, %v196
  %v225 = vpack.c.b16 %v199, %v198
  %v226 = vpack.c.b16 %v201, %v200
  %v227 = vpack.c.b16 %v203, %v202
  %v232 = vunpack.c.l.b16 %v104
  %v233 = vunpack.c.l.b16 %v105
  %v234 = vunpack.c.l.b16 %v106
  %v235 = vunpack.c.l.b16 %v107
  %v236 = vpack.c.b16 %v233, %v232
  %v237 = vpack.c.b16 %v235, %v234
  %vm239 = vcmask 228352
  %v241 = vsel %vm239, %v204, 0
  %v244 = vsel %vm239, %v205, 0
  %v247 = vsel %vm239, %v206, 0
  %v250 = vsel %vm239, %v207, 0
  %v253 = vsel %vm239, %v208, 0
  %v256 = vsel %vm239, %v209, 0
  %v259 = vsel %vm239, %v210, 0
  %v262 = vsel %vm239, %v211, 0
  %v265 = vsel %vm239, %v212, 0
  %v268 = vsel %vm239, %v213, 0
  %v271 = vsel %vm239, %v214, 0
  %v274 = vsel %vm239, %v215, 0
  %v277 = vsel %vm239, %v216, 0
  %v280 = vsel %vm239, %v217, 0
  %v283 = vsel %vm239, %v218, 0
  %v286 = vsel %vm239, %v219, 0
  %v289 = vsel %vm239, %v220, 0
  %v292 = vsel %vm239, %v221, 0
  %v295 = vsel %vm239, %v222, 0
  %v298 = vsel %vm239, %v223, 0
  %v301 = vsel %vm239, %v224, 0
  %v304 = vsel %vm239, %v225, 0
  %v307 = vsel %vm239, %v226, 0
  %v310 = vsel %vm239, %v227, 0
  %vm312 = vcmask 1045504
  %v314 = vsel %vm312, %v237, 0
  %316 = vmatprep.subr.bf16.mxu0 0
  %317 = vmatpush1.bf16.msra.mxu0 %v236
  %318 = vmatprep.subr.bf16.mxu0 0
  %319 = vmatpush1.bf16.msra.mxu0 %v314
  %320 = vmatprep.subr.bf16.mxu0 0
  %321 = vmatpush1.bf16.msra.mxu0 0
  %322 = vmatprep.subr.bf16.mxu0 0
  %323 = vmatpush1.bf16.msra.mxu0 0
  %324 = vmatprep.subr.bf16.mxu0 0
  %325 = vmatpush1.bf16.msra.mxu0 0
  %326 = vmatprep.subr.bf16.mxu0 0
  %327 = vmatpush1.bf16.msra.mxu0 0
  %328 = vmatprep.subr.bf16.mxu0 0
  %329 = vmatpush1.bf16.msra.mxu0 0
  %330 = vmatprep.subr.bf16.mxu0 0
  %331 = vmatpush1.bf16.msra.mxu0 0
  %332 = vmatprep.subr.bf16.mxu0 0
  %333 = vmatpush1.bf16.msra.mxu0 0
  %334 = vmatprep.subr.bf16.mxu0 0
  %335 = vmatpush1.bf16.msra.mxu0 0
  %336 = vmatprep.subr.bf16.mxu0 0
  %337 = vmatpush1.bf16.msra.mxu0 0
  %338 = vmatprep.subr.bf16.mxu0 0
  %339 = vmatpush1.bf16.msra.mxu0 0
  %340 = vmatprep.subr.bf16.mxu0 0
  %341 = vmatpush1.bf16.msra.mxu0 0
  %342 = vmatprep.subr.bf16.mxu0 0
  %343 = vmatpush1.bf16.msra.mxu0 0
  %344 = vmatprep.subr.bf16.mxu0 0
  %345 = vmatpush1.bf16.msra.mxu0 0
  %346 = vmatprep.subr.bf16.mxu0 0
  %347 = vmatpush1.bf16.msra.mxu0 0
  %348 = vmatprep.mubr.bf16.mxu0 0
  %349 = vmatmul.mubr.bf16.gmra.mrb[0].mxu0 %v241
  %v350 = vpop.f32.mrb[0].mxu0
  %v351 = vadd.f32 0.0, %v350
  %v352 = vpop.f32.mrb[0].mxu0
  %v353 = vpop.f32.mrb[0].mxu0
  %v354 = vadd.f32 0.0, %v353
  %v355 = vpop.f32.mrb[0].mxu0
  %356 = vmatprep.mubr.bf16.mxu0 0
  %357 = vmatmul.mubr.bf16.gmra.mrb[0].mxu0 %v244
  %v358 = vpop.f32.mrb[0].mxu0
  %v359 = vadd.f32 0.0, %v358
  %v360 = vpop.f32.mrb[0].mxu0
  %v361 = vpop.f32.mrb[0].mxu0
  %v362 = vadd.f32 0.0, %v361
  %v363 = vpop.f32.mrb[0].mxu0
  %364 = vmatprep.mubr.bf16.mxu0 0
  %365 = vmatmul.mubr.bf16.gmra.mrb[0].mxu0 %v247
  %v366 = vpop.f32.mrb[0].mxu0
  %v367 = vadd.f32 0.0, %v366
  %v368 = vpop.f32.mrb[0].mxu0
  %v369 = vpop.f32.mrb[0].mxu0
  %v370 = vadd.f32 0.0, %v369
  %v371 = vpop.f32.mrb[0].mxu0
  %372 = vmatprep.mubr.bf16.mxu0 0
  %373 = vmatmul.mubr.bf16.gmra.mrb[0].mxu0 %v250
  %v374 = vpop.f32.mrb[0].mxu0
  %v375 = vadd.f32 0.0, %v374
  %v376 = vpop.f32.mrb[0].mxu0
  %v377 = vpop.f32.mrb[0].mxu0
  %v378 = vadd.f32 0.0, %v377
  %v379 = vpop.f32.mrb[0].mxu0
  %380 = vmatprep.mubr.bf16.mxu0 0
  %381 = vmatmul.mubr.bf16.gmra.mrb[0].mxu0 %v253
  %v382 = vpop.f32.mrb[0].mxu0
  %v383 = vadd.f32 0.0, %v382
  %v384 = vpop.f32.mrb[0].mxu0
  %v385 = vpop.f32.mrb[0].mxu0
  %v386 = vadd.f32 0.0, %v385
  %v387 = vpop.f32.mrb[0].mxu0
  %388 = vmatprep.mubr.bf16.mxu0 0
  %389 = vmatmul.mubr.bf16.gmra.mrb[0].mxu0 %v256
  %v390 = vpop.f32.mrb[0].mxu0
  %v391 = vadd.f32 0.0, %v390
  %v392 = vpop.f32.mrb[0].mxu0
  %v393 = vpop.f32.mrb[0].mxu0
  %v394 = vadd.f32 0.0, %v393
  %v395 = vpop.f32.mrb[0].mxu0
  %396 = vmatprep.mubr.bf16.mxu0 0
  %397 = vmatmul.mubr.bf16.gmra.mrb[0].mxu0 %v259
  %v398 = vpop.f32.mrb[0].mxu0
  %v399 = vadd.f32 0.0, %v398
  %v400 = vpop.f32.mrb[0].mxu0
  %v401 = vpop.f32.mrb[0].mxu0
  %v402 = vadd.f32 0.0, %v401
  %v403 = vpop.f32.mrb[0].mxu0
  %404 = vmatprep.mubr.bf16.mxu0 0
  %405 = vmatmul.mubr.bf16.gmra.mrb[0].mxu0 %v262
  %v406 = vpop.f32.mrb[0].mxu0
  %v407 = vadd.f32 0.0, %v406
  %v408 = vpop.f32.mrb[0].mxu0
  %v409 = vpop.f32.mrb[0].mxu0
  %v410 = vadd.f32 0.0, %v409
  %v411 = vpop.f32.mrb[0].mxu0
  %412 = vmatprep.mubr.bf16.mxu0 0
  %413 = vmatmul.mubr.bf16.gmra.mrb[0].mxu0 %v265
  %v414 = vpop.f32.mrb[0].mxu0
  %v415 = vadd.f32 0.0, %v414
  %v416 = vpop.f32.mrb[0].mxu0
  %v417 = vpop.f32.mrb[0].mxu0
  %v418 = vadd.f32 0.0, %v417
  %v419 = vpop.f32.mrb[0].mxu0
  %420 = vmatprep.mubr.bf16.mxu0 0
  %421 = vmatmul.mubr.bf16.gmra.mrb[0].mxu0 %v268
  %v422 = vpop.f32.mrb[0].mxu0
  %v423 = vadd.f32 0.0, %v422
  %v424 = vpop.f32.mrb[0].mxu0
  %v425 = vpop.f32.mrb[0].mxu0
  %v426 = vadd.f32 0.0, %v425
  %v427 = vpop.f32.mrb[0].mxu0
  %428 = vmatprep.mubr.bf16.mxu0 0
  %429 = vmatmul.mubr.bf16.gmra.mrb[0].mxu0 %v271
  %v430 = vpop.f32.mrb[0].mxu0
  %v431 = vadd.f32 0.0, %v430
  %v432 = vpop.f32.mrb[0].mxu0
  %v433 = vpop.f32.mrb[0].mxu0
  %v434 = vadd.f32 0.0, %v433
  %v435 = vpop.f32.mrb[0].mxu0
  %436 = vmatprep.mubr.bf16.mxu0 0
  %437 = vmatmul.mubr.bf16.gmra.mrb[0].mxu0 %v274
  %v438 = vpop.f32.mrb[0].mxu0
  %v439 = vadd.f32 0.0, %v438
  %v440 = vpop.f32.mrb[0].mxu0
  %v441 = vpop.f32.mrb[0].mxu0
  %v442 = vadd.f32 0.0, %v441
  %v443 = vpop.f32.mrb[0].mxu0
  %444 = vmatprep.mubr.bf16.mxu0 0
  %445 = vmatmul.mubr.bf16.gmra.mrb[0].mxu0 %v277
  %v446 = vpop.f32.mrb[0].mxu0
  %v447 = vadd.f32 0.0, %v446
  %v448 = vpop.f32.mrb[0].mxu0
  %v449 = vpop.f32.mrb[0].mxu0
  %v450 = vadd.f32 0.0, %v449
  %v451 = vpop.f32.mrb[0].mxu0
  %452 = vmatprep.mubr.bf16.mxu0 0
  %453 = vmatmul.mubr.bf16.gmra.mrb[0].mxu0 %v280
  %v454 = vpop.f32.mrb[0].mxu0
  %v455 = vadd.f32 0.0, %v454
  %v456 = vpop.f32.mrb[0].mxu0
  %v457 = vpop.f32.mrb[0].mxu0
  %v458 = vadd.f32 0.0, %v457
  %v459 = vpop.f32.mrb[0].mxu0
  %460 = vmatprep.mubr.bf16.mxu0 0
  %461 = vmatmul.mubr.bf16.gmra.mrb[0].mxu0 %v283
  %v462 = vpop.f32.mrb[0].mxu0
  %v463 = vadd.f32 0.0, %v462
  %v464 = vpop.f32.mrb[0].mxu0
  %v465 = vpop.f32.mrb[0].mxu0
  %v466 = vadd.f32 0.0, %v465
  %v467 = vpop.f32.mrb[0].mxu0
  %468 = vmatprep.mubr.bf16.mxu0 0
  %469 = vmatmul.mubr.bf16.gmra.mrb[0].mxu0 %v286
  %v470 = vpop.f32.mrb[0].mxu0
  %v471 = vadd.f32 0.0, %v470
  %v472 = vpop.f32.mrb[0].mxu0
  %v473 = vpop.f32.mrb[0].mxu0
  %v474 = vadd.f32 0.0, %v473
  %v475 = vpop.f32.mrb[0].mxu0
  %476 = vmatprep.mubr.bf16.mxu0 0
  %477 = vmatmul.mubr.bf16.gmra.mrb[0].mxu0 %v289
  %v478 = vpop.f32.mrb[0].mxu0
  %v479 = vadd.f32 0.0, %v478
  %v480 = vpop.f32.mrb[0].mxu0
  %v481 = vpop.f32.mrb[0].mxu0
  %v482 = vadd.f32 0.0, %v481
  %v483 = vpop.f32.mrb[0].mxu0
  %484 = vmatprep.mubr.bf16.mxu0 0
  %485 = vmatmul.mubr.bf16.gmra.mrb[0].mxu0 %v292
  %v486 = vpop.f32.mrb[0].mxu0
  %v487 = vadd.f32 0.0, %v486
  %v488 = vpop.f32.mrb[0].mxu0
  %v489 = vpop.f32.mrb[0].mxu0
  %v490 = vadd.f32 0.0, %v489
  %v491 = vpop.f32.mrb[0].mxu0
  %492 = vmatprep.mubr.bf16.mxu0 0
  %493 = vmatmul.mubr.bf16.gmra.mrb[0].mxu0 %v295
  %v494 = vpop.f32.mrb[0].mxu0
  %v495 = vadd.f32 0.0, %v494
  %v496 = vpop.f32.mrb[0].mxu0
  %v497 = vpop.f32.mrb[0].mxu0
  %v498 = vadd.f32 0.0, %v497
  %v499 = vpop.f32.mrb[0].mxu0
  %500 = vmatprep.mubr.bf16.mxu0 0
  %501 = vmatmul.mubr.bf16.gmra.mrb[0].mxu0 %v298
  %v502 = vpop.f32.mrb[0].mxu0
  %v503 = vadd.f32 0.0, %v502
  %v504 = vpop.f32.mrb[0].mxu0
  %v505 = vpop.f32.mrb[0].mxu0
  %v506 = vadd.f32 0.0, %v505
  %v507 = vpop.f32.mrb[0].mxu0
  %508 = vmatprep.mubr.bf16.mxu0 0
  %509 = vmatmul.mubr.bf16.gmra.mrb[0].mxu0 %v301
  %v510 = vpop.f32.mrb[0].mxu0
  %v511 = vadd.f32 0.0, %v510
  %v512 = vpop.f32.mrb[0].mxu0
  %v513 = vpop.f32.mrb[0].mxu0
  %v514 = vadd.f32 0.0, %v513
  %v515 = vpop.f32.mrb[0].mxu0
  %516 = vmatprep.mubr.bf16.mxu0 0
  %517 = vmatmul.mubr.bf16.gmra.mrb[0].mxu0 %v304
  %v518 = vpop.f32.mrb[0].mxu0
  %v519 = vadd.f32 0.0, %v518
  %v520 = vpop.f32.mrb[0].mxu0
  %v521 = vpop.f32.mrb[0].mxu0
  %v522 = vadd.f32 0.0, %v521
  %v523 = vpop.f32.mrb[0].mxu0
  %524 = vmatprep.mubr.bf16.mxu0 0
  %525 = vmatmul.mubr.bf16.gmra.mrb[0].mxu0 %v307
  %v526 = vpop.f32.mrb[0].mxu0
  %v527 = vadd.f32 0.0, %v526
  %v528 = vpop.f32.mrb[0].mxu0
  %v529 = vpop.f32.mrb[0].mxu0
  %v530 = vadd.f32 0.0, %v529
  %v531 = vpop.f32.mrb[0].mxu0
  %532 = vmatprep.mubr.bf16.mxu0 0
  %533 = vmatmul.mubr.bf16.gmra.mrb[0].mxu0 %v310
  %v534 = vpop.f32.mrb[0].mxu0
  %v535 = vadd.f32 0.0, %v534
  %v536 = vpop.f32.mrb[0].mxu0
  %v537 = vpop.f32.mrb[0].mxu0
  %v538 = vadd.f32 0.0, %v537
  %v539 = vpop.f32.mrb[0].mxu0
  %540 = vdwg.mxu0
  %v543 = vunpack.c.l.b16 %v39
  %v544 = vunpack.c.l.b16 %v40
  %v545 = vpack.c.b16 %v544, %v543
  %v550 = vunpack.c.l.b16 %v95
  %v551 = vunpack.c.l.b16 %v96
  %v552 = vunpack.c.l.b16 %v97
  %v553 = vunpack.c.l.b16 %v98
  %v554 = vpack.c.b16 %v551, %v550
  %v555 = vpack.c.b16 %v553, %v552
  %v558 = vsel %vm239, %v545, 0
  %v561 = vsel %vm312, %v555, 0
  %563 = vmatprep.subr.bf16.mxu0 0
  %564 = vmatpush1.bf16.msra.mxu0 %v554
  %565 = vmatprep.subr.bf16.mxu0 0
  %566 = vmatpush1.bf16.msra.mxu0 %v561
  %567 = vmatprep.subr.bf16.mxu0 0
  %568 = vmatpush1.bf16.msra.mxu0 0
  %569 = vmatprep.subr.bf16.mxu0 0
  %570 = vmatpush1.bf16.msra.mxu0 0
  %571 = vmatprep.subr.bf16.mxu0 0
  %572 = vmatpush1.bf16.msra.mxu0 0
  %573 = vmatprep.subr.bf16.mxu0 0
  %574 = vmatpush1.bf16.msra.mxu0 0
  %575 = vmatprep.subr.bf16.mxu0 0
  %576 = vmatpush1.bf16.msra.mxu0 0
  %577 = vmatprep.subr.bf16.mxu0 0
  %578 = vmatpush1.bf16.msra.mxu0 0
  %579 = vmatprep.subr.bf16.mxu0 0
  %580 = vmatpush1.bf16.msra.mxu0 0
  %581 = vmatprep.subr.bf16.mxu0 0
  %582 = vmatpush1.bf16.msra.mxu0 0
  %583 = vmatprep.subr.bf16.mxu0 0
  %584 = vmatpush1.bf16.msra.mxu0 0
  %585 = vmatprep.subr.bf16.mxu0 0
  %586 = vmatpush1.bf16.msra.mxu0 0
  %587 = vmatprep.subr.bf16.mxu0 0
  %588 = vmatpush1.bf16.msra.mxu0 0
  %589 = vmatprep.subr.bf16.mxu0 0
  %590 = vmatpush1.bf16.msra.mxu0 0
  %591 = vmatprep.subr.bf16.mxu0 0
  %592 = vmatpush1.bf16.msra.mxu0 0
  %593 = vmatprep.subr.bf16.mxu0 0
  %594 = vmatpush1.bf16.msra.mxu0 0
  %595 = vmatprep.mubr.bf16.mxu0 0
  %596 = vmatmul.mubr.bf16.gmra.mrb[0].mxu0 %v558
  %v597 = vpop.f32.mrb[0].mxu0
  %v598 = vadd.f32 %v351, %v597
  %v599 = vpop.f32.mrb[0].mxu0
  %v600 = vpop.f32.mrb[0].mxu0
  %v601 = vadd.f32 %v354, %v600
  %v602 = vpop.f32.mrb[0].mxu0
  %603 = vmatprep.mubr.bf16.mxu0 0
  %604 = vmatmul.mubr.bf16.gmra.mrb[0].mxu0 %v241
  %v605 = vpop.f32.mrb[0].mxu0
  %v606 = vadd.f32 %v359, %v605
  %v607 = vpop.f32.mrb[0].mxu0
  %v608 = vpop.f32.mrb[0].mxu0
  %v609 = vadd.f32 %v362, %v608
  %v610 = vpop.f32.mrb[0].mxu0
  %611 = vmatprep.mubr.bf16.mxu0 0
  %612 = vmatmul.mubr.bf16.gmra.mrb[0].mxu0 %v244
  %v613 = vpop.f32.mrb[0].mxu0
  %v614 = vadd.f32 %v367, %v613
  %v615 = vpop.f32.mrb[0].mxu0
  %v616 = vpop.f32.mrb[0].mxu0
  %v617 = vadd.f32 %v370, %v616
  %v618 = vpop.f32.mrb[0].mxu0
  %619 = vmatprep.mubr.bf16.mxu0 0
  %620 = vmatmul.mubr.bf16.gmra.mrb[0].mxu0 %v247
  %v621 = vpop.f32.mrb[0].mxu0
  %v622 = vadd.f32 %v375, %v621
  %v623 = vpop.f32.mrb[0].mxu0
  %v624 = vpop.f32.mrb[0].mxu0
  %v625 = vadd.f32 %v378, %v624
  %v626 = vpop.f32.mrb[0].mxu0
  %627 = vmatprep.mubr.bf16.mxu0 0
  %628 = vmatmul.mubr.bf16.gmra.mrb[0].mxu0 %v250
  %v629 = vpop.f32.mrb[0].mxu0
  %v630 = vadd.f32 %v383, %v629
  %v631 = vpop.f32.mrb[0].mxu0
  %v632 = vpop.f32.mrb[0].mxu0
  %v633 = vadd.f32 %v386, %v632
  %v634 = vpop.f32.mrb[0].mxu0
  %635 = vmatprep.mubr.bf16.mxu0 0
  %636 = vmatmul.mubr.bf16.gmra.mrb[0].mxu0 %v253
  %v637 = vpop.f32.mrb[0].mxu0
  %v638 = vadd.f32 %v391, %v637
  %v639 = vpop.f32.mrb[0].mxu0
  %v640 = vpop.f32.mrb[0].mxu0
  %v641 = vadd.f32 %v394, %v640
  %v642 = vpop.f32.mrb[0].mxu0
  %643 = vmatprep.mubr.bf16.mxu0 0
  %644 = vmatmul.mubr.bf16.gmra.mrb[0].mxu0 %v256
  %v645 = vpop.f32.mrb[0].mxu0
  %v646 = vadd.f32 %v399, %v645
  %v647 = vpop.f32.mrb[0].mxu0
  %v648 = vpop.f32.mrb[0].mxu0
  %v649 = vadd.f32 %v402, %v648
  %v650 = vpop.f32.mrb[0].mxu0
  %651 = vmatprep.mubr.bf16.mxu0 0
  %652 = vmatmul.mubr.bf16.gmra.mrb[0].mxu0 %v259
  %v653 = vpop.f32.mrb[0].mxu0
  %v654 = vadd.f32 %v407, %v653
  %v655 = vpop.f32.mrb[0].mxu0
  %v656 = vpop.f32.mrb[0].mxu0
  %v657 = vadd.f32 %v410, %v656
  %v658 = vpop.f32.mrb[0].mxu0
  %659 = vmatprep.mubr.bf16.mxu0 0
  %660 = vmatmul.mubr.bf16.gmra.mrb[0].mxu0 %v262
  %v661 = vpop.f32.mrb[0].mxu0
  %v662 = vadd.f32 %v415, %v661
  %v663 = vpop.f32.mrb[0].mxu0
  %v664 = vpop.f32.mrb[0].mxu0
  %v665 = vadd.f32 %v418, %v664
  %v666 = vpop.f32.mrb[0].mxu0
  %667 = vmatprep.mubr.bf16.mxu0 0
  %668 = vmatmul.mubr.bf16.gmra.mrb[0].mxu0 %v265
  %v669 = vpop.f32.mrb[0].mxu0
  %v670 = vadd.f32 %v423, %v669
  %v671 = vpop.f32.mrb[0].mxu0
  %v672 = vpop.f32.mrb[0].mxu0
  %v673 = vadd.f32 %v426, %v672
  %v674 = vpop.f32.mrb[0].mxu0
  %675 = vmatprep.mubr.bf16.mxu0 0
  %676 = vmatmul.mubr.bf16.gmra.mrb[0].mxu0 %v268
  %v677 = vpop.f32.mrb[0].mxu0
  %v678 = vadd.f32 %v431, %v677
  %v679 = vpop.f32.mrb[0].mxu0
  %v680 = vpop.f32.mrb[0].mxu0
  %v681 = vadd.f32 %v434, %v680
  %v682 = vpop.f32.mrb[0].mxu0
  %683 = vmatprep.mubr.bf16.mxu0 0
  %684 = vmatmul.mubr.bf16.gmra.mrb[0].mxu0 %v271
  %v685 = vpop.f32.mrb[0].mxu0
  %v686 = vadd.f32 %v439, %v685
  %v687 = vpop.f32.mrb[0].mxu0
  %v688 = vpop.f32.mrb[0].mxu0
  %v689 = vadd.f32 %v442, %v688
  %v690 = vpop.f32.mrb[0].mxu0
  %691 = vmatprep.mubr.bf16.mxu0 0
  %692 = vmatmul.mubr.bf16.gmra.mrb[0].mxu0 %v274
  %v693 = vpop.f32.mrb[0].mxu0
  %v694 = vadd.f32 %v447, %v693
  %v695 = vpop.f32.mrb[0].mxu0
  %v696 = vpop.f32.mrb[0].mxu0
  %v697 = vadd.f32 %v450, %v696
  %v698 = vpop.f32.mrb[0].mxu0
  %699 = vmatprep.mubr.bf16.mxu0 0
  %700 = vmatmul.mubr.bf16.gmra.mrb[0].mxu0 %v277
  %v701 = vpop.f32.mrb[0].mxu0
  %v702 = vadd.f32 %v455, %v701
  %v703 = vpop.f32.mrb[0].mxu0
  %v704 = vpop.f32.mrb[0].mxu0
  %v705 = vadd.f32 %v458, %v704
  %v706 = vpop.f32.mrb[0].mxu0
  %707 = vmatprep.mubr.bf16.mxu0 0
  %708 = vmatmul.mubr.bf16.gmra.mrb[0].mxu0 %v280
  %v709 = vpop.f32.mrb[0].mxu0
  %v710 = vadd.f32 %v463, %v709
  %v711 = vpop.f32.mrb[0].mxu0
  %v712 = vpop.f32.mrb[0].mxu0
  %v713 = vadd.f32 %v466, %v712
  %v714 = vpop.f32.mrb[0].mxu0
  %715 = vmatprep.mubr.bf16.mxu0 0
  %716 = vmatmul.mubr.bf16.gmra.mrb[0].mxu0 %v283
  %v717 = vpop.f32.mrb[0].mxu0
  %v718 = vadd.f32 %v471, %v717
  %v719 = vpop.f32.mrb[0].mxu0
  %v720 = vpop.f32.mrb[0].mxu0
  %v721 = vadd.f32 %v474, %v720
  %v722 = vpop.f32.mrb[0].mxu0
  %723 = vmatprep.mubr.bf16.mxu0 0
  %724 = vmatmul.mubr.bf16.gmra.mrb[0].mxu0 %v286
  %v725 = vpop.f32.mrb[0].mxu0
  %v726 = vadd.f32 %v479, %v725
  %v727 = vpop.f32.mrb[0].mxu0
  %v728 = vpop.f32.mrb[0].mxu0
  %v729 = vadd.f32 %v482, %v728
  %v730 = vpop.f32.mrb[0].mxu0
  %731 = vmatprep.mubr.bf16.mxu0 0
  %732 = vmatmul.mubr.bf16.gmra.mrb[0].mxu0 %v289
  %v733 = vpop.f32.mrb[0].mxu0
  %v734 = vadd.f32 %v487, %v733
  %v735 = vpop.f32.mrb[0].mxu0
  %v736 = vpop.f32.mrb[0].mxu0
  %v737 = vadd.f32 %v490, %v736
  %v738 = vpop.f32.mrb[0].mxu0
  %739 = vmatprep.mubr.bf16.mxu0 0
  %740 = vmatmul.mubr.bf16.gmra.mrb[0].mxu0 %v292
  %v741 = vpop.f32.mrb[0].mxu0
  %v742 = vadd.f32 %v495, %v741
  %v743 = vpop.f32.mrb[0].mxu0
  %v744 = vpop.f32.mrb[0].mxu0
  %v745 = vadd.f32 %v498, %v744
  %v746 = vpop.f32.mrb[0].mxu0
  %747 = vmatprep.mubr.bf16.mxu0 0
  %748 = vmatmul.mubr.bf16.gmra.mrb[0].mxu0 %v295
  %v749 = vpop.f32.mrb[0].mxu0
  %v750 = vadd.f32 %v503, %v749
  %v751 = vpop.f32.mrb[0].mxu0
  %v752 = vpop.f32.mrb[0].mxu0
  %v753 = vadd.f32 %v506, %v752
  %v754 = vpop.f32.mrb[0].mxu0
  %755 = vmatprep.mubr.bf16.mxu0 0
  %756 = vmatmul.mubr.bf16.gmra.mrb[0].mxu0 %v298
  %v757 = vpop.f32.mrb[0].mxu0
  %v758 = vadd.f32 %v511, %v757
  %v759 = vpop.f32.mrb[0].mxu0
  %v760 = vpop.f32.mrb[0].mxu0
  %v761 = vadd.f32 %v514, %v760
  %v762 = vpop.f32.mrb[0].mxu0
  %763 = vmatprep.mubr.bf16.mxu0 0
  %764 = vmatmul.mubr.bf16.gmra.mrb[0].mxu0 %v301
  %v765 = vpop.f32.mrb[0].mxu0
  %v766 = vadd.f32 %v519, %v765
  %v767 = vpop.f32.mrb[0].mxu0
  %v768 = vpop.f32.mrb[0].mxu0
  %v769 = vadd.f32 %v522, %v768
  %v770 = vpop.f32.mrb[0].mxu0
  %771 = vmatprep.mubr.bf16.mxu0 0
  %772 = vmatmul.mubr.bf16.gmra.mrb[0].mxu0 %v304
  %v773 = vpop.f32.mrb[0].mxu0
  %v774 = vadd.f32 %v527, %v773
  %v775 = vpop.f32.mrb[0].mxu0
  %v776 = vpop.f32.mrb[0].mxu0
  %v777 = vadd.f32 %v530, %v776
  %v778 = vpop.f32.mrb[0].mxu0
  %779 = vmatprep.mubr.bf16.mxu0 0
  %780 = vmatmul.mubr.bf16.gmra.mrb[0].mxu0 %v307
  %v781 = vpop.f32.mrb[0].mxu0
  %v782 = vadd.f32 %v535, %v781
  %v783 = vpop.f32.mrb[0].mxu0
  %v784 = vpop.f32.mrb[0].mxu0
  %v785 = vadd.f32 %v538, %v784
  %v786 = vpop.f32.mrb[0].mxu0
  %787 = vdwg.mxu0
  %s788 = scalar_lea.vmem %s2, 16
  %v789 = vld [vmem:[%s788] sm:$0xf]
  %v790 = vld [vmem:[%s788 + $0x4] sm:$0xf]
  %v791 = vld [vmem:[%s788 + $0x8] sm:$0xf]
  %v792 = vld [vmem:[%s788 + $0xc] sm:$0x3]
  %v797 = vunpack.c.l.b16 %v789
  %v798 = vunpack.c.l.b16 %v790
  %v799 = vunpack.c.l.b16 %v791
  %v800 = vunpack.c.l.b16 %v792
  %v801 = vpack.c.b16 %v798, %v797
  %v802 = vpack.c.b16 %v800, %v799
  %v805 = vsel %vm312, %v802, 0
  %807 = vmatprep.subr.bf16.mxu0 0
  %808 = vmatpush1.bf16.msra.mxu0 %v801
  %809 = vmatprep.subr.bf16.mxu0 0
  %810 = vmatpush1.bf16.msra.mxu0 %v805
  %811 = vmatprep.subr.bf16.mxu0 0
  %812 = vmatpush1.bf16.msra.mxu0 0
  %813 = vmatprep.subr.bf16.mxu0 0
  %814 = vmatpush1.bf16.msra.mxu0 0
  %815 = vmatprep.subr.bf16.mxu0 0
  %816 = vmatpush1.bf16.msra.mxu0 0
  %817 = vmatprep.subr.bf16.mxu0 0
  %818 = vmatpush1.bf16.msra.mxu0 0
  %819 = vmatprep.subr.bf16.mxu0 0
  %820 = vmatpush1.bf16.msra.mxu0 0
  %821 = vmatprep.subr.bf16.mxu0 0
  %822 = vmatpush1.bf16.msra.mxu0 0
  %823 = vmatprep.subr.bf16.mxu0 0
  %824 = vmatpush1.bf16.msra.mxu0 0
  %825 = vmatprep.subr.bf16.mxu0 0
  %826 = vmatpush1.bf16.msra.mxu0 0
  %827 = vmatprep.subr.bf16.mxu0 0
  %828 = vmatpush1.bf16.msra.mxu0 0
  %829 = vmatprep.subr.bf16.mxu0 0
  %830 = vmatpush1.bf16.msra.mxu0 0
  %831 = vmatprep.subr.bf16.mxu0 0
  %832 = vmatpush1.bf16.msra.mxu0 0
  %833 = vmatprep.subr.bf16.mxu0 0
  %834 = vmatpush1.bf16.msra.mxu0 0
  %835 = vmatprep.subr.bf16.mxu0 0
  %836 = vmatpush1.bf16.msra.mxu0 0
  %837 = vmatprep.subr.bf16.mxu0 0
  %838 = vmatpush1.bf16.msra.mxu0 0
  %839 = vmatprep.mubr.bf16.mxu0 0
  %840 = vmatmul.mubr.bf16.gmra.mrb[0].mxu0 %v241
  %v841 = vpop.f32.mrb[0].mxu0
  %v842 = vadd.f32 0.0, %v841
  %v843 = vpop.f32.mrb[0].mxu0
  %v844 = vpop.f32.mrb[0].mxu0
  %v845 = vadd.f32 0.0, %v844
  %v846 = vpop.f32.mrb[0].mxu0
  %847 = vmatprep.mubr.bf16.mxu0 0
  %848 = vmatmul.mubr.bf16.gmra.mrb[0].mxu0 %v244
  %v849 = vpop.f32.mrb[0].mxu0
  %v850 = vadd.f32 0.0, %v849
  %v851 = vpop.f32.mrb[0].mxu0
  %v852 = vpop.f32.mrb[0].mxu0
  %v853 = vadd.f32 0.0, %v852
  %v854 = vpop.f32.mrb[0].mxu0
  %855 = vmatprep.mubr.bf16.mxu0 0
  %856 = vmatmul.mubr.bf16.gmra.mrb[0].mxu0 %v247
  %v857 = vpop.f32.mrb[0].mxu0
  %v858 = vadd.f32 0.0, %v857
  %v859 = vpop.f32.mrb[0].mxu0
  %v860 = vpop.f32.mrb[0].mxu0
  %v861 = vadd.f32 0.0, %v860
  %v862 = vpop.f32.mrb[0].mxu0
  %863 = vmatprep.mubr.bf16.mxu0 0
  %864 = vmatmul.mubr.bf16.gmra.mrb[0].mxu0 %v250
  %v865 = vpop.f32.mrb[0].mxu0
  %v866 = vadd.f32 0.0, %v865
  %v867 = vpop.f32.mrb[0].mxu0
  %v868 = vpop.f32.mrb[0].mxu0
  %v869 = vadd.f32 0.0, %v868
  %v870 = vpop.f32.mrb[0].mxu0
  %871 = vmatprep.mubr.bf16.mxu0 0
  %872 = vmatmul.mubr.bf16.gmra.mrb[0].mxu0 %v253
  %v873 = vpop.f32.mrb[0].mxu0
  %v874 = vadd.f32 0.0, %v873
  %v875 = vpop.f32.mrb[0].mxu0
  %v876 = vpop.f32.mrb[0].mxu0
  %v877 = vadd.f32 0.0, %v876
  %v878 = vpop.f32.mrb[0].mxu0
  %879 = vmatprep.mubr.bf16.mxu0 0
  %880 = vmatmul.mubr.bf16.gmra.mrb[0].mxu0 %v256
  %v881 = vpop.f32.mrb[0].mxu0
  %v882 = vadd.f32 0.0, %v881
  %v883 = vpop.f32.mrb[0].mxu0
  %v884 = vpop.f32.mrb[0].mxu0
  %v885 = vadd.f32 0.0, %v884
  %v886 = vpop.f32.mrb[0].mxu0
  %887 = vmatprep.mubr.bf16.mxu0 0
  %888 = vmatmul.mubr.bf16.gmra.mrb[0].mxu0 %v259
  %v889 = vpop.f32.mrb[0].mxu0
  %v890 = vadd.f32 0.0, %v889
  %v891 = vpop.f32.mrb[0].mxu0
  %v892 = vpop.f32.mrb[0].mxu0
  %v893 = vadd.f32 0.0, %v892
  %v894 = vpop.f32.mrb[0].mxu0
  %895 = vmatprep.mubr.bf16.mxu0 0
  %896 = vmatmul.mubr.bf16.gmra.mrb[0].mxu0 %v262
  %v897 = vpop.f32.mrb[0].mxu0
  %v898 = vadd.f32 0.0, %v897
  %v899 = vpop.f32.mrb[0].mxu0
  %v900 = vpop.f32.mrb[0].mxu0
  %v901 = vadd.f32 0.0, %v900
  %v902 = vpop.f32.mrb[0].mxu0
  %903 = vmatprep.mubr.bf16.mxu0 0
  %904 = vmatmul.mubr.bf16.gmra.mrb[0].mxu0 %v265
  %v905 = vpop.f32.mrb[0].mxu0
  %v906 = vadd.f32 0.0, %v905
  %v907 = vpop.f32.mrb[0].mxu0
  %v908 = vpop.f32.mrb[0].mxu0
  %v909 = vadd.f32 0.0, %v908
  %v910 = vpop.f32.mrb[0].mxu0
  %911 = vmatprep.mubr.bf16.mxu0 0
  %912 = vmatmul.mubr.bf16.gmra.mrb[0].mxu0 %v268
  %v913 = vpop.f32.mrb[0].mxu0
  %v914 = vadd.f32 0.0, %v913
  %v915 = vpop.f32.mrb[0].mxu0
  %v916 = vpop.f32.mrb[0].mxu0
  %v917 = vadd.f32 0.0, %v916
  %v918 = vpop.f32.mrb[0].mxu0
  %919 = vmatprep.mubr.bf16.mxu0 0
  %920 = vmatmul.mubr.bf16.gmra.mrb[0].mxu0 %v271
  %v921 = vpop.f32.mrb[0].mxu0
  %v922 = vadd.f32 0.0, %v921
  %v923 = vpop.f32.mrb[0].mxu0
  %v924 = vpop.f32.mrb[0].mxu0
  %v925 = vadd.f32 0.0, %v924
  %v926 = vpop.f32.mrb[0].mxu0
  %927 = vmatprep.mubr.bf16.mxu0 0
  %928 = vmatmul.mubr.bf16.gmra.mrb[0].mxu0 %v274
  %v929 = vpop.f32.mrb[0].mxu0
  %v930 = vadd.f32 0.0, %v929
  %v931 = vpop.f32.mrb[0].mxu0
  %v932 = vpop.f32.mrb[0].mxu0
  %v933 = vadd.f32 0.0, %v932
  %v934 = vpop.f32.mrb[0].mxu0
  %935 = vmatprep.mubr.bf16.mxu0 0
  %936 = vmatmul.mubr.bf16.gmra.mrb[0].mxu0 %v277
  %v937 = vpop.f32.mrb[0].mxu0
  %v938 = vadd.f32 0.0, %v937
  %v939 = vpop.f32.mrb[0].mxu0
  %v940 = vpop.f32.mrb[0].mxu0
  %v941 = vadd.f32 0.0, %v940
  %v942 = vpop.f32.mrb[0].mxu0
  %943 = vmatprep.mubr.bf16.mxu0 0
  %944 = vmatmul.mubr.bf16.gmra.mrb[0].mxu0 %v280
  %v945 = vpop.f32.mrb[0].mxu0
  %v946 = vadd.f32 0.0, %v945
  %v947 = vpop.f32.mrb[0].mxu0
  %v948 = vpop.f32.mrb[0].mxu0
  %v949 = vadd.f32 0.0, %v948
  %v950 = vpop.f32.mrb[0].mxu0
  %951 = vmatprep.mubr.bf16.mxu0 0
  %952 = vmatmul.mubr.bf16.gmra.mrb[0].mxu0 %v283
  %v953 = vpop.f32.mrb[0].mxu0
  %v954 = vadd.f32 0.0, %v953
  %v955 = vpop.f32.mrb[0].mxu0
  %v956 = vpop.f32.mrb[0].mxu0
  %v957 = vadd.f32 0.0, %v956
  %v958 = vpop.f32.mrb[0].mxu0
  %959 = vmatprep.mubr.bf16.mxu0 0
  %960 = vmatmul.mubr.bf16.gmra.mrb[0].mxu0 %v286
  %v961 = vpop.f32.mrb[0].mxu0
  %v962 = vadd.f32 0.0, %v961
  %v963 = vpop.f32.mrb[0].mxu0
  %v964 = vpop.f32.mrb[0].mxu0
  %v965 = vadd.f32 0.0, %v964
  %v966 = vpop.f32.mrb[0].mxu0
  %967 = vmatprep.mubr.bf16.mxu0 0
  %968 = vmatmul.mubr.bf16.gmra.mrb[0].mxu0 %v289
  %v969 = vpop.f32.mrb[0].mxu0
  %v970 = vadd.f32 0.0, %v969
  %v971 = vpop.f32.mrb[0].mxu0
  %v972 = vpop.f32.mrb[0].mxu0
  %v973 = vadd.f32 0.0, %v972
  %v974 = vpop.f32.mrb[0].mxu0
  %975 = vmatprep.mubr.bf16.mxu0 0
  %976 = vmatmul.mubr.bf16.gmra.mrb[0].mxu0 %v292
  %v977 = vpop.f32.mrb[0].mxu0
  %v978 = vadd.f32 0.0, %v977
  %v979 = vpop.f32.mrb[0].mxu0
  %v980 = vpop.f32.mrb[0].mxu0
  %v981 = vadd.f32 0.0, %v980
  %v982 = vpop.f32.mrb[0].mxu0
  %983 = vmatprep.mubr.bf16.mxu0 0
  %984 = vmatmul.mubr.bf16.gmra.mrb[0].mxu0 %v295
  %v985 = vpop.f32.mrb[0].mxu0
  %v986 = vadd.f32 0.0, %v985
  %v987 = vpop.f32.mrb[0].mxu0
  %v988 = vpop.f32.mrb[0].mxu0
  %v989 = vadd.f32 0.0, %v988
  %v990 = vpop.f32.mrb[0].mxu0
  %991 = vmatprep.mubr.bf16.mxu0 0
  %992 = vmatmul.mubr.bf16.gmra.mrb[0].mxu0 %v298
  %v993 = vpop.f32.mrb[0].mxu0
  %v994 = vadd.f32 0.0, %v993
  %v995 = vpop.f32.mrb[0].mxu0
  %v996 = vpop.f32.mrb[0].mxu0
  %v997 = vadd.f32 0.0, %v996
  %v998 = vpop.f32.mrb[0].mxu0
  %999 = vmatprep.mubr.bf16.mxu0 0
  %1000 = vmatmul.mubr.bf16.gmra.mrb[0].mxu0 %v301
  %v1001 = vpop.f32.mrb[0].mxu0
  %v1002 = vadd.f32 0.0, %v1001
  %v1003 = vpop.f32.mrb[0].mxu0
  %v1004 = vpop.f32.mrb[0].mxu0
  %v1005 = vadd.f32 0.0, %v1004
  %v1006 = vpop.f32.mrb[0].mxu0
  %1007 = vmatprep.mubr.bf16.mxu0 0
  %1008 = vmatmul.mubr.bf16.gmra.mrb[0].mxu0 %v304
  %v1009 = vpop.f32.mrb[0].mxu0
  %v1010 = vadd.f32 0.0, %v1009
  %v1011 = vpop.f32.mrb[0].mxu0
  %v1012 = vpop.f32.mrb[0].mxu0
  %v1013 = vadd.f32 0.0, %v1012
  %v1014 = vpop.f32.mrb[0].mxu0
  %1015 = vmatprep.mubr.bf16.mxu0 0
  %1016 = vmatmul.mubr.bf16.gmra.mrb[0].mxu0 %v307
  %v1017 = vpop.f32.mrb[0].mxu0
  %v1018 = vadd.f32 0.0, %v1017
  %v1019 = vpop.f32.mrb[0].mxu0
  %v1020 = vpop.f32.mrb[0].mxu0
  %v1021 = vadd.f32 0.0, %v1020
  %v1022 = vpop.f32.mrb[0].mxu0
  %1023 = vmatprep.mubr.bf16.mxu0 0
  %1024 = vmatmul.mubr.bf16.gmra.mrb[0].mxu0 %v310
  %v1025 = vpop.f32.mrb[0].mxu0
  %v1026 = vadd.f32 0.0, %v1025
  %v1027 = vpop.f32.mrb[0].mxu0
  %v1028 = vpop.f32.mrb[0].mxu0
  %v1029 = vadd.f32 0.0, %v1028
  %v1030 = vpop.f32.mrb[0].mxu0
  %1031 = vdwg.mxu0
  %v1036 = vunpack.c.l.b16 %v99
  %v1037 = vunpack.c.l.b16 %v100
  %v1038 = vunpack.c.l.b16 %v101
  %v1039 = vunpack.c.l.b16 %v102
  %v1040 = vpack.c.b16 %v1037, %v1036
  %v1041 = vpack.c.b16 %v1039, %v1038
  %v1044 = vsel %vm312, %v1041, 0
  %1046 = vmatprep.subr.bf16.mxu0 0
  %1047 = vmatpush1.bf16.msra.mxu0 %v1040
  %1048 = vmatprep.subr.bf16.mxu0 0
  %1049 = vmatpush1.bf16.msra.mxu0 %v1044
  %1050 = vmatprep.subr.bf16.mxu0 0
  %1051 = vmatpush1.bf16.msra.mxu0 0
  %1052 = vmatprep.subr.bf16.mxu0 0
  %1053 = vmatpush1.bf16.msra.mxu0 0
  %1054 = vmatprep.subr.bf16.mxu0 0
  %1055 = vmatpush1.bf16.msra.mxu0 0
  %1056 = vmatprep.subr.bf16.mxu0 0
  %1057 = vmatpush1.bf16.msra.mxu0 0
  %1058 = vmatprep.subr.bf16.mxu0 0
  %1059 = vmatpush1.bf16.msra.mxu0 0
  %1060 = vmatprep.subr.bf16.mxu0 0
  %1061 = vmatpush1.bf16.msra.mxu0 0
  %1062 = vmatprep.subr.bf16.mxu0 0
  %1063 = vmatpush1.bf16.msra.mxu0 0
  %1064 = vmatprep.subr.bf16.mxu0 0
  %1065 = vmatpush1.bf16.msra.mxu0 0
  %1066 = vmatprep.subr.bf16.mxu0 0
  %1067 = vmatpush1.bf16.msra.mxu0 0
  %1068 = vmatprep.subr.bf16.mxu0 0
  %1069 = vmatpush1.bf16.msra.mxu0 0
  %1070 = vmatprep.subr.bf16.mxu0 0
  %1071 = vmatpush1.bf16.msra.mxu0 0
  %1072 = vmatprep.subr.bf16.mxu0 0
  %1073 = vmatpush1.bf16.msra.mxu0 0
  %1074 = vmatprep.subr.bf16.mxu0 0
  %1075 = vmatpush1.bf16.msra.mxu0 0
  %1076 = vmatprep.subr.bf16.mxu0 0
  %1077 = vmatpush1.bf16.msra.mxu0 0
  %1078 = vmatprep.mubr.bf16.mxu0 0
  %1079 = vmatmul.mubr.bf16.gmra.mrb[0].mxu0 %v558
  %v1080 = vpop.f32.mrb[0].mxu0
  %v1081 = vadd.f32 %v842, %v1080
  %v1082 = vpop.f32.mrb[0].mxu0
  %v1083 = vpop.f32.mrb[0].mxu0
  %v1084 = vadd.f32 %v845, %v1083
  %v1085 = vpop.f32.mrb[0].mxu0
  %1086 = vmatprep.mubr.bf16.mxu0 0
  %1087 = vmatmul.mubr.bf16.gmra.mrb[0].mxu0 %v241
  %v1088 = vpop.f32.mrb[0].mxu0
  %v1089 = vadd.f32 %v850, %v1088
  %v1090 = vpop.f32.mrb[0].mxu0
  %v1091 = vpop.f32.mrb[0].mxu0
  %v1092 = vadd.f32 %v853, %v1091
  %v1093 = vpop.f32.mrb[0].mxu0
  %1094 = vmatprep.mubr.bf16.mxu0 0
  %1095 = vmatmul.mubr.bf16.gmra.mrb[0].mxu0 %v244
  %v1096 = vpop.f32.mrb[0].mxu0
  %v1097 = vadd.f32 %v858, %v1096
  %v1098 = vpop.f32.mrb[0].mxu0
  %v1099 = vpop.f32.mrb[0].mxu0
  %v1100 = vadd.f32 %v861, %v1099
  %v1101 = vpop.f32.mrb[0].mxu0
  %1102 = vmatprep.mubr.bf16.mxu0 0
  %1103 = vmatmul.mubr.bf16.gmra.mrb[0].mxu0 %v247
  %v1104 = vpop.f32.mrb[0].mxu0
  %v1105 = vadd.f32 %v866, %v1104
  %v1106 = vpop.f32.mrb[0].mxu0
  %v1107 = vpop.f32.mrb[0].mxu0
  %v1108 = vadd.f32 %v869, %v1107
  %v1109 = vpop.f32.mrb[0].mxu0
  %1110 = vmatprep.mubr.bf16.mxu0 0
  %1111 = vmatmul.mubr.bf16.gmra.mrb[0].mxu0 %v250
  %v1112 = vpop.f32.mrb[0].mxu0
  %v1113 = vadd.f32 %v874, %v1112
  %v1114 = vpop.f32.mrb[0].mxu0
  %v1115 = vpop.f32.mrb[0].mxu0
  %v1116 = vadd.f32 %v877, %v1115
  %v1117 = vpop.f32.mrb[0].mxu0
  %1118 = vmatprep.mubr.bf16.mxu0 0
  %1119 = vmatmul.mubr.bf16.gmra.mrb[0].mxu0 %v253
  %v1120 = vpop.f32.mrb[0].mxu0
  %v1121 = vadd.f32 %v882, %v1120
  %v1122 = vpop.f32.mrb[0].mxu0
  %v1123 = vpop.f32.mrb[0].mxu0
  %v1124 = vadd.f32 %v885, %v1123
  %v1125 = vpop.f32.mrb[0].mxu0
  %1126 = vmatprep.mubr.bf16.mxu0 0
  %1127 = vmatmul.mubr.bf16.gmra.mrb[0].mxu0 %v256
  %v1128 = vpop.f32.mrb[0].mxu0
  %v1129 = vadd.f32 %v890, %v1128
  %v1130 = vpop.f32.mrb[0].mxu0
  %v1131 = vpop.f32.mrb[0].mxu0
  %v1132 = vadd.f32 %v893, %v1131
  %v1133 = vpop.f32.mrb[0].mxu0
  %1134 = vmatprep.mubr.bf16.mxu0 0
  %1135 = vmatmul.mubr.bf16.gmra.mrb[0].mxu0 %v259
  %v1136 = vpop.f32.mrb[0].mxu0
  %v1137 = vadd.f32 %v898, %v1136
  %v1138 = vpop.f32.mrb[0].mxu0
  %v1139 = vpop.f32.mrb[0].mxu0
  %v1140 = vadd.f32 %v901, %v1139
  %v1141 = vpop.f32.mrb[0].mxu0
  %1142 = vmatprep.mubr.bf16.mxu0 0
  %1143 = vmatmul.mubr.bf16.gmra.mrb[0].mxu0 %v262
  %v1144 = vpop.f32.mrb[0].mxu0
  %v1145 = vadd.f32 %v906, %v1144
  %v1146 = vpop.f32.mrb[0].mxu0
  %v1147 = vpop.f32.mrb[0].mxu0
  %v1148 = vadd.f32 %v909, %v1147
  %v1149 = vpop.f32.mrb[0].mxu0
  %1150 = vmatprep.mubr.bf16.mxu0 0
  %1151 = vmatmul.mubr.bf16.gmra.mrb[0].mxu0 %v265
  %v1152 = vpop.f32.mrb[0].mxu0
  %v1153 = vadd.f32 %v914, %v1152
  %v1154 = vpop.f32.mrb[0].mxu0
  %v1155 = vpop.f32.mrb[0].mxu0
  %v1156 = vadd.f32 %v917, %v1155
  %v1157 = vpop.f32.mrb[0].mxu0
  %1158 = vmatprep.mubr.bf16.mxu0 0
  %1159 = vmatmul.mubr.bf16.gmra.mrb[0].mxu0 %v268
  %v1160 = vpop.f32.mrb[0].mxu0
  %v1161 = vadd.f32 %v922, %v1160
  %v1162 = vpop.f32.mrb[0].mxu0
  %v1163 = vpop.f32.mrb[0].mxu0
  %v1164 = vadd.f32 %v925, %v1163
  %v1165 = vpop.f32.mrb[0].mxu0
  %1166 = vmatprep.mubr.bf16.mxu0 0
  %1167 = vmatmul.mubr.bf16.gmra.mrb[0].mxu0 %v271
  %v1168 = vpop.f32.mrb[0].mxu0
  %v1169 = vadd.f32 %v930, %v1168
  %v1170 = vpop.f32.mrb[0].mxu0
  %v1171 = vpop.f32.mrb[0].mxu0
  %v1172 = vadd.f32 %v933, %v1171
  %v1173 = vpop.f32.mrb[0].mxu0
  %1174 = vmatprep.mubr.bf16.mxu0 0
  %1175 = vmatmul.mubr.bf16.gmra.mrb[0].mxu0 %v274
  %v1176 = vpop.f32.mrb[0].mxu0
  %v1177 = vadd.f32 %v938, %v1176
  %v1178 = vpop.f32.mrb[0].mxu0
  %v1179 = vpop.f32.mrb[0].mxu0
  %v1180 = vadd.f32 %v941, %v1179
  %v1181 = vpop.f32.mrb[0].mxu0
  %1182 = vmatprep.mubr.bf16.mxu0 0
  %1183 = vmatmul.mubr.bf16.gmra.mrb[0].mxu0 %v277
  %v1184 = vpop.f32.mrb[0].mxu0
  %v1185 = vadd.f32 %v946, %v1184
  %v1186 = vpop.f32.mrb[0].mxu0
  %v1187 = vpop.f32.mrb[0].mxu0
  %v1188 = vadd.f32 %v949, %v1187
  %v1189 = vpop.f32.mrb[0].mxu0
  %1190 = vmatprep.mubr.bf16.mxu0 0
  %1191 = vmatmul.mubr.bf16.gmra.mrb[0].mxu0 %v280
  %v1192 = vpop.f32.mrb[0].mxu0
  %v1193 = vadd.f32 %v954, %v1192
  %v1194 = vpop.f32.mrb[0].mxu0
  %v1195 = vpop.f32.mrb[0].mxu0
  %v1196 = vadd.f32 %v957, %v1195
  %v1197 = vpop.f32.mrb[0].mxu0
  %1198 = vmatprep.mubr.bf16.mxu0 0
  %1199 = vmatmul.mubr.bf16.gmra.mrb[0].mxu0 %v283
  %v1200 = vpop.f32.mrb[0].mxu0
  %v1201 = vadd.f32 %v962, %v1200
  %v1202 = vpop.f32.mrb[0].mxu0
  %v1203 = vpop.f32.mrb[0].mxu0
  %v1204 = vadd.f32 %v965, %v1203
  %v1205 = vpop.f32.mrb[0].mxu0
  %1206 = vmatprep.mubr.bf16.mxu0 0
  %1207 = vmatmul.mubr.bf16.gmra.mrb[0].mxu0 %v286
  %v1208 = vpop.f32.mrb[0].mxu0
  %v1209 = vadd.f32 %v970, %v1208
  %v1210 = vpop.f32.mrb[0].mxu0
  %v1211 = vpop.f32.mrb[0].mxu0
  %v1212 = vadd.f32 %v973, %v1211
  %v1213 = vpop.f32.mrb[0].mxu0
  %1214 = vmatprep.mubr.bf16.mxu0 0
  %1215 = vmatmul.mubr.bf16.gmra.mrb[0].mxu0 %v289
  %v1216 = vpop.f32.mrb[0].mxu0
  %v1217 = vadd.f32 %v978, %v1216
  %v1218 = vpop.f32.mrb[0].mxu0
  %v1219 = vpop.f32.mrb[0].mxu0
  %v1220 = vadd.f32 %v981, %v1219
  %v1221 = vpop.f32.mrb[0].mxu0
  %1222 = vmatprep.mubr.bf16.mxu0 0
  %1223 = vmatmul.mubr.bf16.gmra.mrb[0].mxu0 %v292
  %v1224 = vpop.f32.mrb[0].mxu0
  %v1225 = vadd.f32 %v986, %v1224
  %v1226 = vpop.f32.mrb[0].mxu0
  %v1227 = vpop.f32.mrb[0].mxu0
  %v1228 = vadd.f32 %v989, %v1227
  %v1229 = vpop.f32.mrb[0].mxu0
  %1230 = vmatprep.mubr.bf16.mxu0 0
  %1231 = vmatmul.mubr.bf16.gmra.mrb[0].mxu0 %v295
  %v1232 = vpop.f32.mrb[0].mxu0
  %v1233 = vadd.f32 %v994, %v1232
  %v1234 = vpop.f32.mrb[0].mxu0
  %v1235 = vpop.f32.mrb[0].mxu0
  %v1236 = vadd.f32 %v997, %v1235
  %v1237 = vpop.f32.mrb[0].mxu0
  %1238 = vmatprep.mubr.bf16.mxu0 0
  %1239 = vmatmul.mubr.bf16.gmra.mrb[0].mxu0 %v298
  %v1240 = vpop.f32.mrb[0].mxu0
  %v1241 = vadd.f32 %v1002, %v1240
  %v1242 = vpop.f32.mrb[0].mxu0
  %v1243 = vpop.f32.mrb[0].mxu0
  %v1244 = vadd.f32 %v1005, %v1243
  %v1245 = vpop.f32.mrb[0].mxu0
  %1246 = vmatprep.mubr.bf16.mxu0 0
  %1247 = vmatmul.mubr.bf16.gmra.mrb[0].mxu0 %v301
  %v1248 = vpop.f32.mrb[0].mxu0
  %v1249 = vadd.f32 %v1010, %v1248
  %v1250 = vpop.f32.mrb[0].mxu0
  %v1251 = vpop.f32.mrb[0].mxu0
  %v1252 = vadd.f32 %v1013, %v1251
  %v1253 = vpop.f32.mrb[0].mxu0
  %1254 = vmatprep.mubr.bf16.mxu0 0
  %1255 = vmatmul.mubr.bf16.gmra.mrb[0].mxu0 %v304
  %v1256 = vpop.f32.mrb[0].mxu0
  %v1257 = vadd.f32 %v1018, %v1256
  %v1258 = vpop.f32.mrb[0].mxu0
  %v1259 = vpop.f32.mrb[0].mxu0
  %v1260 = vadd.f32 %v1021, %v1259
  %v1261 = vpop.f32.mrb[0].mxu0
  %1262 = vmatprep.mubr.bf16.mxu0 0
  %1263 = vmatmul.mubr.bf16.gmra.mrb[0].mxu0 %v307
  %v1264 = vpop.f32.mrb[0].mxu0
  %v1265 = vadd.f32 %v1026, %v1264
  %v1266 = vpop.f32.mrb[0].mxu0
  %v1267 = vpop.f32.mrb[0].mxu0
  %v1268 = vadd.f32 %v1029, %v1267
  %v1269 = vpop.f32.mrb[0].mxu0
  %1270 = vdwg.mxu0
  %s1271 = scalar_lea.vmem %s1, 32
  %v1272 = vld [vmem:[%s1271] sm:$0xf]
  %v1273 = vld [vmem:[%s1271 + $0x4] sm:$0xf]
  %v1274 = vld [vmem:[%s1271 + $0x8] sm:$0xf]
  %v1275 = vld [vmem:[%s1271 + $0xc] sm:$0x3]
  %v1278 = vunpack.c.l.b16 %v89
  %v1279 = vunpack.c.l.b16 %v90
  %v1280 = vpack.c.b16 %v1279, %v1278
  %v1285 = vunpack.c.l.b16 %v1272
  %v1286 = vunpack.c.l.b16 %v1273
  %v1287 = vunpack.c.l.b16 %v1274
  %v1288 = vunpack.c.l.b16 %v1275
  %v1289 = vpack.c.b16 %v1286, %v1285
  %v1290 = vpack.c.b16 %v1288, %v1287
  %v1293 = vsel %vm239, %v1280, 0
  %v1296 = vsel %vm312, %v1290, 0
  %1298 = vmatprep.subr.bf16.mxu0 0
  %1299 = vmatpush1.bf16.msra.mxu0 %v1289
  %1300 = vmatprep.subr.bf16.mxu0 0
  %1301 = vmatpush1.bf16.msra.mxu0 %v1296
  %1302 = vmatprep.subr.bf16.mxu0 0
  %1303 = vmatpush1.bf16.msra.mxu0 0
  %1304 = vmatprep.subr.bf16.mxu0 0
  %1305 = vmatpush1.bf16.msra.mxu0 0
  %1306 = vmatprep.subr.bf16.mxu0 0
  %1307 = vmatpush1.bf16.msra.mxu0 0
  %1308 = vmatprep.subr.bf16.mxu0 0
  %1309 = vmatpush1.bf16.msra.mxu0 0
  %1310 = vmatprep.subr.bf16.mxu0 0
  %1311 = vmatpush1.bf16.msra.mxu0 0
  %1312 = vmatprep.subr.bf16.mxu0 0
  %1313 = vmatpush1.bf16.msra.mxu0 0
  %1314 = vmatprep.subr.bf16.mxu0 0
  %1315 = vmatpush1.bf16.msra.mxu0 0
  %1316 = vmatprep.subr.bf16.mxu0 0
  %1317 = vmatpush1.bf16.msra.mxu0 0
  %1318 = vmatprep.subr.bf16.mxu0 0
  %1319 = vmatpush1.bf16.msra.mxu0 0
  %1320 = vmatprep.subr.bf16.mxu0 0
  %1321 = vmatpush1.bf16.msra.mxu0 0
  %1322 = vmatprep.subr.bf16.mxu0 0
  %1323 = vmatpush1.bf16.msra.mxu0 0
  %1324 = vmatprep.subr.bf16.mxu0 0
  %1325 = vmatpush1.bf16.msra.mxu0 0
  %1326 = vmatprep.subr.bf16.mxu0 0
  %1327 = vmatpush1.bf16.msra.mxu0 0
  %1328 = vmatprep.subr.bf16.mxu0 0
  %1329 = vmatpush1.bf16.msra.mxu0 0
  %1330 = vmatprep.mubr.bf16.mxu0 0
  %1331 = vmatmul.mubr.bf16.gmra.mrb[0].mxu0 %v244
  %v1332 = vpop.f32.mrb[0].mxu0
  %v1333 = vadd.f32 0.0, %v1332
  %v1334 = vpop.f32.mrb[0].mxu0
  %v1335 = vpop.f32.mrb[0].mxu0
  %v1336 = vadd.f32 0.0, %v1335
  %v1337 = vpop.f32.mrb[0].mxu0
  %1338 = vmatprep.mubr.bf16.mxu0 0
  %1339 = vmatmul.mubr.bf16.gmra.mrb[0].mxu0 %v247
  %v1340 = vpop.f32.mrb[0].mxu0
  %v1341 = vadd.f32 0.0, %v1340
  %v1342 = vpop.f32.mrb[0].mxu0
  %v1343 = vpop.f32.mrb[0].mxu0
  %v1344 = vadd.f32 0.0, %v1343
  %v1345 = vpop.f32.mrb[0].mxu0
  %1346 = vmatprep.mubr.bf16.mxu0 0
  %1347 = vmatmul.mubr.bf16.gmra.mrb[0].mxu0 %v250
  %v1348 = vpop.f32.mrb[0].mxu0
  %v1349 = vadd.f32 0.0, %v1348
  %v1350 = vpop.f32.mrb[0].mxu0
  %v1351 = vpop.f32.mrb[0].mxu0
  %v1352 = vadd.f32 0.0, %v1351
  %v1353 = vpop.f32.mrb[0].mxu0
  %1354 = vmatprep.mubr.bf16.mxu0 0
  %1355 = vmatmul.mubr.bf16.gmra.mrb[0].mxu0 %v253
  %v1356 = vpop.f32.mrb[0].mxu0
  %v1357 = vadd.f32 0.0, %v1356
  %v1358 = vpop.f32.mrb[0].mxu0
  %v1359 = vpop.f32.mrb[0].mxu0
  %v1360 = vadd.f32 0.0, %v1359
  %v1361 = vpop.f32.mrb[0].mxu0
  %1362 = vmatprep.mubr.bf16.mxu0 0
  %1363 = vmatmul.mubr.bf16.gmra.mrb[0].mxu0 %v256
  %v1364 = vpop.f32.mrb[0].mxu0
  %v1365 = vadd.f32 0.0, %v1364
  %v1366 = vpop.f32.mrb[0].mxu0
  %v1367 = vpop.f32.mrb[0].mxu0
  %v1368 = vadd.f32 0.0, %v1367
  %v1369 = vpop.f32.mrb[0].mxu0
  %1370 = vmatprep.mubr.bf16.mxu0 0
  %1371 = vmatmul.mubr.bf16.gmra.mrb[0].mxu0 %v259
  %v1372 = vpop.f32.mrb[0].mxu0
  %v1373 = vadd.f32 0.0, %v1372
  %v1374 = vpop.f32.mrb[0].mxu0
  %v1375 = vpop.f32.mrb[0].mxu0
  %v1376 = vadd.f32 0.0, %v1375
  %v1377 = vpop.f32.mrb[0].mxu0
  %1378 = vmatprep.mubr.bf16.mxu0 0
  %1379 = vmatmul.mubr.bf16.gmra.mrb[0].mxu0 %v262
  %v1380 = vpop.f32.mrb[0].mxu0
  %v1381 = vadd.f32 0.0, %v1380
  %v1382 = vpop.f32.mrb[0].mxu0
  %v1383 = vpop.f32.mrb[0].mxu0
  %v1384 = vadd.f32 0.0, %v1383
  %v1385 = vpop.f32.mrb[0].mxu0
  %1386 = vmatprep.mubr.bf16.mxu0 0
  %1387 = vmatmul.mubr.bf16.gmra.mrb[0].mxu0 %v265
  %v1388 = vpop.f32.mrb[0].mxu0
  %v1389 = vadd.f32 0.0, %v1388
  %v1390 = vpop.f32.mrb[0].mxu0
  %v1391 = vpop.f32.mrb[0].mxu0
  %v1392 = vadd.f32 0.0, %v1391
  %v1393 = vpop.f32.mrb[0].mxu0
  %1394 = vmatprep.mubr.bf16.mxu0 0
  %1395 = vmatmul.mubr.bf16.gmra.mrb[0].mxu0 %v268
  %v1396 = vpop.f32.mrb[0].mxu0
  %v1397 = vadd.f32 0.0, %v1396
  %v1398 = vpop.f32.mrb[0].mxu0
  %v1399 = vpop.f32.mrb[0].mxu0
  %v1400 = vadd.f32 0.0, %v1399
  %v1401 = vpop.f32.mrb[0].mxu0
  %1402 = vmatprep.mubr.bf16.mxu0 0
  %1403 = vmatmul.mubr.bf16.gmra.mrb[0].mxu0 %v271
  %v1404 = vpop.f32.mrb[0].mxu0
  %v1405 = vadd.f32 0.0, %v1404
  %v1406 = vpop.f32.mrb[0].mxu0
  %v1407 = vpop.f32.mrb[0].mxu0
  %v1408 = vadd.f32 0.0, %v1407
  %v1409 = vpop.f32.mrb[0].mxu0
  %1410 = vmatprep.mubr.bf16.mxu0 0
  %1411 = vmatmul.mubr.bf16.gmra.mrb[0].mxu0 %v274
  %v1412 = vpop.f32.mrb[0].mxu0
  %v1413 = vadd.f32 0.0, %v1412
  %v1414 = vpop.f32.mrb[0].mxu0
  %v1415 = vpop.f32.mrb[0].mxu0
  %v1416 = vadd.f32 0.0, %v1415
  %v1417 = vpop.f32.mrb[0].mxu0
  %1418 = vmatprep.mubr.bf16.mxu0 0
  %1419 = vmatmul.mubr.bf16.gmra.mrb[0].mxu0 %v277
  %v1420 = vpop.f32.mrb[0].mxu0
  %v1421 = vadd.f32 0.0, %v1420
  %v1422 = vpop.f32.mrb[0].mxu0
  %v1423 = vpop.f32.mrb[0].mxu0
  %v1424 = vadd.f32 0.0, %v1423
  %v1425 = vpop.f32.mrb[0].mxu0
  %1426 = vmatprep.mubr.bf16.mxu0 0
  %1427 = vmatmul.mubr.bf16.gmra.mrb[0].mxu0 %v280
  %v1428 = vpop.f32.mrb[0].mxu0
  %v1429 = vadd.f32 0.0, %v1428
  %v1430 = vpop.f32.mrb[0].mxu0
  %v1431 = vpop.f32.mrb[0].mxu0
  %v1432 = vadd.f32 0.0, %v1431
  %v1433 = vpop.f32.mrb[0].mxu0
  %1434 = vmatprep.mubr.bf16.mxu0 0
  %1435 = vmatmul.mubr.bf16.gmra.mrb[0].mxu0 %v283
  %v1436 = vpop.f32.mrb[0].mxu0
  %v1437 = vadd.f32 0.0, %v1436
  %v1438 = vpop.f32.mrb[0].mxu0
  %v1439 = vpop.f32.mrb[0].mxu0
  %v1440 = vadd.f32 0.0, %v1439
  %v1441 = vpop.f32.mrb[0].mxu0
  %1442 = vmatprep.mubr.bf16.mxu0 0
  %1443 = vmatmul.mubr.bf16.gmra.mrb[0].mxu0 %v286
  %v1444 = vpop.f32.mrb[0].mxu0
  %v1445 = vadd.f32 0.0, %v1444
  %v1446 = vpop.f32.mrb[0].mxu0
  %v1447 = vpop.f32.mrb[0].mxu0
  %v1448 = vadd.f32 0.0, %v1447
  %v1449 = vpop.f32.mrb[0].mxu0
  %1450 = vmatprep.mubr.bf16.mxu0 0
  %1451 = vmatmul.mubr.bf16.gmra.mrb[0].mxu0 %v289
  %v1452 = vpop.f32.mrb[0].mxu0
  %v1453 = vadd.f32 0.0, %v1452
  %v1454 = vpop.f32.mrb[0].mxu0
  %v1455 = vpop.f32.mrb[0].mxu0
  %v1456 = vadd.f32 0.0, %v1455
  %v1457 = vpop.f32.mrb[0].mxu0
  %1458 = vmatprep.mubr.bf16.mxu0 0
  %1459 = vmatmul.mubr.bf16.gmra.mrb[0].mxu0 %v292
  %v1460 = vpop.f32.mrb[0].mxu0
  %v1461 = vadd.f32 0.0, %v1460
  %v1462 = vpop.f32.mrb[0].mxu0
  %v1463 = vpop.f32.mrb[0].mxu0
  %v1464 = vadd.f32 0.0, %v1463
  %v1465 = vpop.f32.mrb[0].mxu0
  %1466 = vmatprep.mubr.bf16.mxu0 0
  %1467 = vmatmul.mubr.bf16.gmra.mrb[0].mxu0 %v295
  %v1468 = vpop.f32.mrb[0].mxu0
  %v1469 = vadd.f32 0.0, %v1468
  %v1470 = vpop.f32.mrb[0].mxu0
  %v1471 = vpop.f32.mrb[0].mxu0
  %v1472 = vadd.f32 0.0, %v1471
  %v1473 = vpop.f32.mrb[0].mxu0
  %1474 = vmatprep.mubr.bf16.mxu0 0
  %1475 = vmatmul.mubr.bf16.gmra.mrb[0].mxu0 %v298
  %v1476 = vpop.f32.mrb[0].mxu0
  %v1477 = vadd.f32 0.0, %v1476
  %v1478 = vpop.f32.mrb[0].mxu0
  %v1479 = vpop.f32.mrb[0].mxu0
  %v1480 = vadd.f32 0.0, %v1479
  %v1481 = vpop.f32.mrb[0].mxu0
  %1482 = vmatprep.mubr.bf16.mxu0 0
  %1483 = vmatmul.mubr.bf16.gmra.mrb[0].mxu0 %v301
  %v1484 = vpop.f32.mrb[0].mxu0
  %v1485 = vadd.f32 0.0, %v1484
  %v1486 = vpop.f32.mrb[0].mxu0
  %v1487 = vpop.f32.mrb[0].mxu0
  %v1488 = vadd.f32 0.0, %v1487
  %v1489 = vpop.f32.mrb[0].mxu0
  %1490 = vmatprep.mubr.bf16.mxu0 0
  %1491 = vmatmul.mubr.bf16.gmra.mrb[0].mxu0 %v304
  %v1492 = vpop.f32.mrb[0].mxu0
  %v1493 = vadd.f32 0.0, %v1492
  %v1494 = vpop.f32.mrb[0].mxu0
  %v1495 = vpop.f32.mrb[0].mxu0
  %v1496 = vadd.f32 0.0, %v1495
  %v1497 = vpop.f32.mrb[0].mxu0
  %1498 = vmatprep.mubr.bf16.mxu0 0
  %1499 = vmatmul.mubr.bf16.gmra.mrb[0].mxu0 %v307
  %v1500 = vpop.f32.mrb[0].mxu0
  %v1501 = vadd.f32 0.0, %v1500
  %v1502 = vpop.f32.mrb[0].mxu0
  %v1503 = vpop.f32.mrb[0].mxu0
  %v1504 = vadd.f32 0.0, %v1503
  %v1505 = vpop.f32.mrb[0].mxu0
  %1506 = vmatprep.mubr.bf16.mxu0 0
  %1507 = vmatmul.mubr.bf16.gmra.mrb[0].mxu0 %v310
  %v1508 = vpop.f32.mrb[0].mxu0
  %v1509 = vadd.f32 0.0, %v1508
  %v1510 = vpop.f32.mrb[0].mxu0
  %v1511 = vpop.f32.mrb[0].mxu0
  %v1512 = vadd.f32 0.0, %v1511
  %v1513 = vpop.f32.mrb[0].mxu0
  %1514 = vmatprep.mubr.bf16.mxu0 0
  %1515 = vmatmul.mubr.bf16.gmra.mrb[0].mxu0 %v1293
  %v1516 = vpop.f32.mrb[0].mxu0
  %v1517 = vadd.f32 0.0, %v1516
  %v1518 = vpop.f32.mrb[0].mxu0
  %v1519 = vpop.f32.mrb[0].mxu0
  %v1520 = vadd.f32 0.0, %v1519
  %v1521 = vpop.f32.mrb[0].mxu0
  %1522 = vdwg.mxu0
  %v1523 = vadd.f32 %v598, %v1333
  %v1524 = vadd.f32 %v601, %v1336
  %v1525 = vadd.f32 %v606, %v1341
  %v1526 = vadd.f32 %v609, %v1344
  %v1527 = vadd.f32 %v614, %v1349
  %v1528 = vadd.f32 %v617, %v1352
  %v1529 = vadd.f32 %v622, %v1357
  %v1530 = vadd.f32 %v625, %v1360
  %v1531 = vadd.f32 %v630, %v1365
  %v1532 = vadd.f32 %v633, %v1368
  %v1533 = vadd.f32 %v638, %v1373
  %v1534 = vadd.f32 %v641, %v1376
  %v1535 = vadd.f32 %v646, %v1381
  %v1536 = vadd.f32 %v649, %v1384
  %v1537 = vadd.f32 %v654, %v1389
  %v1538 = vadd.f32 %v657, %v1392
  %v1539 = vadd.f32 %v662, %v1397
  %v1540 = vadd.f32 %v665, %v1400
  %v1541 = vadd.f32 %v670, %v1405
  %v1542 = vadd.f32 %v673, %v1408
  %v1543 = vadd.f32 %v678, %v1413
  %v1544 = vadd.f32 %v681, %v1416
  %v1545 = vadd.f32 %v686, %v1421
  %v1546 = vadd.f32 %v689, %v1424
  %v1547 = vadd.f32 %v694, %v1429
  %v1548 = vadd.f32 %v697, %v1432
  %v1549 = vadd.f32 %v702, %v1437
  %v1550 = vadd.f32 %v705, %v1440
  %v1551 = vadd.f32 %v710, %v1445
  %v1552 = vadd.f32 %v713, %v1448
  %v1553 = vadd.f32 %v718, %v1453
  %v1554 = vadd.f32 %v721, %v1456
  %v1555 = vadd.f32 %v726, %v1461
  %v1556 = vadd.f32 %v729, %v1464
  %v1557 = vadd.f32 %v734, %v1469
  %v1558 = vadd.f32 %v737, %v1472
  %v1559 = vadd.f32 %v742, %v1477
  %v1560 = vadd.f32 %v745, %v1480
  %v1561 = vadd.f32 %v750, %v1485
  %v1562 = vadd.f32 %v753, %v1488
  %v1563 = vadd.f32 %v758, %v1493
  %v1564 = vadd.f32 %v761, %v1496
  %v1565 = vadd.f32 %v766, %v1501
  %v1566 = vadd.f32 %v769, %v1504
  %v1567 = vadd.f32 %v774, %v1509
  %v1568 = vadd.f32 %v777, %v1512
  %v1569 = vadd.f32 %v782, %v1517
  %v1570 = vadd.f32 %v785, %v1520
  %s1571 = scalar_lea.vmem %s2, 32
  %v1572 = vld [vmem:[%s1571] sm:$0xf]
  %v1573 = vld [vmem:[%s1571 + $0x4] sm:$0xf]
  %v1574 = vld [vmem:[%s1571 + $0x8] sm:$0xf]
  %v1575 = vld [vmem:[%s1571 + $0xc] sm:$0x3]
  %v1580 = vunpack.c.l.b16 %v1572
  %v1581 = vunpack.c.l.b16 %v1573
  %v1582 = vunpack.c.l.b16 %v1574
  %v1583 = vunpack.c.l.b16 %v1575
  %v1584 = vpack.c.b16 %v1581, %v1580
  %v1585 = vpack.c.b16 %v1583, %v1582
  %v1588 = vsel %vm312, %v1585, 0
  %1590 = vmatprep.subr.bf16.mxu0 0
  %1591 = vmatpush1.bf16.msra.mxu0 %v1584
  %1592 = vmatprep.subr.bf16.mxu0 0
  %1593 = vmatpush1.bf16.msra.mxu0 %v1588
  %1594 = vmatprep.subr.bf16.mxu0 0
  %1595 = vmatpush1.bf16.msra.mxu0 0
  %1596 = vmatprep.subr.bf16.mxu0 0
  %1597 = vmatpush1.bf16.msra.mxu0 0
  %1598 = vmatprep.subr.bf16.mxu0 0
  %1599 = vmatpush1.bf16.msra.mxu0 0
  %1600 = vmatprep.subr.bf16.mxu0 0
  %1601 = vmatpush1.bf16.msra.mxu0 0
  %1602 = vmatprep.subr.bf16.mxu0 0
  %1603 = vmatpush1.bf16.msra.mxu0 0
  %1604 = vmatprep.subr.bf16.mxu0 0
  %1605 = vmatpush1.bf16.msra.mxu0 0
  %1606 = vmatprep.subr.bf16.mxu0 0
  %1607 = vmatpush1.bf16.msra.mxu0 0
  %1608 = vmatprep.subr.bf16.mxu0 0
  %1609 = vmatpush1.bf16.msra.mxu0 0
  %1610 = vmatprep.subr.bf16.mxu0 0
  %1611 = vmatpush1.bf16.msra.mxu0 0
  %1612 = vmatprep.subr.bf16.mxu0 0
  %1613 = vmatpush1.bf16.msra.mxu0 0
  %1614 = vmatprep.subr.bf16.mxu0 0
  %1615 = vmatpush1.bf16.msra.mxu0 0
  %1616 = vmatprep.subr.bf16.mxu0 0
  %1617 = vmatpush1.bf16.msra.mxu0 0
  %1618 = vmatprep.subr.bf16.mxu0 0
  %1619 = vmatpush1.bf16.msra.mxu0 0
  %1620 = vmatprep.subr.bf16.mxu0 0
  %1621 = vmatpush1.bf16.msra.mxu0 0
  %1622 = vmatprep.mubr.bf16.mxu0 0
  %1623 = vmatmul.mubr.bf16.gmra.mrb[0].mxu0 %v244
  %v1624 = vpop.f32.mrb[0].mxu0
  %v1625 = vadd.f32 0.0, %v1624
  %v1626 = vpop.f32.mrb[0].mxu0
  %v1627 = vpop.f32.mrb[0].mxu0
  %v1628 = vadd.f32 0.0, %v1627
  %v1629 = vpop.f32.mrb[0].mxu0
  %1630 = vmatprep.mubr.bf16.mxu0 0
  %1631 = vmatmul.mubr.bf16.gmra.mrb[0].mxu0 %v247
  %v1632 = vpop.f32.mrb[0].mxu0
  %v1633 = vadd.f32 0.0, %v1632
  %v1634 = vpop.f32.mrb[0].mxu0
  %v1635 = vpop.f32.mrb[0].mxu0
  %v1636 = vadd.f32 0.0, %v1635
  %v1637 = vpop.f32.mrb[0].mxu0
  %1638 = vmatprep.mubr.bf16.mxu0 0
  %1639 = vmatmul.mubr.bf16.gmra.mrb[0].mxu0 %v250
  %v1640 = vpop.f32.mrb[0].mxu0
  %v1641 = vadd.f32 0.0, %v1640
  %v1642 = vpop.f32.mrb[0].mxu0
  %v1643 = vpop.f32.mrb[0].mxu0
  %v1644 = vadd.f32 0.0, %v1643
  %v1645 = vpop.f32.mrb[0].mxu0
  %1646 = vmatprep.mubr.bf16.mxu0 0
  %1647 = vmatmul.mubr.bf16.gmra.mrb[0].mxu0 %v253
  %v1648 = vpop.f32.mrb[0].mxu0
  %v1649 = vadd.f32 0.0, %v1648
  %v1650 = vpop.f32.mrb[0].mxu0
  %v1651 = vpop.f32.mrb[0].mxu0
  %v1652 = vadd.f32 0.0, %v1651
  %v1653 = vpop.f32.mrb[0].mxu0
  %1654 = vmatprep.mubr.bf16.mxu0 0
  %1655 = vmatmul.mubr.bf16.gmra.mrb[0].mxu0 %v256
  %v1656 = vpop.f32.mrb[0].mxu0
  %v1657 = vadd.f32 0.0, %v1656
  %v1658 = vpop.f32.mrb[0].mxu0
  %v1659 = vpop.f32.mrb[0].mxu0
  %v1660 = vadd.f32 0.0, %v1659
  %v1661 = vpop.f32.mrb[0].mxu0
  %1662 = vmatprep.mubr.bf16.mxu0 0
  %1663 = vmatmul.mubr.bf16.gmra.mrb[0].mxu0 %v259
  %v1664 = vpop.f32.mrb[0].mxu0
  %v1665 = vadd.f32 0.0, %v1664
  %v1666 = vpop.f32.mrb[0].mxu0
  %v1667 = vpop.f32.mrb[0].mxu0
  %v1668 = vadd.f32 0.0, %v1667
  %v1669 = vpop.f32.mrb[0].mxu0
  %1670 = vmatprep.mubr.bf16.mxu0 0
  %1671 = vmatmul.mubr.bf16.gmra.mrb[0].mxu0 %v262
  %v1672 = vpop.f32.mrb[0].mxu0
  %v1673 = vadd.f32 0.0, %v1672
  %v1674 = vpop.f32.mrb[0].mxu0
  %v1675 = vpop.f32.mrb[0].mxu0
  %v1676 = vadd.f32 0.0, %v1675
  %v1677 = vpop.f32.mrb[0].mxu0
  %1678 = vmatprep.mubr.bf16.mxu0 0
  %1679 = vmatmul.mubr.bf16.gmra.mrb[0].mxu0 %v265
  %v1680 = vpop.f32.mrb[0].mxu0
  %v1681 = vadd.f32 0.0, %v1680
  %v1682 = vpop.f32.mrb[0].mxu0
  %v1683 = vpop.f32.mrb[0].mxu0
  %v1684 = vadd.f32 0.0, %v1683
  %v1685 = vpop.f32.mrb[0].mxu0
  %1686 = vmatprep.mubr.bf16.mxu0 0
  %1687 = vmatmul.mubr.bf16.gmra.mrb[0].mxu0 %v268
  %v1688 = vpop.f32.mrb[0].mxu0
  %v1689 = vadd.f32 0.0, %v1688
  %v1690 = vpop.f32.mrb[0].mxu0
  %v1691 = vpop.f32.mrb[0].mxu0
  %v1692 = vadd.f32 0.0, %v1691
  %v1693 = vpop.f32.mrb[0].mxu0
  %1694 = vmatprep.mubr.bf16.mxu0 0
  %1695 = vmatmul.mubr.bf16.gmra.mrb[0].mxu0 %v271
  %v1696 = vpop.f32.mrb[0].mxu0
  %v1697 = vadd.f32 0.0, %v1696
  %v1698 = vpop.f32.mrb[0].mxu0
  %v1699 = vpop.f32.mrb[0].mxu0
  %v1700 = vadd.f32 0.0, %v1699
  %v1701 = vpop.f32.mrb[0].mxu0
  %1702 = vmatprep.mubr.bf16.mxu0 0
  %1703 = vmatmul.mubr.bf16.gmra.mrb[0].mxu0 %v274
  %v1704 = vpop.f32.mrb[0].mxu0
  %v1705 = vadd.f32 0.0, %v1704
  %v1706 = vpop.f32.mrb[0].mxu0
  %v1707 = vpop.f32.mrb[0].mxu0
  %v1708 = vadd.f32 0.0, %v1707
  %v1709 = vpop.f32.mrb[0].mxu0
  %1710 = vmatprep.mubr.bf16.mxu0 0
  %1711 = vmatmul.mubr.bf16.gmra.mrb[0].mxu0 %v277
  %v1712 = vpop.f32.mrb[0].mxu0
  %v1713 = vadd.f32 0.0, %v1712
  %v1714 = vpop.f32.mrb[0].mxu0
  %v1715 = vpop.f32.mrb[0].mxu0
  %v1716 = vadd.f32 0.0, %v1715
  %v1717 = vpop.f32.mrb[0].mxu0
  %1718 = vmatprep.mubr.bf16.mxu0 0
  %1719 = vmatmul.mubr.bf16.gmra.mrb[0].mxu0 %v280
  %v1720 = vpop.f32.mrb[0].mxu0
  %v1721 = vadd.f32 0.0, %v1720
  %v1722 = vpop.f32.mrb[0].mxu0
  %v1723 = vpop.f32.mrb[0].mxu0
  %v1724 = vadd.f32 0.0, %v1723
  %v1725 = vpop.f32.mrb[0].mxu0
  %1726 = vmatprep.mubr.bf16.mxu0 0
  %1727 = vmatmul.mubr.bf16.gmra.mrb[0].mxu0 %v283
  %v1728 = vpop.f32.mrb[0].mxu0
  %v1729 = vadd.f32 0.0, %v1728
  %v1730 = vpop.f32.mrb[0].mxu0
  %v1731 = vpop.f32.mrb[0].mxu0
  %v1732 = vadd.f32 0.0, %v1731
  %v1733 = vpop.f32.mrb[0].mxu0
  %1734 = vmatprep.mubr.bf16.mxu0 0
  %1735 = vmatmul.mubr.bf16.gmra.mrb[0].mxu0 %v286
  %v1736 = vpop.f32.mrb[0].mxu0
  %v1737 = vadd.f32 0.0, %v1736
  %v1738 = vpop.f32.mrb[0].mxu0
  %v1739 = vpop.f32.mrb[0].mxu0
  %v1740 = vadd.f32 0.0, %v1739
  %v1741 = vpop.f32.mrb[0].mxu0
  %1742 = vmatprep.mubr.bf16.mxu0 0
  %1743 = vmatmul.mubr.bf16.gmra.mrb[0].mxu0 %v289
  %v1744 = vpop.f32.mrb[0].mxu0
  %v1745 = vadd.f32 0.0, %v1744
  %v1746 = vpop.f32.mrb[0].mxu0
  %v1747 = vpop.f32.mrb[0].mxu0
  %v1748 = vadd.f32 0.0, %v1747
  %v1749 = vpop.f32.mrb[0].mxu0
  %1750 = vmatprep.mubr.bf16.mxu0 0
  %1751 = vmatmul.mubr.bf16.gmra.mrb[0].mxu0 %v292
  %v1752 = vpop.f32.mrb[0].mxu0
  %v1753 = vadd.f32 0.0, %v1752
  %v1754 = vpop.f32.mrb[0].mxu0
  %v1755 = vpop.f32.mrb[0].mxu0
  %v1756 = vadd.f32 0.0, %v1755
  %v1757 = vpop.f32.mrb[0].mxu0
  %1758 = vmatprep.mubr.bf16.mxu0 0
  %1759 = vmatmul.mubr.bf16.gmra.mrb[0].mxu0 %v295
  %v1760 = vpop.f32.mrb[0].mxu0
  %v1761 = vadd.f32 0.0, %v1760
  %v1762 = vpop.f32.mrb[0].mxu0
  %v1763 = vpop.f32.mrb[0].mxu0
  %v1764 = vadd.f32 0.0, %v1763
  %v1765 = vpop.f32.mrb[0].mxu0
  %1766 = vmatprep.mubr.bf16.mxu0 0
  %1767 = vmatmul.mubr.bf16.gmra.mrb[0].mxu0 %v298
  %v1768 = vpop.f32.mrb[0].mxu0
  %v1769 = vadd.f32 0.0, %v1768
  %v1770 = vpop.f32.mrb[0].mxu0
  %v1771 = vpop.f32.mrb[0].mxu0
  %v1772 = vadd.f32 0.0, %v1771
  %v1773 = vpop.f32.mrb[0].mxu0
  %1774 = vmatprep.mubr.bf16.mxu0 0
  %1775 = vmatmul.mubr.bf16.gmra.mrb[0].mxu0 %v301
  %v1776 = vpop.f32.mrb[0].mxu0
  %v1777 = vadd.f32 0.0, %v1776
  %v1778 = vpop.f32.mrb[0].mxu0
  %v1779 = vpop.f32.mrb[0].mxu0
  %v1780 = vadd.f32 0.0, %v1779
  %v1781 = vpop.f32.mrb[0].mxu0
  %1782 = vmatprep.mubr.bf16.mxu0 0
  %1783 = vmatmul.mubr.bf16.gmra.mrb[0].mxu0 %v304
  %v1784 = vpop.f32.mrb[0].mxu0
  %v1785 = vadd.f32 0.0, %v1784
  %v1786 = vpop.f32.mrb[0].mxu0
  %v1787 = vpop.f32.mrb[0].mxu0
  %v1788 = vadd.f32 0.0, %v1787
  %v1789 = vpop.f32.mrb[0].mxu0
  %1790 = vmatprep.mubr.bf16.mxu0 0
  %1791 = vmatmul.mubr.bf16.gmra.mrb[0].mxu0 %v307
  %v1792 = vpop.f32.mrb[0].mxu0
  %v1793 = vadd.f32 0.0, %v1792
  %v1794 = vpop.f32.mrb[0].mxu0
  %v1795 = vpop.f32.mrb[0].mxu0
  %v1796 = vadd.f32 0.0, %v1795
  %v1797 = vpop.f32.mrb[0].mxu0
  %1798 = vmatprep.mubr.bf16.mxu0 0
  %1799 = vmatmul.mubr.bf16.gmra.mrb[0].mxu0 %v310
  %v1800 = vpop.f32.mrb[0].mxu0
  %v1801 = vadd.f32 0.0, %v1800
  %v1802 = vpop.f32.mrb[0].mxu0
  %v1803 = vpop.f32.mrb[0].mxu0
  %v1804 = vadd.f32 0.0, %v1803
  %v1805 = vpop.f32.mrb[0].mxu0
  %1806 = vmatprep.mubr.bf16.mxu0 0
  %1807 = vmatmul.mubr.bf16.gmra.mrb[0].mxu0 %v1293
  %v1808 = vpop.f32.mrb[0].mxu0
  %v1809 = vadd.f32 0.0, %v1808
  %v1810 = vpop.f32.mrb[0].mxu0
  %v1811 = vpop.f32.mrb[0].mxu0
  %v1812 = vadd.f32 0.0, %v1811
  %v1813 = vpop.f32.mrb[0].mxu0
  %1814 = vdwg.mxu0
  %v1815 = vadd.f32 %v1081, %v1625
  %v1816 = vadd.f32 %v1084, %v1628
  %v1817 = vadd.f32 %v1089, %v1633
  %v1818 = vadd.f32 %v1092, %v1636
  %v1819 = vadd.f32 %v1097, %v1641
  %v1820 = vadd.f32 %v1100, %v1644
  %v1821 = vadd.f32 %v1105, %v1649
  %v1822 = vadd.f32 %v1108, %v1652
  %v1823 = vadd.f32 %v1113, %v1657
  %v1824 = vadd.f32 %v1116, %v1660
  %v1825 = vadd.f32 %v1121, %v1665
  %v1826 = vadd.f32 %v1124, %v1668
  %v1827 = vadd.f32 %v1129, %v1673
  %v1828 = vadd.f32 %v1132, %v1676
  %v1829 = vadd.f32 %v1137, %v1681
  %v1830 = vadd.f32 %v1140, %v1684
  %v1831 = vadd.f32 %v1145, %v1689
  %v1832 = vadd.f32 %v1148, %v1692
  %v1833 = vadd.f32 %v1153, %v1697
  %v1834 = vadd.f32 %v1156, %v1700
  %v1835 = vadd.f32 %v1161, %v1705
  %v1836 = vadd.f32 %v1164, %v1708
  %v1837 = vadd.f32 %v1169, %v1713
  %v1838 = vadd.f32 %v1172, %v1716
  %v1839 = vadd.f32 %v1177, %v1721
  %v1840 = vadd.f32 %v1180, %v1724
  %v1841 = vadd.f32 %v1185, %v1729
  %v1842 = vadd.f32 %v1188, %v1732
  %v1843 = vadd.f32 %v1193, %v1737
  %v1844 = vadd.f32 %v1196, %v1740
  %v1845 = vadd.f32 %v1201, %v1745
  %v1846 = vadd.f32 %v1204, %v1748
  %v1847 = vadd.f32 %v1209, %v1753
  %v1848 = vadd.f32 %v1212, %v1756
  %v1849 = vadd.f32 %v1217, %v1761
  %v1850 = vadd.f32 %v1220, %v1764
  %v1851 = vadd.f32 %v1225, %v1769
  %v1852 = vadd.f32 %v1228, %v1772
  %v1853 = vadd.f32 %v1233, %v1777
  %v1854 = vadd.f32 %v1236, %v1780
  %v1855 = vadd.f32 %v1241, %v1785
  %v1856 = vadd.f32 %v1244, %v1788
  %v1857 = vadd.f32 %v1249, %v1793
  %v1858 = vadd.f32 %v1252, %v1796
  %v1859 = vadd.f32 %v1257, %v1801
  %v1860 = vadd.f32 %v1260, %v1804
  %v1861 = vadd.f32 %v1265, %v1809
  %v1862 = vadd.f32 %v1268, %v1812
  %s1863 = scalar_lea.vmem %s1, 48
  %v1864 = vld [vmem:[%s1863] sm:$0xf]
  %v1865 = vld [vmem:[%s1863 + $0x4] sm:$0xf]
  %v1866 = vld [vmem:[%s1863 + $0x8] sm:$0xf]
  %v1867 = vld [vmem:[%s1863 + $0xc] sm:$0x3]
  %v1870 = vunpack.c.l.b16 %v91
  %v1871 = vunpack.c.l.b16 %v92
  %v1872 = vpack.c.b16 %v1871, %v1870
  %v1877 = vunpack.c.l.b16 %v1864
  %v1878 = vunpack.c.l.b16 %v1865
  %v1879 = vunpack.c.l.b16 %v1866
  %v1880 = vunpack.c.l.b16 %v1867
  %v1881 = vpack.c.b16 %v1878, %v1877
  %v1882 = vpack.c.b16 %v1880, %v1879
  %v1885 = vsel %vm239, %v1872, 0
  %v1888 = vsel %vm312, %v1882, 0
  %1890 = vmatprep.subr.bf16.mxu0 0
  %1891 = vmatpush1.bf16.msra.mxu0 %v1881
  %1892 = vmatprep.subr.bf16.mxu0 0
  %1893 = vmatpush1.bf16.msra.mxu0 %v1888
  %1894 = vmatprep.subr.bf16.mxu0 0
  %1895 = vmatpush1.bf16.msra.mxu0 0
  %1896 = vmatprep.subr.bf16.mxu0 0
  %1897 = vmatpush1.bf16.msra.mxu0 0
  %1898 = vmatprep.subr.bf16.mxu0 0
  %1899 = vmatpush1.bf16.msra.mxu0 0
  %1900 = vmatprep.subr.bf16.mxu0 0
  %1901 = vmatpush1.bf16.msra.mxu0 0
  %1902 = vmatprep.subr.bf16.mxu0 0
  %1903 = vmatpush1.bf16.msra.mxu0 0
  %1904 = vmatprep.subr.bf16.mxu0 0
  %1905 = vmatpush1.bf16.msra.mxu0 0
  %1906 = vmatprep.subr.bf16.mxu0 0
  %1907 = vmatpush1.bf16.msra.mxu0 0
  %1908 = vmatprep.subr.bf16.mxu0 0
  %1909 = vmatpush1.bf16.msra.mxu0 0
  %1910 = vmatprep.subr.bf16.mxu0 0
  %1911 = vmatpush1.bf16.msra.mxu0 0
  %1912 = vmatprep.subr.bf16.mxu0 0
  %1913 = vmatpush1.bf16.msra.mxu0 0
  %1914 = vmatprep.subr.bf16.mxu0 0
  %1915 = vmatpush1.bf16.msra.mxu0 0
  %1916 = vmatprep.subr.bf16.mxu0 0
  %1917 = vmatpush1.bf16.msra.mxu0 0
  %1918 = vmatprep.subr.bf16.mxu0 0
  %1919 = vmatpush1.bf16.msra.mxu0 0
  %1920 = vmatprep.subr.bf16.mxu0 0
  %1921 = vmatpush1.bf16.msra.mxu0 0
  %1922 = vmatprep.mubr.bf16.mxu0 0
  %1923 = vmatmul.mubr.bf16.gmra.mrb[0].mxu0 %v247
  %v1924 = vpop.f32.mrb[0].mxu0
  %v1925 = vadd.f32 0.0, %v1924
  %v1926 = vpop.f32.mrb[0].mxu0
  %v1927 = vpop.f32.mrb[0].mxu0
  %v1928 = vadd.f32 0.0, %v1927
  %v1929 = vpop.f32.mrb[0].mxu0
  %1930 = vmatprep.mubr.bf16.mxu0 0
  %1931 = vmatmul.mubr.bf16.gmra.mrb[0].mxu0 %v250
  %v1932 = vpop.f32.mrb[0].mxu0
  %v1933 = vadd.f32 0.0, %v1932
  %v1934 = vpop.f32.mrb[0].mxu0
  %v1935 = vpop.f32.mrb[0].mxu0
  %v1936 = vadd.f32 0.0, %v1935
  %v1937 = vpop.f32.mrb[0].mxu0
  %1938 = vmatprep.mubr.bf16.mxu0 0
  %1939 = vmatmul.mubr.bf16.gmra.mrb[0].mxu0 %v253
  %v1940 = vpop.f32.mrb[0].mxu0
  %v1941 = vadd.f32 0.0, %v1940
  %v1942 = vpop.f32.mrb[0].mxu0
  %v1943 = vpop.f32.mrb[0].mxu0
  %v1944 = vadd.f32 0.0, %v1943
  %v1945 = vpop.f32.mrb[0].mxu0
  %1946 = vmatprep.mubr.bf16.mxu0 0
  %1947 = vmatmul.mubr.bf16.gmra.mrb[0].mxu0 %v256
  %v1948 = vpop.f32.mrb[0].mxu0
  %v1949 = vadd.f32 0.0, %v1948
  %v1950 = vpop.f32.mrb[0].mxu0
  %v1951 = vpop.f32.mrb[0].mxu0
  %v1952 = vadd.f32 0.0, %v1951
  %v1953 = vpop.f32.mrb[0].mxu0
  %1954 = vmatprep.mubr.bf16.mxu0 0
  %1955 = vmatmul.mubr.bf16.gmra.mrb[0].mxu0 %v259
  %v1956 = vpop.f32.mrb[0].mxu0
  %v1957 = vadd.f32 0.0, %v1956
  %v1958 = vpop.f32.mrb[0].mxu0
  %v1959 = vpop.f32.mrb[0].mxu0
  %v1960 = vadd.f32 0.0, %v1959
  %v1961 = vpop.f32.mrb[0].mxu0
  %1962 = vmatprep.mubr.bf16.mxu0 0
  %1963 = vmatmul.mubr.bf16.gmra.mrb[0].mxu0 %v262
  %v1964 = vpop.f32.mrb[0].mxu0
  %v1965 = vadd.f32 0.0, %v1964
  %v1966 = vpop.f32.mrb[0].mxu0
  %v1967 = vpop.f32.mrb[0].mxu0
  %v1968 = vadd.f32 0.0, %v1967
  %v1969 = vpop.f32.mrb[0].mxu0
  %1970 = vmatprep.mubr.bf16.mxu0 0
  %1971 = vmatmul.mubr.bf16.gmra.mrb[0].mxu0 %v265
  %v1972 = vpop.f32.mrb[0].mxu0
  %v1973 = vadd.f32 0.0, %v1972
  %v1974 = vpop.f32.mrb[0].mxu0
  %v1975 = vpop.f32.mrb[0].mxu0
  %v1976 = vadd.f32 0.0, %v1975
  %v1977 = vpop.f32.mrb[0].mxu0
  %1978 = vmatprep.mubr.bf16.mxu0 0
  %1979 = vmatmul.mubr.bf16.gmra.mrb[0].mxu0 %v268
  %v1980 = vpop.f32.mrb[0].mxu0
  %v1981 = vadd.f32 0.0, %v1980
  %v1982 = vpop.f32.mrb[0].mxu0
  %v1983 = vpop.f32.mrb[0].mxu0
  %v1984 = vadd.f32 0.0, %v1983
  %v1985 = vpop.f32.mrb[0].mxu0
  %1986 = vmatprep.mubr.bf16.mxu0 0
  %1987 = vmatmul.mubr.bf16.gmra.mrb[0].mxu0 %v271
  %v1988 = vpop.f32.mrb[0].mxu0
  %v1989 = vadd.f32 0.0, %v1988
  %v1990 = vpop.f32.mrb[0].mxu0
  %v1991 = vpop.f32.mrb[0].mxu0
  %v1992 = vadd.f32 0.0, %v1991
  %v1993 = vpop.f32.mrb[0].mxu0
  %1994 = vmatprep.mubr.bf16.mxu0 0
  %1995 = vmatmul.mubr.bf16.gmra.mrb[0].mxu0 %v274
  %v1996 = vpop.f32.mrb[0].mxu0
  %v1997 = vadd.f32 0.0, %v1996
  %v1998 = vpop.f32.mrb[0].mxu0
  %v1999 = vpop.f32.mrb[0].mxu0
  %v2000 = vadd.f32 0.0, %v1999
  %v2001 = vpop.f32.mrb[0].mxu0
  %2002 = vmatprep.mubr.bf16.mxu0 0
  %2003 = vmatmul.mubr.bf16.gmra.mrb[0].mxu0 %v277
  %v2004 = vpop.f32.mrb[0].mxu0
  %v2005 = vadd.f32 0.0, %v2004
  %v2006 = vpop.f32.mrb[0].mxu0
  %v2007 = vpop.f32.mrb[0].mxu0
  %v2008 = vadd.f32 0.0, %v2007
  %v2009 = vpop.f32.mrb[0].mxu0
  %2010 = vmatprep.mubr.bf16.mxu0 0
  %2011 = vmatmul.mubr.bf16.gmra.mrb[0].mxu0 %v280
  %v2012 = vpop.f32.mrb[0].mxu0
  %v2013 = vadd.f32 0.0, %v2012
  %v2014 = vpop.f32.mrb[0].mxu0
  %v2015 = vpop.f32.mrb[0].mxu0
  %v2016 = vadd.f32 0.0, %v2015
  %v2017 = vpop.f32.mrb[0].mxu0
  %2018 = vmatprep.mubr.bf16.mxu0 0
  %2019 = vmatmul.mubr.bf16.gmra.mrb[0].mxu0 %v283
  %v2020 = vpop.f32.mrb[0].mxu0
  %v2021 = vadd.f32 0.0, %v2020
  %v2022 = vpop.f32.mrb[0].mxu0
  %v2023 = vpop.f32.mrb[0].mxu0
  %v2024 = vadd.f32 0.0, %v2023
  %v2025 = vpop.f32.mrb[0].mxu0
  %2026 = vmatprep.mubr.bf16.mxu0 0
  %2027 = vmatmul.mubr.bf16.gmra.mrb[0].mxu0 %v286
  %v2028 = vpop.f32.mrb[0].mxu0
  %v2029 = vadd.f32 0.0, %v2028
  %v2030 = vpop.f32.mrb[0].mxu0
  %v2031 = vpop.f32.mrb[0].mxu0
  %v2032 = vadd.f32 0.0, %v2031
  %v2033 = vpop.f32.mrb[0].mxu0
  %2034 = vmatprep.mubr.bf16.mxu0 0
  %2035 = vmatmul.mubr.bf16.gmra.mrb[0].mxu0 %v289
  %v2036 = vpop.f32.mrb[0].mxu0
  %v2037 = vadd.f32 0.0, %v2036
  %v2038 = vpop.f32.mrb[0].mxu0
  %v2039 = vpop.f32.mrb[0].mxu0
  %v2040 = vadd.f32 0.0, %v2039
  %v2041 = vpop.f32.mrb[0].mxu0
  %2042 = vmatprep.mubr.bf16.mxu0 0
  %2043 = vmatmul.mubr.bf16.gmra.mrb[0].mxu0 %v292
  %v2044 = vpop.f32.mrb[0].mxu0
  %v2045 = vadd.f32 0.0, %v2044
  %v2046 = vpop.f32.mrb[0].mxu0
  %v2047 = vpop.f32.mrb[0].mxu0
  %v2048 = vadd.f32 0.0, %v2047
  %v2049 = vpop.f32.mrb[0].mxu0
  %2050 = vmatprep.mubr.bf16.mxu0 0
  %2051 = vmatmul.mubr.bf16.gmra.mrb[0].mxu0 %v295
  %v2052 = vpop.f32.mrb[0].mxu0
  %v2053 = vadd.f32 0.0, %v2052
  %v2054 = vpop.f32.mrb[0].mxu0
  %v2055 = vpop.f32.mrb[0].mxu0
  %v2056 = vadd.f32 0.0, %v2055
  %v2057 = vpop.f32.mrb[0].mxu0
  %2058 = vmatprep.mubr.bf16.mxu0 0
  %2059 = vmatmul.mubr.bf16.gmra.mrb[0].mxu0 %v298
  %v2060 = vpop.f32.mrb[0].mxu0
  %v2061 = vadd.f32 0.0, %v2060
  %v2062 = vpop.f32.mrb[0].mxu0
  %v2063 = vpop.f32.mrb[0].mxu0
  %v2064 = vadd.f32 0.0, %v2063
  %v2065 = vpop.f32.mrb[0].mxu0
  %2066 = vmatprep.mubr.bf16.mxu0 0
  %2067 = vmatmul.mubr.bf16.gmra.mrb[0].mxu0 %v301
  %v2068 = vpop.f32.mrb[0].mxu0
  %v2069 = vadd.f32 0.0, %v2068
  %v2070 = vpop.f32.mrb[0].mxu0
  %v2071 = vpop.f32.mrb[0].mxu0
  %v2072 = vadd.f32 0.0, %v2071
  %v2073 = vpop.f32.mrb[0].mxu0
  %2074 = vmatprep.mubr.bf16.mxu0 0
  %2075 = vmatmul.mubr.bf16.gmra.mrb[0].mxu0 %v304
  %v2076 = vpop.f32.mrb[0].mxu0
  %v2077 = vadd.f32 0.0, %v2076
  %v2078 = vpop.f32.mrb[0].mxu0
  %v2079 = vpop.f32.mrb[0].mxu0
  %v2080 = vadd.f32 0.0, %v2079
  %v2081 = vpop.f32.mrb[0].mxu0
  %2082 = vmatprep.mubr.bf16.mxu0 0
  %2083 = vmatmul.mubr.bf16.gmra.mrb[0].mxu0 %v307
  %v2084 = vpop.f32.mrb[0].mxu0
  %v2085 = vadd.f32 0.0, %v2084
  %v2086 = vpop.f32.mrb[0].mxu0
  %v2087 = vpop.f32.mrb[0].mxu0
  %v2088 = vadd.f32 0.0, %v2087
  %v2089 = vpop.f32.mrb[0].mxu0
  %2090 = vmatprep.mubr.bf16.mxu0 0
  %2091 = vmatmul.mubr.bf16.gmra.mrb[0].mxu0 %v310
  %v2092 = vpop.f32.mrb[0].mxu0
  %v2093 = vadd.f32 0.0, %v2092
  %v2094 = vpop.f32.mrb[0].mxu0
  %v2095 = vpop.f32.mrb[0].mxu0
  %v2096 = vadd.f32 0.0, %v2095
  %v2097 = vpop.f32.mrb[0].mxu0
  %2098 = vmatprep.mubr.bf16.mxu0 0
  %2099 = vmatmul.mubr.bf16.gmra.mrb[0].mxu0 %v1293
  %v2100 = vpop.f32.mrb[0].mxu0
  %v2101 = vadd.f32 0.0, %v2100
  %v2102 = vpop.f32.mrb[0].mxu0
  %v2103 = vpop.f32.mrb[0].mxu0
  %v2104 = vadd.f32 0.0, %v2103
  %v2105 = vpop.f32.mrb[0].mxu0
  %2106 = vmatprep.mubr.bf16.mxu0 0
  %2107 = vmatmul.mubr.bf16.gmra.mrb[0].mxu0 %v1885
  %v2108 = vpop.f32.mrb[0].mxu0
  %v2109 = vadd.f32 0.0, %v2108
  %v2110 = vpop.f32.mrb[0].mxu0
  %v2111 = vpop.f32.mrb[0].mxu0
  %v2112 = vadd.f32 0.0, %v2111
  %v2113 = vpop.f32.mrb[0].mxu0
  %2114 = vdwg.mxu0
  %v2115 = vadd.f32 %v1523, %v1925
  %v2116 = vadd.f32 %v1524, %v1928
  %v2117 = vadd.f32 %v1525, %v1933
  %v2118 = vadd.f32 %v1526, %v1936
  %v2119 = vadd.f32 %v1527, %v1941
  %v2120 = vadd.f32 %v1528, %v1944
  %v2121 = vadd.f32 %v1529, %v1949
  %v2122 = vadd.f32 %v1530, %v1952
  %v2123 = vadd.f32 %v1531, %v1957
  %v2124 = vadd.f32 %v1532, %v1960
  %v2125 = vadd.f32 %v1533, %v1965
  %v2126 = vadd.f32 %v1534, %v1968
  %v2127 = vadd.f32 %v1535, %v1973
  %v2128 = vadd.f32 %v1536, %v1976
  %v2129 = vadd.f32 %v1537, %v1981
  %v2130 = vadd.f32 %v1538, %v1984
  %v2131 = vadd.f32 %v1539, %v1989
  %v2132 = vadd.f32 %v1540, %v1992
  %v2133 = vadd.f32 %v1541, %v1997
  %v2134 = vadd.f32 %v1542, %v2000
  %v2135 = vadd.f32 %v1543, %v2005
  %v2136 = vadd.f32 %v1544, %v2008
  %v2137 = vadd.f32 %v1545, %v2013
  %v2138 = vadd.f32 %v1546, %v2016
  %v2139 = vadd.f32 %v1547, %v2021
  %v2140 = vadd.f32 %v1548, %v2024
  %v2141 = vadd.f32 %v1549, %v2029
  %v2142 = vadd.f32 %v1550, %v2032
  %v2143 = vadd.f32 %v1551, %v2037
  %v2144 = vadd.f32 %v1552, %v2040
  %v2145 = vadd.f32 %v1553, %v2045
  %v2146 = vadd.f32 %v1554, %v2048
  %v2147 = vadd.f32 %v1555, %v2053
  %v2148 = vadd.f32 %v1556, %v2056
  %v2149 = vadd.f32 %v1557, %v2061
  %v2150 = vadd.f32 %v1558, %v2064
  %v2151 = vadd.f32 %v1559, %v2069
  %v2152 = vadd.f32 %v1560, %v2072
  %v2153 = vadd.f32 %v1561, %v2077
  %v2154 = vadd.f32 %v1562, %v2080
  %v2155 = vadd.f32 %v1563, %v2085
  %v2156 = vadd.f32 %v1564, %v2088
  %v2157 = vadd.f32 %v1565, %v2093
  %v2158 = vadd.f32 %v1566, %v2096
  %v2159 = vadd.f32 %v1567, %v2101
  %v2160 = vadd.f32 %v1568, %v2104
  %v2161 = vadd.f32 %v1569, %v2109
  %v2162 = vadd.f32 %v1570, %v2112
  %s2163 = scalar_lea.vmem %s2, 48
  %v2164 = vld [vmem:[%s2163] sm:$0xf]
  %v2165 = vld [vmem:[%s2163 + $0x4] sm:$0xf]
  %v2166 = vld [vmem:[%s2163 + $0x8] sm:$0xf]
  %v2167 = vld [vmem:[%s2163 + $0xc] sm:$0x3]
  %v2172 = vunpack.c.l.b16 %v2164
  %v2173 = vunpack.c.l.b16 %v2165
  %v2174 = vunpack.c.l.b16 %v2166
  %v2175 = vunpack.c.l.b16 %v2167
  %v2176 = vpack.c.b16 %v2173, %v2172
  %v2177 = vpack.c.b16 %v2175, %v2174
  %v2180 = vsel %vm312, %v2177, 0
  %2182 = vmatprep.subr.bf16.mxu0 0
  %2183 = vmatpush1.bf16.msra.mxu0 %v2176
  %2184 = vmatprep.subr.bf16.mxu0 0
  %2185 = vmatpush1.bf16.msra.mxu0 %v2180
  %2186 = vmatprep.subr.bf16.mxu0 0
  %2187 = vmatpush1.bf16.msra.mxu0 0
  %2188 = vmatprep.subr.bf16.mxu0 0
  %2189 = vmatpush1.bf16.msra.mxu0 0
  %2190 = vmatprep.subr.bf16.mxu0 0
  %2191 = vmatpush1.bf16.msra.mxu0 0
  %2192 = vmatprep.subr.bf16.mxu0 0
  %2193 = vmatpush1.bf16.msra.mxu0 0
  %2194 = vmatprep.subr.bf16.mxu0 0
  %2195 = vmatpush1.bf16.msra.mxu0 0
  %2196 = vmatprep.subr.bf16.mxu0 0
  %2197 = vmatpush1.bf16.msra.mxu0 0
  %2198 = vmatprep.subr.bf16.mxu0 0
  %2199 = vmatpush1.bf16.msra.mxu0 0
  %2200 = vmatprep.subr.bf16.mxu0 0
  %2201 = vmatpush1.bf16.msra.mxu0 0
  %2202 = vmatprep.subr.bf16.mxu0 0
  %2203 = vmatpush1.bf16.msra.mxu0 0
  %2204 = vmatprep.subr.bf16.mxu0 0
  %2205 = vmatpush1.bf16.msra.mxu0 0
  %2206 = vmatprep.subr.bf16.mxu0 0
  %2207 = vmatpush1.bf16.msra.mxu0 0
  %2208 = vmatprep.subr.bf16.mxu0 0
  %2209 = vmatpush1.bf16.msra.mxu0 0
  %2210 = vmatprep.subr.bf16.mxu0 0
  %2211 = vmatpush1.bf16.msra.mxu0 0
  %2212 = vmatprep.subr.bf16.mxu0 0
  %2213 = vmatpush1.bf16.msra.mxu0 0
  %2214 = vmatprep.mubr.bf16.mxu0 0
  %2215 = vmatmul.mubr.bf16.gmra.mrb[0].mxu0 %v247
  %v2216 = vpop.f32.mrb[0].mxu0
  %v2217 = vadd.f32 0.0, %v2216
  %v2218 = vpop.f32.mrb[0].mxu0
  %v2219 = vpop.f32.mrb[0].mxu0
  %v2220 = vadd.f32 0.0, %v2219
  %v2221 = vpop.f32.mrb[0].mxu0
  %2222 = vmatprep.mubr.bf16.mxu0 0
  %2223 = vmatmul.mubr.bf16.gmra.mrb[0].mxu0 %v250
  %v2224 = vpop.f32.mrb[0].mxu0
  %v2225 = vadd.f32 0.0, %v2224
  %v2226 = vpop.f32.mrb[0].mxu0
  %v2227 = vpop.f32.mrb[0].mxu0
  %v2228 = vadd.f32 0.0, %v2227
  %v2229 = vpop.f32.mrb[0].mxu0
  %2230 = vmatprep.mubr.bf16.mxu0 0
  %2231 = vmatmul.mubr.bf16.gmra.mrb[0].mxu0 %v253
  %v2232 = vpop.f32.mrb[0].mxu0
  %v2233 = vadd.f32 0.0, %v2232
  %v2234 = vpop.f32.mrb[0].mxu0
  %v2235 = vpop.f32.mrb[0].mxu0
  %v2236 = vadd.f32 0.0, %v2235
  %v2237 = vpop.f32.mrb[0].mxu0
  %2238 = vmatprep.mubr.bf16.mxu0 0
  %2239 = vmatmul.mubr.bf16.gmra.mrb[0].mxu0 %v256
  %v2240 = vpop.f32.mrb[0].mxu0
  %v2241 = vadd.f32 0.0, %v2240
  %v2242 = vpop.f32.mrb[0].mxu0
  %v2243 = vpop.f32.mrb[0].mxu0
  %v2244 = vadd.f32 0.0, %v2243
  %v2245 = vpop.f32.mrb[0].mxu0
  %2246 = vmatprep.mubr.bf16.mxu0 0
  %2247 = vmatmul.mubr.bf16.gmra.mrb[0].mxu0 %v259
  %v2248 = vpop.f32.mrb[0].mxu0
  %v2249 = vadd.f32 0.0, %v2248
  %v2250 = vpop.f32.mrb[0].mxu0
  %v2251 = vpop.f32.mrb[0].mxu0
  %v2252 = vadd.f32 0.0, %v2251
  %v2253 = vpop.f32.mrb[0].mxu0
  %2254 = vmatprep.mubr.bf16.mxu0 0
  %2255 = vmatmul.mubr.bf16.gmra.mrb[0].mxu0 %v262
  %v2256 = vpop.f32.mrb[0].mxu0
  %v2257 = vadd.f32 0.0, %v2256
  %v2258 = vpop.f32.mrb[0].mxu0
  %v2259 = vpop.f32.mrb[0].mxu0
  %v2260 = vadd.f32 0.0, %v2259
  %v2261 = vpop.f32.mrb[0].mxu0
  %2262 = vmatprep.mubr.bf16.mxu0 0
  %2263 = vmatmul.mubr.bf16.gmra.mrb[0].mxu0 %v265
  %v2264 = vpop.f32.mrb[0].mxu0
  %v2265 = vadd.f32 0.0, %v2264
  %v2266 = vpop.f32.mrb[0].mxu0
  %v2267 = vpop.f32.mrb[0].mxu0
  %v2268 = vadd.f32 0.0, %v2267
  %v2269 = vpop.f32.mrb[0].mxu0
  %2270 = vmatprep.mubr.bf16.mxu0 0
  %2271 = vmatmul.mubr.bf16.gmra.mrb[0].mxu0 %v268
  %v2272 = vpop.f32.mrb[0].mxu0
  %v2273 = vadd.f32 0.0, %v2272
  %v2274 = vpop.f32.mrb[0].mxu0
  %v2275 = vpop.f32.mrb[0].mxu0
  %v2276 = vadd.f32 0.0, %v2275
  %v2277 = vpop.f32.mrb[0].mxu0
  %2278 = vmatprep.mubr.bf16.mxu0 0
  %2279 = vmatmul.mubr.bf16.gmra.mrb[0].mxu0 %v271
  %v2280 = vpop.f32.mrb[0].mxu0
  %v2281 = vadd.f32 0.0, %v2280
  %v2282 = vpop.f32.mrb[0].mxu0
  %v2283 = vpop.f32.mrb[0].mxu0
  %v2284 = vadd.f32 0.0, %v2283
  %v2285 = vpop.f32.mrb[0].mxu0
  %2286 = vmatprep.mubr.bf16.mxu0 0
  %2287 = vmatmul.mubr.bf16.gmra.mrb[0].mxu0 %v274
  %v2288 = vpop.f32.mrb[0].mxu0
  %v2289 = vadd.f32 0.0, %v2288
  %v2290 = vpop.f32.mrb[0].mxu0
  %v2291 = vpop.f32.mrb[0].mxu0
  %v2292 = vadd.f32 0.0, %v2291
  %v2293 = vpop.f32.mrb[0].mxu0
  %2294 = vmatprep.mubr.bf16.mxu0 0
  %2295 = vmatmul.mubr.bf16.gmra.mrb[0].mxu0 %v277
  %v2296 = vpop.f32.mrb[0].mxu0
  %v2297 = vadd.f32 0.0, %v2296
  %v2298 = vpop.f32.mrb[0].mxu0
  %v2299 = vpop.f32.mrb[0].mxu0
  %v2300 = vadd.f32 0.0, %v2299
  %v2301 = vpop.f32.mrb[0].mxu0
  %2302 = vmatprep.mubr.bf16.mxu0 0
  %2303 = vmatmul.mubr.bf16.gmra.mrb[0].mxu0 %v280
  %v2304 = vpop.f32.mrb[0].mxu0
  %v2305 = vadd.f32 0.0, %v2304
  %v2306 = vpop.f32.mrb[0].mxu0
  %v2307 = vpop.f32.mrb[0].mxu0
  %v2308 = vadd.f32 0.0, %v2307
  %v2309 = vpop.f32.mrb[0].mxu0
  %2310 = vmatprep.mubr.bf16.mxu0 0
  %2311 = vmatmul.mubr.bf16.gmra.mrb[0].mxu0 %v283
  %v2312 = vpop.f32.mrb[0].mxu0
  %v2313 = vadd.f32 0.0, %v2312
  %v2314 = vpop.f32.mrb[0].mxu0
  %v2315 = vpop.f32.mrb[0].mxu0
  %v2316 = vadd.f32 0.0, %v2315
  %v2317 = vpop.f32.mrb[0].mxu0
  %2318 = vmatprep.mubr.bf16.mxu0 0
  %2319 = vmatmul.mubr.bf16.gmra.mrb[0].mxu0 %v286
  %v2320 = vpop.f32.mrb[0].mxu0
  %v2321 = vadd.f32 0.0, %v2320
  %v2322 = vpop.f32.mrb[0].mxu0
  %v2323 = vpop.f32.mrb[0].mxu0
  %v2324 = vadd.f32 0.0, %v2323
  %v2325 = vpop.f32.mrb[0].mxu0
  %2326 = vmatprep.mubr.bf16.mxu0 0
  %2327 = vmatmul.mubr.bf16.gmra.mrb[0].mxu0 %v289
  %v2328 = vpop.f32.mrb[0].mxu0
  %v2329 = vadd.f32 0.0, %v2328
  %v2330 = vpop.f32.mrb[0].mxu0
  %v2331 = vpop.f32.mrb[0].mxu0
  %v2332 = vadd.f32 0.0, %v2331
  %v2333 = vpop.f32.mrb[0].mxu0
  %2334 = vmatprep.mubr.bf16.mxu0 0
  %2335 = vmatmul.mubr.bf16.gmra.mrb[0].mxu0 %v292
  %v2336 = vpop.f32.mrb[0].mxu0
  %v2337 = vadd.f32 0.0, %v2336
  %v2338 = vpop.f32.mrb[0].mxu0
  %v2339 = vpop.f32.mrb[0].mxu0
  %v2340 = vadd.f32 0.0, %v2339
  %v2341 = vpop.f32.mrb[0].mxu0
  %2342 = vmatprep.mubr.bf16.mxu0 0
  %2343 = vmatmul.mubr.bf16.gmra.mrb[0].mxu0 %v295
  %v2344 = vpop.f32.mrb[0].mxu0
  %v2345 = vadd.f32 0.0, %v2344
  %v2346 = vpop.f32.mrb[0].mxu0
  %v2347 = vpop.f32.mrb[0].mxu0
  %v2348 = vadd.f32 0.0, %v2347
  %v2349 = vpop.f32.mrb[0].mxu0
  %2350 = vmatprep.mubr.bf16.mxu0 0
  %2351 = vmatmul.mubr.bf16.gmra.mrb[0].mxu0 %v298
  %v2352 = vpop.f32.mrb[0].mxu0
  %v2353 = vadd.f32 0.0, %v2352
  %v2354 = vpop.f32.mrb[0].mxu0
  %v2355 = vpop.f32.mrb[0].mxu0
  %v2356 = vadd.f32 0.0, %v2355
  %v2357 = vpop.f32.mrb[0].mxu0
  %2358 = vmatprep.mubr.bf16.mxu0 0
  %2359 = vmatmul.mubr.bf16.gmra.mrb[0].mxu0 %v301
  %v2360 = vpop.f32.mrb[0].mxu0
  %v2361 = vadd.f32 0.0, %v2360
  %v2362 = vpop.f32.mrb[0].mxu0
  %v2363 = vpop.f32.mrb[0].mxu0
  %v2364 = vadd.f32 0.0, %v2363
  %v2365 = vpop.f32.mrb[0].mxu0
  %2366 = vmatprep.mubr.bf16.mxu0 0
  %2367 = vmatmul.mubr.bf16.gmra.mrb[0].mxu0 %v304
  %v2368 = vpop.f32.mrb[0].mxu0
  %v2369 = vadd.f32 0.0, %v2368
  %v2370 = vpop.f32.mrb[0].mxu0
  %v2371 = vpop.f32.mrb[0].mxu0
  %v2372 = vadd.f32 0.0, %v2371
  %v2373 = vpop.f32.mrb[0].mxu0
  %2374 = vmatprep.mubr.bf16.mxu0 0
  %2375 = vmatmul.mubr.bf16.gmra.mrb[0].mxu0 %v307
  %v2376 = vpop.f32.mrb[0].mxu0
  %v2377 = vadd.f32 0.0, %v2376
  %v2378 = vpop.f32.mrb[0].mxu0
  %v2379 = vpop.f32.mrb[0].mxu0
  %v2380 = vadd.f32 0.0, %v2379
  %v2381 = vpop.f32.mrb[0].mxu0
  %2382 = vmatprep.mubr.bf16.mxu0 0
  %2383 = vmatmul.mubr.bf16.gmra.mrb[0].mxu0 %v310
  %v2384 = vpop.f32.mrb[0].mxu0
  %v2385 = vadd.f32 0.0, %v2384
  %v2386 = vpop.f32.mrb[0].mxu0
  %v2387 = vpop.f32.mrb[0].mxu0
  %v2388 = vadd.f32 0.0, %v2387
  %v2389 = vpop.f32.mrb[0].mxu0
  %2390 = vmatprep.mubr.bf16.mxu0 0
  %2391 = vmatmul.mubr.bf16.gmra.mrb[0].mxu0 %v1293
  %v2392 = vpop.f32.mrb[0].mxu0
  %v2393 = vadd.f32 0.0, %v2392
  %v2394 = vpop.f32.mrb[0].mxu0
  %v2395 = vpop.f32.mrb[0].mxu0
  %v2396 = vadd.f32 0.0, %v2395
  %v2397 = vpop.f32.mrb[0].mxu0
  %2398 = vmatprep.mubr.bf16.mxu0 0
  %2399 = vmatmul.mubr.bf16.gmra.mrb[0].mxu0 %v1885
  %v2400 = vpop.f32.mrb[0].mxu0
  %v2401 = vadd.f32 0.0, %v2400
  %v2402 = vpop.f32.mrb[0].mxu0
  %v2403 = vpop.f32.mrb[0].mxu0
  %v2404 = vadd.f32 0.0, %v2403
  %v2405 = vpop.f32.mrb[0].mxu0
  %2406 = vdwg.mxu0
  %v2407 = vadd.f32 %v1815, %v2217
  %v2408 = vadd.f32 %v1816, %v2220
  %v2409 = vadd.f32 %v1817, %v2225
  %v2410 = vadd.f32 %v1818, %v2228
  %v2411 = vadd.f32 %v1819, %v2233
  %v2412 = vadd.f32 %v1820, %v2236
  %v2413 = vadd.f32 %v1821, %v2241
  %v2414 = vadd.f32 %v1822, %v2244
  %v2415 = vadd.f32 %v1823, %v2249
  %v2416 = vadd.f32 %v1824, %v2252
  %v2417 = vadd.f32 %v1825, %v2257
  %v2418 = vadd.f32 %v1826, %v2260
  %v2419 = vadd.f32 %v1827, %v2265
  %v2420 = vadd.f32 %v1828, %v2268
  %v2421 = vadd.f32 %v1829, %v2273
  %v2422 = vadd.f32 %v1830, %v2276
  %v2423 = vadd.f32 %v1831, %v2281
  %v2424 = vadd.f32 %v1832, %v2284
  %v2425 = vadd.f32 %v1833, %v2289
  %v2426 = vadd.f32 %v1834, %v2292
  %v2427 = vadd.f32 %v1835, %v2297
  %v2428 = vadd.f32 %v1836, %v2300
  %v2429 = vadd.f32 %v1837, %v2305
  %v2430 = vadd.f32 %v1838, %v2308
  %v2431 = vadd.f32 %v1839, %v2313
  %v2432 = vadd.f32 %v1840, %v2316
  %v2433 = vadd.f32 %v1841, %v2321
  %v2434 = vadd.f32 %v1842, %v2324
  %v2435 = vadd.f32 %v1843, %v2329
  %v2436 = vadd.f32 %v1844, %v2332
  %v2437 = vadd.f32 %v1845, %v2337
  %v2438 = vadd.f32 %v1846, %v2340
  %v2439 = vadd.f32 %v1847, %v2345
  %v2440 = vadd.f32 %v1848, %v2348
  %v2441 = vadd.f32 %v1849, %v2353
  %v2442 = vadd.f32 %v1850, %v2356
  %v2443 = vadd.f32 %v1851, %v2361
  %v2444 = vadd.f32 %v1852, %v2364
  %v2445 = vadd.f32 %v1853, %v2369
  %v2446 = vadd.f32 %v1854, %v2372
  %v2447 = vadd.f32 %v1855, %v2377
  %v2448 = vadd.f32 %v1856, %v2380
  %v2449 = vadd.f32 %v1857, %v2385
  %v2450 = vadd.f32 %v1858, %v2388
  %v2451 = vadd.f32 %v1859, %v2393
  %v2452 = vadd.f32 %v1860, %v2396
  %v2453 = vadd.f32 %v1861, %v2401
  %v2454 = vadd.f32 %v1862, %v2404
  %s2455 = scalar_lea.vmem %s1, 64
  %v2456 = vld [vmem:[%s2455] sm:$0xf]
  %v2457 = vld [vmem:[%s2455 + $0x4] sm:$0xf]
  %v2458 = vld [vmem:[%s2455 + $0x8] sm:$0xf]
  %v2459 = vld [vmem:[%s2455 + $0xc] sm:$0x3]
  %v2462 = vunpack.c.l.b16 %v93
  %v2463 = vunpack.c.l.b16 %v94
  %v2464 = vpack.c.b16 %v2463, %v2462
  %v2469 = vunpack.c.l.b16 %v2456
  %v2470 = vunpack.c.l.b16 %v2457
  %v2471 = vunpack.c.l.b16 %v2458
  %v2472 = vunpack.c.l.b16 %v2459
  %v2473 = vpack.c.b16 %v2470, %v2469
  %v2474 = vpack.c.b16 %v2472, %v2471
  %v2477 = vsel %vm239, %v2464, 0
  %v2480 = vsel %vm312, %v2474, 0
  %2482 = vmatprep.subr.bf16.mxu0 0
  %2483 = vmatpush1.bf16.msra.mxu0 %v2473
  %2484 = vmatprep.subr.bf16.mxu0 0
  %2485 = vmatpush1.bf16.msra.mxu0 %v2480
  %2486 = vmatprep.subr.bf16.mxu0 0
  %2487 = vmatpush1.bf16.msra.mxu0 0
  %2488 = vmatprep.subr.bf16.mxu0 0
  %2489 = vmatpush1.bf16.msra.mxu0 0
  %2490 = vmatprep.subr.bf16.mxu0 0
  %2491 = vmatpush1.bf16.msra.mxu0 0
  %2492 = vmatprep.subr.bf16.mxu0 0
  %2493 = vmatpush1.bf16.msra.mxu0 0
  %2494 = vmatprep.subr.bf16.mxu0 0
  %2495 = vmatpush1.bf16.msra.mxu0 0
  %2496 = vmatprep.subr.bf16.mxu0 0
  %2497 = vmatpush1.bf16.msra.mxu0 0
  %2498 = vmatprep.subr.bf16.mxu0 0
  %2499 = vmatpush1.bf16.msra.mxu0 0
  %2500 = vmatprep.subr.bf16.mxu0 0
  %2501 = vmatpush1.bf16.msra.mxu0 0
  %2502 = vmatprep.subr.bf16.mxu0 0
  %2503 = vmatpush1.bf16.msra.mxu0 0
  %2504 = vmatprep.subr.bf16.mxu0 0
  %2505 = vmatpush1.bf16.msra.mxu0 0
  %2506 = vmatprep.subr.bf16.mxu0 0
  %2507 = vmatpush1.bf16.msra.mxu0 0
  %2508 = vmatprep.subr.bf16.mxu0 0
  %2509 = vmatpush1.bf16.msra.mxu0 0
  %2510 = vmatprep.subr.bf16.mxu0 0
  %2511 = vmatpush1.bf16.msra.mxu0 0
  %2512 = vmatprep.subr.bf16.mxu0 0
  %2513 = vmatpush1.bf16.msra.mxu0 0
  %2514 = vmatprep.mubr.bf16.mxu0 0
  %2515 = vmatmul.mubr.bf16.gmra.mrb[0].mxu0 %v250
  %v2516 = vpop.f32.mrb[0].mxu0
  %v2517 = vadd.f32 0.0, %v2516
  %v2518 = vpop.f32.mrb[0].mxu0
  %v2519 = vpop.f32.mrb[0].mxu0
  %v2520 = vadd.f32 0.0, %v2519
  %v2521 = vpop.f32.mrb[0].mxu0
  %2522 = vmatprep.mubr.bf16.mxu0 0
  %2523 = vmatmul.mubr.bf16.gmra.mrb[0].mxu0 %v253
  %v2524 = vpop.f32.mrb[0].mxu0
  %v2525 = vadd.f32 0.0, %v2524
  %v2526 = vpop.f32.mrb[0].mxu0
  %v2527 = vpop.f32.mrb[0].mxu0
  %v2528 = vadd.f32 0.0, %v2527
  %v2529 = vpop.f32.mrb[0].mxu0
  %2530 = vmatprep.mubr.bf16.mxu0 0
  %2531 = vmatmul.mubr.bf16.gmra.mrb[0].mxu0 %v256
  %v2532 = vpop.f32.mrb[0].mxu0
  %v2533 = vadd.f32 0.0, %v2532
  %v2534 = vpop.f32.mrb[0].mxu0
  %v2535 = vpop.f32.mrb[0].mxu0
  %v2536 = vadd.f32 0.0, %v2535
  %v2537 = vpop.f32.mrb[0].mxu0
  %2538 = vmatprep.mubr.bf16.mxu0 0
  %2539 = vmatmul.mubr.bf16.gmra.mrb[0].mxu0 %v259
  %v2540 = vpop.f32.mrb[0].mxu0
  %v2541 = vadd.f32 0.0, %v2540
  %v2542 = vpop.f32.mrb[0].mxu0
  %v2543 = vpop.f32.mrb[0].mxu0
  %v2544 = vadd.f32 0.0, %v2543
  %v2545 = vpop.f32.mrb[0].mxu0
  %2546 = vmatprep.mubr.bf16.mxu0 0
  %2547 = vmatmul.mubr.bf16.gmra.mrb[0].mxu0 %v262
  %v2548 = vpop.f32.mrb[0].mxu0
  %v2549 = vadd.f32 0.0, %v2548
  %v2550 = vpop.f32.mrb[0].mxu0
  %v2551 = vpop.f32.mrb[0].mxu0
  %v2552 = vadd.f32 0.0, %v2551
  %v2553 = vpop.f32.mrb[0].mxu0
  %2554 = vmatprep.mubr.bf16.mxu0 0
  %2555 = vmatmul.mubr.bf16.gmra.mrb[0].mxu0 %v265
  %v2556 = vpop.f32.mrb[0].mxu0
  %v2557 = vadd.f32 0.0, %v2556
  %v2558 = vpop.f32.mrb[0].mxu0
  %v2559 = vpop.f32.mrb[0].mxu0
  %v2560 = vadd.f32 0.0, %v2559
  %v2561 = vpop.f32.mrb[0].mxu0
  %2562 = vmatprep.mubr.bf16.mxu0 0
  %2563 = vmatmul.mubr.bf16.gmra.mrb[0].mxu0 %v268
  %v2564 = vpop.f32.mrb[0].mxu0
  %v2565 = vadd.f32 0.0, %v2564
  %v2566 = vpop.f32.mrb[0].mxu0
  %v2567 = vpop.f32.mrb[0].mxu0
  %v2568 = vadd.f32 0.0, %v2567
  %v2569 = vpop.f32.mrb[0].mxu0
  %2570 = vmatprep.mubr.bf16.mxu0 0
  %2571 = vmatmul.mubr.bf16.gmra.mrb[0].mxu0 %v271
  %v2572 = vpop.f32.mrb[0].mxu0
  %v2573 = vadd.f32 0.0, %v2572
  %v2574 = vpop.f32.mrb[0].mxu0
  %v2575 = vpop.f32.mrb[0].mxu0
  %v2576 = vadd.f32 0.0, %v2575
  %v2577 = vpop.f32.mrb[0].mxu0
  %2578 = vmatprep.mubr.bf16.mxu0 0
  %2579 = vmatmul.mubr.bf16.gmra.mrb[0].mxu0 %v274
  %v2580 = vpop.f32.mrb[0].mxu0
  %v2581 = vadd.f32 0.0, %v2580
  %v2582 = vpop.f32.mrb[0].mxu0
  %v2583 = vpop.f32.mrb[0].mxu0
  %v2584 = vadd.f32 0.0, %v2583
  %v2585 = vpop.f32.mrb[0].mxu0
  %2586 = vmatprep.mubr.bf16.mxu0 0
  %2587 = vmatmul.mubr.bf16.gmra.mrb[0].mxu0 %v277
  %v2588 = vpop.f32.mrb[0].mxu0
  %v2589 = vadd.f32 0.0, %v2588
  %v2590 = vpop.f32.mrb[0].mxu0
  %v2591 = vpop.f32.mrb[0].mxu0
  %v2592 = vadd.f32 0.0, %v2591
  %v2593 = vpop.f32.mrb[0].mxu0
  %2594 = vmatprep.mubr.bf16.mxu0 0
  %2595 = vmatmul.mubr.bf16.gmra.mrb[0].mxu0 %v280
  %v2596 = vpop.f32.mrb[0].mxu0
  %v2597 = vadd.f32 0.0, %v2596
  %v2598 = vpop.f32.mrb[0].mxu0
  %v2599 = vpop.f32.mrb[0].mxu0
  %v2600 = vadd.f32 0.0, %v2599
  %v2601 = vpop.f32.mrb[0].mxu0
  %2602 = vmatprep.mubr.bf16.mxu0 0
  %2603 = vmatmul.mubr.bf16.gmra.mrb[0].mxu0 %v283
  %v2604 = vpop.f32.mrb[0].mxu0
  %v2605 = vadd.f32 0.0, %v2604
  %v2606 = vpop.f32.mrb[0].mxu0
  %v2607 = vpop.f32.mrb[0].mxu0
  %v2608 = vadd.f32 0.0, %v2607
  %v2609 = vpop.f32.mrb[0].mxu0
  %2610 = vmatprep.mubr.bf16.mxu0 0
  %2611 = vmatmul.mubr.bf16.gmra.mrb[0].mxu0 %v286
  %v2612 = vpop.f32.mrb[0].mxu0
  %v2613 = vadd.f32 0.0, %v2612
  %v2614 = vpop.f32.mrb[0].mxu0
  %v2615 = vpop.f32.mrb[0].mxu0
  %v2616 = vadd.f32 0.0, %v2615
  %v2617 = vpop.f32.mrb[0].mxu0
  %2618 = vmatprep.mubr.bf16.mxu0 0
  %2619 = vmatmul.mubr.bf16.gmra.mrb[0].mxu0 %v289
  %v2620 = vpop.f32.mrb[0].mxu0
  %v2621 = vadd.f32 0.0, %v2620
  %v2622 = vpop.f32.mrb[0].mxu0
  %v2623 = vpop.f32.mrb[0].mxu0
  %v2624 = vadd.f32 0.0, %v2623
  %v2625 = vpop.f32.mrb[0].mxu0
  %2626 = vmatprep.mubr.bf16.mxu0 0
  %2627 = vmatmul.mubr.bf16.gmra.mrb[0].mxu0 %v292
  %v2628 = vpop.f32.mrb[0].mxu0
  %v2629 = vadd.f32 0.0, %v2628
  %v2630 = vpop.f32.mrb[0].mxu0
  %v2631 = vpop.f32.mrb[0].mxu0
  %v2632 = vadd.f32 0.0, %v2631
  %v2633 = vpop.f32.mrb[0].mxu0
  %2634 = vmatprep.mubr.bf16.mxu0 0
  %2635 = vmatmul.mubr.bf16.gmra.mrb[0].mxu0 %v295
  %v2636 = vpop.f32.mrb[0].mxu0
  %v2637 = vadd.f32 0.0, %v2636
  %v2638 = vpop.f32.mrb[0].mxu0
  %v2639 = vpop.f32.mrb[0].mxu0
  %v2640 = vadd.f32 0.0, %v2639
  %v2641 = vpop.f32.mrb[0].mxu0
  %2642 = vmatprep.mubr.bf16.mxu0 0
  %2643 = vmatmul.mubr.bf16.gmra.mrb[0].mxu0 %v298
  %v2644 = vpop.f32.mrb[0].mxu0
  %v2645 = vadd.f32 0.0, %v2644
  %v2646 = vpop.f32.mrb[0].mxu0
  %v2647 = vpop.f32.mrb[0].mxu0
  %v2648 = vadd.f32 0.0, %v2647
  %v2649 = vpop.f32.mrb[0].mxu0
  %2650 = vmatprep.mubr.bf16.mxu0 0
  %2651 = vmatmul.mubr.bf16.gmra.mrb[0].mxu0 %v301
  %v2652 = vpop.f32.mrb[0].mxu0
  %v2653 = vadd.f32 0.0, %v2652
  %v2654 = vpop.f32.mrb[0].mxu0
  %v2655 = vpop.f32.mrb[0].mxu0
  %v2656 = vadd.f32 0.0, %v2655
  %v2657 = vpop.f32.mrb[0].mxu0
  %2658 = vmatprep.mubr.bf16.mxu0 0
  %2659 = vmatmul.mubr.bf16.gmra.mrb[0].mxu0 %v304
  %v2660 = vpop.f32.mrb[0].mxu0
  %v2661 = vadd.f32 0.0, %v2660
  %v2662 = vpop.f32.mrb[0].mxu0
  %v2663 = vpop.f32.mrb[0].mxu0
  %v2664 = vadd.f32 0.0, %v2663
  %v2665 = vpop.f32.mrb[0].mxu0
  %2666 = vmatprep.mubr.bf16.mxu0 0
  %2667 = vmatmul.mubr.bf16.gmra.mrb[0].mxu0 %v307
  %v2668 = vpop.f32.mrb[0].mxu0
  %v2669 = vadd.f32 0.0, %v2668
  %v2670 = vpop.f32.mrb[0].mxu0
  %v2671 = vpop.f32.mrb[0].mxu0
  %v2672 = vadd.f32 0.0, %v2671
  %v2673 = vpop.f32.mrb[0].mxu0
  %2674 = vmatprep.mubr.bf16.mxu0 0
  %2675 = vmatmul.mubr.bf16.gmra.mrb[0].mxu0 %v310
  %v2676 = vpop.f32.mrb[0].mxu0
  %v2677 = vadd.f32 0.0, %v2676
  %v2678 = vpop.f32.mrb[0].mxu0
  %v2679 = vpop.f32.mrb[0].mxu0
  %v2680 = vadd.f32 0.0, %v2679
  %v2681 = vpop.f32.mrb[0].mxu0
  %2682 = vmatprep.mubr.bf16.mxu0 0
  %2683 = vmatmul.mubr.bf16.gmra.mrb[0].mxu0 %v1293
  %v2684 = vpop.f32.mrb[0].mxu0
  %v2685 = vadd.f32 0.0, %v2684
  %v2686 = vpop.f32.mrb[0].mxu0
  %v2687 = vpop.f32.mrb[0].mxu0
  %v2688 = vadd.f32 0.0, %v2687
  %v2689 = vpop.f32.mrb[0].mxu0
  %2690 = vmatprep.mubr.bf16.mxu0 0
  %2691 = vmatmul.mubr.bf16.gmra.mrb[0].mxu0 %v1885
  %v2692 = vpop.f32.mrb[0].mxu0
  %v2693 = vadd.f32 0.0, %v2692
  %v2694 = vpop.f32.mrb[0].mxu0
  %v2695 = vpop.f32.mrb[0].mxu0
  %v2696 = vadd.f32 0.0, %v2695
  %v2697 = vpop.f32.mrb[0].mxu0
  %2698 = vmatprep.mubr.bf16.mxu0 0
  %2699 = vmatmul.mubr.bf16.gmra.mrb[0].mxu0 %v2477
  %v2700 = vpop.f32.mrb[0].mxu0
  %v2701 = vadd.f32 0.0, %v2700
  %v2702 = vpop.f32.mrb[0].mxu0
  %v2703 = vpop.f32.mrb[0].mxu0
  %v2704 = vadd.f32 0.0, %v2703
  %v2705 = vpop.f32.mrb[0].mxu0
  %2706 = vdwg.mxu0
  %v2707 = vadd.f32 %v2115, %v2517
  %v2708 = vadd.f32 %v2116, %v2520
  %v2709 = vadd.f32 %v2117, %v2525
  %v2710 = vadd.f32 %v2118, %v2528
  %v2711 = vadd.f32 %v2119, %v2533
  %v2712 = vadd.f32 %v2120, %v2536
  %v2713 = vadd.f32 %v2121, %v2541
  %v2714 = vadd.f32 %v2122, %v2544
  %v2715 = vadd.f32 %v2123, %v2549
  %v2716 = vadd.f32 %v2124, %v2552
  %v2717 = vadd.f32 %v2125, %v2557
  %v2718 = vadd.f32 %v2126, %v2560
  %v2719 = vadd.f32 %v2127, %v2565
  %v2720 = vadd.f32 %v2128, %v2568
  %v2721 = vadd.f32 %v2129, %v2573
  %v2722 = vadd.f32 %v2130, %v2576
  %v2723 = vadd.f32 %v2131, %v2581
  %v2724 = vadd.f32 %v2132, %v2584
  %v2725 = vadd.f32 %v2133, %v2589
  %v2726 = vadd.f32 %v2134, %v2592
  %v2727 = vadd.f32 %v2135, %v2597
  %v2728 = vadd.f32 %v2136, %v2600
  %v2729 = vadd.f32 %v2137, %v2605
  %v2730 = vadd.f32 %v2138, %v2608
  %v2731 = vadd.f32 %v2139, %v2613
  %v2732 = vadd.f32 %v2140, %v2616
  %v2733 = vadd.f32 %v2141, %v2621
  %v2734 = vadd.f32 %v2142, %v2624
  %v2735 = vadd.f32 %v2143, %v2629
  %v2736 = vadd.f32 %v2144, %v2632
  %v2737 = vadd.f32 %v2145, %v2637
  %v2738 = vadd.f32 %v2146, %v2640
  %v2739 = vadd.f32 %v2147, %v2645
  %v2740 = vadd.f32 %v2148, %v2648
  %v2741 = vadd.f32 %v2149, %v2653
  %v2742 = vadd.f32 %v2150, %v2656
  %v2743 = vadd.f32 %v2151, %v2661
  %v2744 = vadd.f32 %v2152, %v2664
  %v2745 = vadd.f32 %v2153, %v2669
  %v2746 = vadd.f32 %v2154, %v2672
  %v2747 = vadd.f32 %v2155, %v2677
  %v2748 = vadd.f32 %v2156, %v2680
  %v2749 = vadd.f32 %v2157, %v2685
  %v2750 = vadd.f32 %v2158, %v2688
  %v2751 = vadd.f32 %v2159, %v2693
  %v2752 = vadd.f32 %v2160, %v2696
  %v2753 = vadd.f32 %v2161, %v2701
  %v2754 = vadd.f32 %v2162, %v2704
  %s2755 = scalar_lea.vmem %s2, 64
  %v2756 = vld [vmem:[%s2755] sm:$0xf]
  %v2757 = vld [vmem:[%s2755 + $0x4] sm:$0xf]
  %v2758 = vld [vmem:[%s2755 + $0x8] sm:$0xf]
  %v2759 = vld [vmem:[%s2755 + $0xc] sm:$0x3]
  %v2764 = vunpack.c.l.b16 %v2756
  %v2765 = vunpack.c.l.b16 %v2757
  %v2766 = vunpack.c.l.b16 %v2758
  %v2767 = vunpack.c.l.b16 %v2759
  %v2768 = vpack.c.b16 %v2765, %v2764
  %v2769 = vpack.c.b16 %v2767, %v2766
  %v2772 = vsel %vm312, %v2769, 0
  %2774 = vmatprep.subr.bf16.mxu0 0
  %2775 = vmatpush1.bf16.msra.mxu0 %v2768
  %2776 = vmatprep.subr.bf16.mxu0 0
  %2777 = vmatpush1.bf16.msra.mxu0 %v2772
  %2778 = vmatprep.subr.bf16.mxu0 0
  %2779 = vmatpush1.bf16.msra.mxu0 0
  %2780 = vmatprep.subr.bf16.mxu0 0
  %2781 = vmatpush1.bf16.msra.mxu0 0
  %2782 = vmatprep.subr.bf16.mxu0 0
  %2783 = vmatpush1.bf16.msra.mxu0 0
  %2784 = vmatprep.subr.bf16.mxu0 0
  %2785 = vmatpush1.bf16.msra.mxu0 0
  %2786 = vmatprep.subr.bf16.mxu0 0
  %2787 = vmatpush1.bf16.msra.mxu0 0
  %2788 = vmatprep.subr.bf16.mxu0 0
  %2789 = vmatpush1.bf16.msra.mxu0 0
  %2790 = vmatprep.subr.bf16.mxu0 0
  %2791 = vmatpush1.bf16.msra.mxu0 0
  %2792 = vmatprep.subr.bf16.mxu0 0
  %2793 = vmatpush1.bf16.msra.mxu0 0
  %2794 = vmatprep.subr.bf16.mxu0 0
  %2795 = vmatpush1.bf16.msra.mxu0 0
  %2796 = vmatprep.subr.bf16.mxu0 0
  %2797 = vmatpush1.bf16.msra.mxu0 0
  %2798 = vmatprep.subr.bf16.mxu0 0
  %2799 = vmatpush1.bf16.msra.mxu0 0
  %2800 = vmatprep.subr.bf16.mxu0 0
  %2801 = vmatpush1.bf16.msra.mxu0 0
  %2802 = vmatprep.subr.bf16.mxu0 0
  %2803 = vmatpush1.bf16.msra.mxu0 0
  %2804 = vmatprep.subr.bf16.mxu0 0
  %2805 = vmatpush1.bf16.msra.mxu0 0
  %2806 = vmatprep.mubr.bf16.mxu0 0
  %2807 = vmatmul.mubr.bf16.gmra.mrb[0].mxu0 %v250
  %v2808 = vpop.f32.mrb[0].mxu0
  %v2809 = vadd.f32 0.0, %v2808
  %v2810 = vpop.f32.mrb[0].mxu0
  %v2811 = vpop.f32.mrb[0].mxu0
  %v2812 = vadd.f32 0.0, %v2811
  %v2813 = vpop.f32.mrb[0].mxu0
  %2814 = vmatprep.mubr.bf16.mxu0 0
  %2815 = vmatmul.mubr.bf16.gmra.mrb[0].mxu0 %v253
  %v2816 = vpop.f32.mrb[0].mxu0
  %v2817 = vadd.f32 0.0, %v2816
  %v2818 = vpop.f32.mrb[0].mxu0
  %v2819 = vpop.f32.mrb[0].mxu0
  %v2820 = vadd.f32 0.0, %v2819
  %v2821 = vpop.f32.mrb[0].mxu0
  %2822 = vmatprep.mubr.bf16.mxu0 0
  %2823 = vmatmul.mubr.bf16.gmra.mrb[0].mxu0 %v256
  %v2824 = vpop.f32.mrb[0].mxu0
  %v2825 = vadd.f32 0.0, %v2824
  %v2826 = vpop.f32.mrb[0].mxu0
  %v2827 = vpop.f32.mrb[0].mxu0
  %v2828 = vadd.f32 0.0, %v2827
  %v2829 = vpop.f32.mrb[0].mxu0
  %2830 = vmatprep.mubr.bf16.mxu0 0
  %2831 = vmatmul.mubr.bf16.gmra.mrb[0].mxu0 %v259
  %v2832 = vpop.f32.mrb[0].mxu0
  %v2833 = vadd.f32 0.0, %v2832
  %v2834 = vpop.f32.mrb[0].mxu0
  %v2835 = vpop.f32.mrb[0].mxu0
  %v2836 = vadd.f32 0.0, %v2835
  %v2837 = vpop.f32.mrb[0].mxu0
  %2838 = vmatprep.mubr.bf16.mxu0 0
  %2839 = vmatmul.mubr.bf16.gmra.mrb[0].mxu0 %v262
  %v2840 = vpop.f32.mrb[0].mxu0
  %v2841 = vadd.f32 0.0, %v2840
  %v2842 = vpop.f32.mrb[0].mxu0
  %v2843 = vpop.f32.mrb[0].mxu0
  %v2844 = vadd.f32 0.0, %v2843
  %v2845 = vpop.f32.mrb[0].mxu0
  %2846 = vmatprep.mubr.bf16.mxu0 0
  %2847 = vmatmul.mubr.bf16.gmra.mrb[0].mxu0 %v265
  %v2848 = vpop.f32.mrb[0].mxu0
  %v2849 = vadd.f32 0.0, %v2848
  %v2850 = vpop.f32.mrb[0].mxu0
  %v2851 = vpop.f32.mrb[0].mxu0
  %v2852 = vadd.f32 0.0, %v2851
  %v2853 = vpop.f32.mrb[0].mxu0
  %2854 = vmatprep.mubr.bf16.mxu0 0
  %2855 = vmatmul.mubr.bf16.gmra.mrb[0].mxu0 %v268
  %v2856 = vpop.f32.mrb[0].mxu0
  %v2857 = vadd.f32 0.0, %v2856
  %v2858 = vpop.f32.mrb[0].mxu0
  %v2859 = vpop.f32.mrb[0].mxu0
  %v2860 = vadd.f32 0.0, %v2859
  %v2861 = vpop.f32.mrb[0].mxu0
  %2862 = vmatprep.mubr.bf16.mxu0 0
  %2863 = vmatmul.mubr.bf16.gmra.mrb[0].mxu0 %v271
  %v2864 = vpop.f32.mrb[0].mxu0
  %v2865 = vadd.f32 0.0, %v2864
  %v2866 = vpop.f32.mrb[0].mxu0
  %v2867 = vpop.f32.mrb[0].mxu0
  %v2868 = vadd.f32 0.0, %v2867
  %v2869 = vpop.f32.mrb[0].mxu0
  %2870 = vmatprep.mubr.bf16.mxu0 0
  %2871 = vmatmul.mubr.bf16.gmra.mrb[0].mxu0 %v274
  %v2872 = vpop.f32.mrb[0].mxu0
  %v2873 = vadd.f32 0.0, %v2872
  %v2874 = vpop.f32.mrb[0].mxu0
  %v2875 = vpop.f32.mrb[0].mxu0
  %v2876 = vadd.f32 0.0, %v2875
  %v2877 = vpop.f32.mrb[0].mxu0
  %2878 = vmatprep.mubr.bf16.mxu0 0
  %2879 = vmatmul.mubr.bf16.gmra.mrb[0].mxu0 %v277
  %v2880 = vpop.f32.mrb[0].mxu0
  %v2881 = vadd.f32 0.0, %v2880
  %v2882 = vpop.f32.mrb[0].mxu0
  %v2883 = vpop.f32.mrb[0].mxu0
  %v2884 = vadd.f32 0.0, %v2883
  %v2885 = vpop.f32.mrb[0].mxu0
  %2886 = vmatprep.mubr.bf16.mxu0 0
  %2887 = vmatmul.mubr.bf16.gmra.mrb[0].mxu0 %v280
  %v2888 = vpop.f32.mrb[0].mxu0
  %v2889 = vadd.f32 0.0, %v2888
  %v2890 = vpop.f32.mrb[0].mxu0
  %v2891 = vpop.f32.mrb[0].mxu0
  %v2892 = vadd.f32 0.0, %v2891
  %v2893 = vpop.f32.mrb[0].mxu0
  %2894 = vmatprep.mubr.bf16.mxu0 0
  %2895 = vmatmul.mubr.bf16.gmra.mrb[0].mxu0 %v283
  %v2896 = vpop.f32.mrb[0].mxu0
  %v2897 = vadd.f32 0.0, %v2896
  %v2898 = vpop.f32.mrb[0].mxu0
  %v2899 = vpop.f32.mrb[0].mxu0
  %v2900 = vadd.f32 0.0, %v2899
  %v2901 = vpop.f32.mrb[0].mxu0
  %2902 = vmatprep.mubr.bf16.mxu0 0
  %2903 = vmatmul.mubr.bf16.gmra.mrb[0].mxu0 %v286
  %v2904 = vpop.f32.mrb[0].mxu0
  %v2905 = vadd.f32 0.0, %v2904
  %v2906 = vpop.f32.mrb[0].mxu0
  %v2907 = vpop.f32.mrb[0].mxu0
  %v2908 = vadd.f32 0.0, %v2907
  %v2909 = vpop.f32.mrb[0].mxu0
  %2910 = vmatprep.mubr.bf16.mxu0 0
  %2911 = vmatmul.mubr.bf16.gmra.mrb[0].mxu0 %v289
  %v2912 = vpop.f32.mrb[0].mxu0
  %v2913 = vadd.f32 0.0, %v2912
  %v2914 = vpop.f32.mrb[0].mxu0
  %v2915 = vpop.f32.mrb[0].mxu0
  %v2916 = vadd.f32 0.0, %v2915
  %v2917 = vpop.f32.mrb[0].mxu0
  %2918 = vmatprep.mubr.bf16.mxu0 0
  %2919 = vmatmul.mubr.bf16.gmra.mrb[0].mxu0 %v292
  %v2920 = vpop.f32.mrb[0].mxu0
  %v2921 = vadd.f32 0.0, %v2920
  %v2922 = vpop.f32.mrb[0].mxu0
  %v2923 = vpop.f32.mrb[0].mxu0
  %v2924 = vadd.f32 0.0, %v2923
  %v2925 = vpop.f32.mrb[0].mxu0
  %2926 = vmatprep.mubr.bf16.mxu0 0
  %2927 = vmatmul.mubr.bf16.gmra.mrb[0].mxu0 %v295
  %v2928 = vpop.f32.mrb[0].mxu0
  %v2929 = vadd.f32 0.0, %v2928
  %v2930 = vpop.f32.mrb[0].mxu0
  %v2931 = vpop.f32.mrb[0].mxu0
  %v2932 = vadd.f32 0.0, %v2931
  %v2933 = vpop.f32.mrb[0].mxu0
  %2934 = vmatprep.mubr.bf16.mxu0 0
  %2935 = vmatmul.mubr.bf16.gmra.mrb[0].mxu0 %v298
  %v2936 = vpop.f32.mrb[0].mxu0
  %v2937 = vadd.f32 0.0, %v2936
  %v2938 = vpop.f32.mrb[0].mxu0
  %v2939 = vpop.f32.mrb[0].mxu0
  %v2940 = vadd.f32 0.0, %v2939
  %v2941 = vpop.f32.mrb[0].mxu0
  %2942 = vmatprep.mubr.bf16.mxu0 0
  %2943 = vmatmul.mubr.bf16.gmra.mrb[0].mxu0 %v301
  %v2944 = vpop.f32.mrb[0].mxu0
  %v2945 = vadd.f32 0.0, %v2944
  %v2946 = vpop.f32.mrb[0].mxu0
  %v2947 = vpop.f32.mrb[0].mxu0
  %v2948 = vadd.f32 0.0, %v2947
  %v2949 = vpop.f32.mrb[0].mxu0
  %2950 = vmatprep.mubr.bf16.mxu0 0
  %2951 = vmatmul.mubr.bf16.gmra.mrb[0].mxu0 %v304
  %v2952 = vpop.f32.mrb[0].mxu0
  %v2953 = vadd.f32 0.0, %v2952
  %v2954 = vpop.f32.mrb[0].mxu0
  %v2955 = vpop.f32.mrb[0].mxu0
  %v2956 = vadd.f32 0.0, %v2955
  %v2957 = vpop.f32.mrb[0].mxu0
  %2958 = vmatprep.mubr.bf16.mxu0 0
  %2959 = vmatmul.mubr.bf16.gmra.mrb[0].mxu0 %v307
  %v2960 = vpop.f32.mrb[0].mxu0
  %v2961 = vadd.f32 0.0, %v2960
  %v2962 = vpop.f32.mrb[0].mxu0
  %v2963 = vpop.f32.mrb[0].mxu0
  %v2964 = vadd.f32 0.0, %v2963
  %v2965 = vpop.f32.mrb[0].mxu0
  %2966 = vmatprep.mubr.bf16.mxu0 0
  %2967 = vmatmul.mubr.bf16.gmra.mrb[0].mxu0 %v310
  %v2968 = vpop.f32.mrb[0].mxu0
  %v2969 = vadd.f32 0.0, %v2968
  %v2970 = vpop.f32.mrb[0].mxu0
  %v2971 = vpop.f32.mrb[0].mxu0
  %v2972 = vadd.f32 0.0, %v2971
  %v2973 = vpop.f32.mrb[0].mxu0
  %2974 = vmatprep.mubr.bf16.mxu0 0
  %2975 = vmatmul.mubr.bf16.gmra.mrb[0].mxu0 %v1293
  %v2976 = vpop.f32.mrb[0].mxu0
  %v2977 = vadd.f32 0.0, %v2976
  %v2978 = vpop.f32.mrb[0].mxu0
  %v2979 = vpop.f32.mrb[0].mxu0
  %v2980 = vadd.f32 0.0, %v2979
  %v2981 = vpop.f32.mrb[0].mxu0
  %2982 = vmatprep.mubr.bf16.mxu0 0
  %2983 = vmatmul.mubr.bf16.gmra.mrb[0].mxu0 %v1885
  %v2984 = vpop.f32.mrb[0].mxu0
  %v2985 = vadd.f32 0.0, %v2984
  %v2986 = vpop.f32.mrb[0].mxu0
  %v2987 = vpop.f32.mrb[0].mxu0
  %v2988 = vadd.f32 0.0, %v2987
  %v2989 = vpop.f32.mrb[0].mxu0
  %2990 = vmatprep.mubr.bf16.mxu0 0
  %2991 = vmatmul.mubr.bf16.gmra.mrb[0].mxu0 %v2477
  %v2992 = vpop.f32.mrb[0].mxu0
  %v2993 = vadd.f32 0.0, %v2992
  %v2994 = vpop.f32.mrb[0].mxu0
  %v2995 = vpop.f32.mrb[0].mxu0
  %v2996 = vadd.f32 0.0, %v2995
  %v2997 = vpop.f32.mrb[0].mxu0
  %2998 = vdwg.mxu0
  %v2999 = vadd.f32 %v2407, %v2809
  %v3000 = vadd.f32 %v2408, %v2812
  %v3001 = vadd.f32 %v2409, %v2817
  %v3002 = vadd.f32 %v2410, %v2820
  %v3003 = vadd.f32 %v2411, %v2825
  %v3004 = vadd.f32 %v2412, %v2828
  %v3005 = vadd.f32 %v2413, %v2833
  %v3006 = vadd.f32 %v2414, %v2836
  %v3007 = vadd.f32 %v2415, %v2841
  %v3008 = vadd.f32 %v2416, %v2844
  %v3009 = vadd.f32 %v2417, %v2849
  %v3010 = vadd.f32 %v2418, %v2852
  %v3011 = vadd.f32 %v2419, %v2857
  %v3012 = vadd.f32 %v2420, %v2860
  %v3013 = vadd.f32 %v2421, %v2865
  %v3014 = vadd.f32 %v2422, %v2868
  %v3015 = vadd.f32 %v2423, %v2873
  %v3016 = vadd.f32 %v2424, %v2876
  %v3017 = vadd.f32 %v2425, %v2881
  %v3018 = vadd.f32 %v2426, %v2884
  %v3019 = vadd.f32 %v2427, %v2889
  %v3020 = vadd.f32 %v2428, %v2892
  %v3021 = vadd.f32 %v2429, %v2897
  %v3022 = vadd.f32 %v2430, %v2900
  %v3023 = vadd.f32 %v2431, %v2905
  %v3024 = vadd.f32 %v2432, %v2908
  %v3025 = vadd.f32 %v2433, %v2913
  %v3026 = vadd.f32 %v2434, %v2916
  %v3027 = vadd.f32 %v2435, %v2921
  %v3028 = vadd.f32 %v2436, %v2924
  %v3029 = vadd.f32 %v2437, %v2929
  %v3030 = vadd.f32 %v2438, %v2932
  %v3031 = vadd.f32 %v2439, %v2937
  %v3032 = vadd.f32 %v2440, %v2940
  %v3033 = vadd.f32 %v2441, %v2945
  %v3034 = vadd.f32 %v2442, %v2948
  %v3035 = vadd.f32 %v2443, %v2953
  %v3036 = vadd.f32 %v2444, %v2956
  %v3037 = vadd.f32 %v2445, %v2961
  %v3038 = vadd.f32 %v2446, %v2964
  %v3039 = vadd.f32 %v2447, %v2969
  %v3040 = vadd.f32 %v2448, %v2972
  %v3041 = vadd.f32 %v2449, %v2977
  %v3042 = vadd.f32 %v2450, %v2980
  %v3043 = vadd.f32 %v2451, %v2985
  %v3044 = vadd.f32 %v2452, %v2988
  %v3045 = vadd.f32 %v2453, %v2993
  %v3046 = vadd.f32 %v2454, %v2996
  %v3047 = vmax.f32 %v2707, %v2999
  %v3048 = vmax.f32 %v2708, %v3000
  %v3049 = vmax.f32 %v2709, %v3001
  %v3050 = vmax.f32 %v2710, %v3002
  %v3051 = vmax.f32 %v2711, %v3003
  %v3052 = vmax.f32 %v2712, %v3004
  %v3053 = vmax.f32 %v2713, %v3005
  %v3054 = vmax.f32 %v2714, %v3006
  %v3055 = vmax.f32 %v2715, %v3007
  %v3056 = vmax.f32 %v2716, %v3008
  %v3057 = vmax.f32 %v2717, %v3009
  %v3058 = vmax.f32 %v2718, %v3010
  %v3059 = vmax.f32 %v2719, %v3011
  %v3060 = vmax.f32 %v2720, %v3012
  %v3061 = vmax.f32 %v2721, %v3013
  %v3062 = vmax.f32 %v2722, %v3014
  %v3063 = vmax.f32 %v2723, %v3015
  %v3064 = vmax.f32 %v2724, %v3016
  %v3065 = vmax.f32 %v2725, %v3017
  %v3066 = vmax.f32 %v2726, %v3018
  %v3067 = vmax.f32 %v2727, %v3019
  %v3068 = vmax.f32 %v2728, %v3020
  %v3069 = vmax.f32 %v2729, %v3021
  %v3070 = vmax.f32 %v2730, %v3022
  %v3071 = vmax.f32 %v2731, %v3023
  %v3072 = vmax.f32 %v2732, %v3024
  %v3073 = vmax.f32 %v2733, %v3025
  %v3074 = vmax.f32 %v2734, %v3026
  %v3075 = vmax.f32 %v2735, %v3027
  %v3076 = vmax.f32 %v2736, %v3028
  %v3077 = vmax.f32 %v2737, %v3029
  %v3078 = vmax.f32 %v2738, %v3030
  %v3079 = vmax.f32 %v2739, %v3031
  %v3080 = vmax.f32 %v2740, %v3032
  %v3081 = vmax.f32 %v2741, %v3033
  %v3082 = vmax.f32 %v2742, %v3034
  %v3083 = vmax.f32 %v2743, %v3035
  %v3084 = vmax.f32 %v2744, %v3036
  %v3085 = vmax.f32 %v2745, %v3037
  %v3086 = vmax.f32 %v2746, %v3038
  %v3087 = vmax.f32 %v2747, %v3039
  %v3088 = vmax.f32 %v2748, %v3040
  %v3089 = vmax.f32 %v2749, %v3041
  %v3090 = vmax.f32 %v2750, %v3042
  %v3091 = vmax.f32 %v2751, %v3043
  %v3092 = vmax.f32 %v2752, %v3044
  %v3093 = vmax.f32 %v2753, %v3045
  %v3094 = vmax.f32 %v2754, %v3046
  %v3095 = vmax.f32 %v3047, %v3049
  %v3096 = vmax.f32 %v3048, %v3050
  %v3097 = vmax.f32 %v3051, %v3053
  %v3098 = vmax.f32 %v3052, %v3054
  %v3099 = vmax.f32 %v3055, %v3057
  %v3100 = vmax.f32 %v3056, %v3058
  %v3101 = vmax.f32 %v3059, %v3061
  %v3102 = vmax.f32 %v3060, %v3062
  %v3103 = vmax.f32 %v3063, %v3065
  %v3104 = vmax.f32 %v3064, %v3066
  %v3105 = vmax.f32 %v3067, %v3069
  %v3106 = vmax.f32 %v3068, %v3070
  %v3107 = vmax.f32 %v3071, %v3073
  %v3108 = vmax.f32 %v3072, %v3074
  %v3109 = vmax.f32 %v3075, %v3077
  %v3110 = vmax.f32 %v3076, %v3078
  %v3111 = vmax.f32 %v3079, %v3081
  %v3112 = vmax.f32 %v3080, %v3082
  %v3113 = vmax.f32 %v3083, %v3085
  %v3114 = vmax.f32 %v3084, %v3086
  %v3115 = vmax.f32 %v3087, %v3089
  %v3116 = vmax.f32 %v3088, %v3090
  %v3117 = vmax.f32 %v3091, %v3093
  %v3118 = vmax.f32 %v3092, %v3094
  %v3119 = vld [vmem:[%s3] sm:$0x1]
  %v3121 = vlaneseq
  %v3122 = vshrl.u32 %v3121, 7
  %v3123 = vsub.s32 0, %v3122
  %v3124 = vrot.slane %v3119, %v3123
  %v3126 = vadd.f32 %v3095, %v3124
  %v3127 = vadd.f32 %v3096, %v3124
  %v3128 = vadd.f32 %v3097, %v3124
  %v3129 = vadd.f32 %v3098, %v3124
  %v3130 = vadd.f32 %v3099, %v3124
  %v3131 = vadd.f32 %v3100, %v3124
  %v3132 = vadd.f32 %v3101, %v3124
  %v3133 = vadd.f32 %v3102, %v3124
  %v3134 = vadd.f32 %v3103, %v3124
  %v3135 = vadd.f32 %v3104, %v3124
  %v3136 = vadd.f32 %v3105, %v3124
  %v3137 = vadd.f32 %v3106, %v3124
  %v3138 = vadd.f32 %v3107, %v3124
  %v3139 = vadd.f32 %v3108, %v3124
  %v3140 = vadd.f32 %v3109, %v3124
  %v3141 = vadd.f32 %v3110, %v3124
  %v3142 = vadd.f32 %v3111, %v3124
  %v3143 = vadd.f32 %v3112, %v3124
  %v3144 = vadd.f32 %v3113, %v3124
  %v3145 = vadd.f32 %v3114, %v3124
  %v3146 = vadd.f32 %v3115, %v3124
  %v3147 = vadd.f32 %v3116, %v3124
  %v3148 = vadd.f32 %v3117, %v3124
  %v3149 = vadd.f32 %v3118, %v3124
  %v3150 = vmax.f32 %v3126, 0.0
  %v3151 = vmax.f32 %v3127, 0.0
  %v3152 = vmax.f32 %v3128, 0.0
  %v3153 = vmax.f32 %v3129, 0.0
  %v3154 = vmax.f32 %v3130, 0.0
  %v3155 = vmax.f32 %v3131, 0.0
  %v3156 = vmax.f32 %v3132, 0.0
  %v3157 = vmax.f32 %v3133, 0.0
  %v3158 = vmax.f32 %v3134, 0.0
  %v3159 = vmax.f32 %v3135, 0.0
  %v3160 = vmax.f32 %v3136, 0.0
  %v3161 = vmax.f32 %v3137, 0.0
  %v3162 = vmax.f32 %v3138, 0.0
  %v3163 = vmax.f32 %v3139, 0.0
  %v3164 = vmax.f32 %v3140, 0.0
  %v3165 = vmax.f32 %v3141, 0.0
  %v3166 = vmax.f32 %v3142, 0.0
  %v3167 = vmax.f32 %v3143, 0.0
  %v3168 = vmax.f32 %v3144, 0.0
  %v3169 = vmax.f32 %v3145, 0.0
  %v3170 = vmax.f32 %v3146, 0.0
  %v3171 = vmax.f32 %v3147, 0.0
  %v3172 = vmax.f32 %v3148, 0.0
  %v3173 = vmax.f32 %v3149, 0.0
  %v3174 = vpack.c.bf16 %v3151, %v3150
  %v3175 = vpack.c.bf16 %v3153, %v3152
  %v3176 = vpack.c.bf16 %v3155, %v3154
  %v3177 = vpack.c.bf16 %v3157, %v3156
  %v3178 = vpack.c.bf16 %v3159, %v3158
  %v3179 = vpack.c.bf16 %v3161, %v3160
  %v3180 = vpack.c.bf16 %v3163, %v3162
  %v3181 = vpack.c.bf16 %v3165, %v3164
  %v3182 = vpack.c.bf16 %v3167, %v3166
  %v3183 = vpack.c.bf16 %v3169, %v3168
  %v3184 = vpack.c.bf16 %v3171, %v3170
  %v3185 = vpack.c.bf16 %v3173, %v3172
  %v3186 = vld [vmem:[%s4] sm:$0xf]
  %v3187 = vld [vmem:[%s4 + $0x4] sm:$0xf]
  %v3188 = vld [vmem:[%s4 + $0x8] sm:$0xf]
  %v3189 = vld [vmem:[%s4 + $0xc] sm:$0xf]
  %v3190 = vld [vmem:[%s4 + $0x10] sm:$0xf]
  %v3191 = vld [vmem:[%s4 + $0x14] sm:$0xf]
  %v3192 = vld [vmem:[%s4 + $0x18] sm:$0xf]
  %v3193 = vld [vmem:[%s4 + $0x1c] sm:$0xf]
  %v3194 = vld [vmem:[%s4 + $0x20] sm:$0xf]
  %v3195 = vld [vmem:[%s4 + $0x24] sm:$0xf]
  %v3196 = vld [vmem:[%s4 + $0x28] sm:$0xf]
  %v3197 = vld [vmem:[%s4 + $0x2c] sm:$0xf]
  %v3198 = vld [vmem:[%s4 + $0x30] sm:$0xf]
  %v3199 = vld [vmem:[%s4 + $0x34] sm:$0xf]
  %v3200 = vld [vmem:[%s4 + $0x38] sm:$0xf]
  %v3201 = vld [vmem:[%s5] sm:$0xf]
  %v3202 = vld [vmem:[%s5 + $0x4] sm:$0xf]
  %v3203 = vld [vmem:[%s5 + $0x8] sm:$0xf]
  %v3204 = vld [vmem:[%s5 + $0xc] sm:$0xf]
  %v3205 = vld [vmem:[%s5 + $0x10] sm:$0xf]
  %v3206 = vld [vmem:[%s5 + $0x14] sm:$0xf]
  %v3207 = vld [vmem:[%s5 + $0x18] sm:$0xf]
  %v3208 = vld [vmem:[%s5 + $0x1c] sm:$0xf]
  %v3209 = vld [vmem:[%s5 + $0x20] sm:$0xf]
  %v3210 = vld [vmem:[%s5 + $0x24] sm:$0xf]
  %v3211 = vld [vmem:[%s5 + $0x28] sm:$0xf]
  %v3212 = vld [vmem:[%s5 + $0x2c] sm:$0xf]
  %v3213 = vld [vmem:[%s5 + $0x30] sm:$0xf]
  %v3214 = vld [vmem:[%s5 + $0x34] sm:$0xf]
  %v3215 = vld [vmem:[%s5 + $0x38] sm:$0xf]
  %s3216 = scalar_lea.vmem %s4, 60
  %v3217 = vld [vmem:[%s3216] sm:$0xf]
  %v3218 = vld [vmem:[%s3216 + $0x4] sm:$0xf]
  %v3219 = vld [vmem:[%s3216 + $0x8] sm:$0xf]
  %v3220 = vld [vmem:[%s3216 + $0xc] sm:$0xf]
  %v3221 = vld [vmem:[%s3216 + $0x10] sm:$0xf]
  %v3222 = vld [vmem:[%s3216 + $0x14] sm:$0xf]
  %v3223 = vld [vmem:[%s3216 + $0x18] sm:$0xf]
  %v3224 = vld [vmem:[%s3216 + $0x1c] sm:$0xf]
  %v3225 = vld [vmem:[%s3216 + $0x20] sm:$0xf]
  %v3226 = vld [vmem:[%s3216 + $0x24] sm:$0xf]
  %v3227 = vld [vmem:[%s3216 + $0x28] sm:$0xf]
  %v3228 = vld [vmem:[%s3216 + $0x2c] sm:$0xf]
  %v3229 = vld [vmem:[%s3216 + $0x30] sm:$0xf]
  %v3230 = vld [vmem:[%s3216 + $0x34] sm:$0xf]
  %v3231 = vld [vmem:[%s3216 + $0x38] sm:$0xf]
  %v3247 = vunpack.c.l.b16 %v3217
  %v3248 = vunpack.c.l.b16 %v3218
  %v3249 = vunpack.c.l.b16 %v3219
  %v3250 = vunpack.c.l.b16 %v3220
  %v3251 = vunpack.c.l.b16 %v3221
  %v3252 = vunpack.c.l.b16 %v3222
  %v3253 = vunpack.c.l.b16 %v3223
  %v3254 = vunpack.c.l.b16 %v3224
  %v3255 = vunpack.c.l.b16 %v3225
  %v3256 = vunpack.c.l.b16 %v3226
  %v3257 = vunpack.c.l.b16 %v3227
  %v3258 = vunpack.c.l.b16 %v3228
  %v3259 = vunpack.c.l.b16 %v3229
  %v3260 = vunpack.c.l.b16 %v3230
  %v3261 = vunpack.c.l.b16 %v3231
  %v3262 = vpack.c.b16 %v3248, %v3247
  %v3263 = vpack.c.b16 %v3250, %v3249
  %v3264 = vpack.c.b16 %v3252, %v3251
  %v3265 = vpack.c.b16 %v3254, %v3253
  %v3266 = vpack.c.b16 %v3256, %v3255
  %v3267 = vpack.c.b16 %v3258, %v3257
  %v3268 = vpack.c.b16 %v3260, %v3259
  %v3269 = vpack.c.b16 %v3261, %v3261
  %vm3277 = vcmask 982016
  %v3279 = vsel %vm3277, %v3175, 0
  %v3282 = vsel %vm3277, %v3176, 0
  %v3285 = vsel %vm3277, %v3177, 0
  %v3288 = vsel %vm3277, %v3178, 0
  %v3291 = vsel %vm3277, %v3179, 0
  %v3294 = vsel %vm3277, %v3180, 0
  %v3297 = vsel %vm3277, %v3181, 0
  %v3300 = vsel %vm3277, %v3182, 0
  %vm3302 = vcmask 1043456
  %v3304 = vsel %vm3302, %v3269, 0
  %3306 = vmatprep.subr.bf16.mxu0 0
  %3307 = vmatpush1.bf16.msra.mxu0 %v3262
  %3308 = vmatprep.subr.bf16.mxu0 0
  %3309 = vmatpush1.bf16.msra.mxu0 %v3263
  %3310 = vmatprep.subr.bf16.mxu0 0
  %3311 = vmatpush1.bf16.msra.mxu0 %v3264
  %3312 = vmatprep.subr.bf16.mxu0 0
  %3313 = vmatpush1.bf16.msra.mxu0 %v3265
  %3314 = vmatprep.subr.bf16.mxu0 0
  %3315 = vmatpush1.bf16.msra.mxu0 %v3266
  %3316 = vmatprep.subr.bf16.mxu0 0
  %3317 = vmatpush1.bf16.msra.mxu0 %v3267
  %3318 = vmatprep.subr.bf16.mxu0 0
  %3319 = vmatpush1.bf16.msra.mxu0 %v3268
  %3320 = vmatprep.subr.bf16.mxu0 0
  %3321 = vmatpush1.bf16.msra.mxu0 %v3304
  %3322 = vmatprep.subr.bf16.mxu0 0
  %3323 = vmatpush1.bf16.msra.mxu0 0
  %3324 = vmatprep.subr.bf16.mxu0 0
  %3325 = vmatpush1.bf16.msra.mxu0 0
  %3326 = vmatprep.subr.bf16.mxu0 0
  %3327 = vmatpush1.bf16.msra.mxu0 0
  %3328 = vmatprep.subr.bf16.mxu0 0
  %3329 = vmatpush1.bf16.msra.mxu0 0
  %3330 = vmatprep.subr.bf16.mxu0 0
  %3331 = vmatpush1.bf16.msra.mxu0 0
  %3332 = vmatprep.subr.bf16.mxu0 0
  %3333 = vmatpush1.bf16.msra.mxu0 0
  %3334 = vmatprep.subr.bf16.mxu0 0
  %3335 = vmatpush1.bf16.msra.mxu0 0
  %3336 = vmatprep.subr.bf16.mxu0 0
  %3337 = vmatpush1.bf16.msra.mxu0 0
  %3338 = vmatprep.mubr.bf16.mxu0 0
  %3339 = vmatmul.mubr.bf16.gmra.mrb[0].mxu0 %v3279
  %v3340 = vpop.f32.mrb[0].mxu0
  %v3341 = vadd.f32 0.0, %v3340
  %v3342 = vpop.f32.mrb[0].mxu0
  %v3343 = vpop.f32.mrb[0].mxu0
  %v3344 = vadd.f32 0.0, %v3343
  %v3345 = vpop.f32.mrb[0].mxu0
  %3346 = vmatprep.mubr.bf16.mxu0 0
  %3347 = vmatmul.mubr.bf16.gmra.mrb[0].mxu0 %v3282
  %v3348 = vpop.f32.mrb[0].mxu0
  %v3349 = vadd.f32 0.0, %v3348
  %v3350 = vpop.f32.mrb[0].mxu0
  %v3351 = vpop.f32.mrb[0].mxu0
  %v3352 = vadd.f32 0.0, %v3351
  %v3353 = vpop.f32.mrb[0].mxu0
  %3354 = vmatprep.mubr.bf16.mxu0 0
  %3355 = vmatmul.mubr.bf16.gmra.mrb[0].mxu0 %v3285
  %v3356 = vpop.f32.mrb[0].mxu0
  %v3357 = vadd.f32 0.0, %v3356
  %v3358 = vpop.f32.mrb[0].mxu0
  %v3359 = vpop.f32.mrb[0].mxu0
  %v3360 = vadd.f32 0.0, %v3359
  %v3361 = vpop.f32.mrb[0].mxu0
  %3362 = vmatprep.mubr.bf16.mxu0 0
  %3363 = vmatmul.mubr.bf16.gmra.mrb[0].mxu0 %v3288
  %v3364 = vpop.f32.mrb[0].mxu0
  %v3365 = vadd.f32 0.0, %v3364
  %v3366 = vpop.f32.mrb[0].mxu0
  %v3367 = vpop.f32.mrb[0].mxu0
  %v3368 = vadd.f32 0.0, %v3367
  %v3369 = vpop.f32.mrb[0].mxu0
  %3370 = vmatprep.mubr.bf16.mxu0 0
  %3371 = vmatmul.mubr.bf16.gmra.mrb[0].mxu0 %v3291
  %v3372 = vpop.f32.mrb[0].mxu0
  %v3373 = vadd.f32 0.0, %v3372
  %v3374 = vpop.f32.mrb[0].mxu0
  %v3375 = vpop.f32.mrb[0].mxu0
  %v3376 = vadd.f32 0.0, %v3375
  %v3377 = vpop.f32.mrb[0].mxu0
  %3378 = vmatprep.mubr.bf16.mxu0 0
  %3379 = vmatmul.mubr.bf16.gmra.mrb[0].mxu0 %v3294
  %v3380 = vpop.f32.mrb[0].mxu0
  %v3381 = vadd.f32 0.0, %v3380
  %v3382 = vpop.f32.mrb[0].mxu0
  %v3383 = vpop.f32.mrb[0].mxu0
  %v3384 = vadd.f32 0.0, %v3383
  %v3385 = vpop.f32.mrb[0].mxu0
  %3386 = vmatprep.mubr.bf16.mxu0 0
  %3387 = vmatmul.mubr.bf16.gmra.mrb[0].mxu0 %v3297
  %v3388 = vpop.f32.mrb[0].mxu0
  %v3389 = vadd.f32 0.0, %v3388
  %v3390 = vpop.f32.mrb[0].mxu0
  %v3391 = vpop.f32.mrb[0].mxu0
  %v3392 = vadd.f32 0.0, %v3391
  %v3393 = vpop.f32.mrb[0].mxu0
  %3394 = vmatprep.mubr.bf16.mxu0 0
  %3395 = vmatmul.mubr.bf16.gmra.mrb[0].mxu0 %v3300
  %v3396 = vpop.f32.mrb[0].mxu0
  %v3397 = vadd.f32 0.0, %v3396
  %v3398 = vpop.f32.mrb[0].mxu0
  %v3399 = vpop.f32.mrb[0].mxu0
  %v3400 = vadd.f32 0.0, %v3399
  %v3401 = vpop.f32.mrb[0].mxu0
  %3402 = vdwg.mxu0
  %v3418 = vunpack.c.l.b16 %v3186
  %v3419 = vunpack.c.l.b16 %v3187
  %v3420 = vunpack.c.l.b16 %v3188
  %v3421 = vunpack.c.l.b16 %v3189
  %v3422 = vunpack.c.l.b16 %v3190
  %v3423 = vunpack.c.l.b16 %v3191
  %v3424 = vunpack.c.l.b16 %v3192
  %v3425 = vunpack.c.l.b16 %v3193
  %v3426 = vunpack.c.l.b16 %v3194
  %v3427 = vunpack.c.l.b16 %v3195
  %v3428 = vunpack.c.l.b16 %v3196
  %v3429 = vunpack.c.l.b16 %v3197
  %v3430 = vunpack.c.l.b16 %v3198
  %v3431 = vunpack.c.l.b16 %v3199
  %v3432 = vunpack.c.l.b16 %v3200
  %v3433 = vpack.c.b16 %v3419, %v3418
  %v3434 = vpack.c.b16 %v3421, %v3420
  %v3435 = vpack.c.b16 %v3423, %v3422
  %v3436 = vpack.c.b16 %v3425, %v3424
  %v3437 = vpack.c.b16 %v3427, %v3426
  %v3438 = vpack.c.b16 %v3429, %v3428
  %v3439 = vpack.c.b16 %v3431, %v3430
  %v3440 = vpack.c.b16 %v3432, %v3432
  %v3449 = vsel %vm3277, %v3174, 0
  %v3452 = vsel %vm3302, %v3440, 0
  %3454 = vmatprep.subr.bf16.mxu0 0
  %3455 = vmatpush1.bf16.msra.mxu0 %v3433
  %3456 = vmatprep.subr.bf16.mxu0 0
  %3457 = vmatpush1.bf16.msra.mxu0 %v3434
  %3458 = vmatprep.subr.bf16.mxu0 0
  %3459 = vmatpush1.bf16.msra.mxu0 %v3435
  %3460 = vmatprep.subr.bf16.mxu0 0
  %3461 = vmatpush1.bf16.msra.mxu0 %v3436
  %3462 = vmatprep.subr.bf16.mxu0 0
  %3463 = vmatpush1.bf16.msra.mxu0 %v3437
  %3464 = vmatprep.subr.bf16.mxu0 0
  %3465 = vmatpush1.bf16.msra.mxu0 %v3438
  %3466 = vmatprep.subr.bf16.mxu0 0
  %3467 = vmatpush1.bf16.msra.mxu0 %v3439
  %3468 = vmatprep.subr.bf16.mxu0 0
  %3469 = vmatpush1.bf16.msra.mxu0 %v3452
  %3470 = vmatprep.subr.bf16.mxu0 0
  %3471 = vmatpush1.bf16.msra.mxu0 0
  %3472 = vmatprep.subr.bf16.mxu0 0
  %3473 = vmatpush1.bf16.msra.mxu0 0
  %3474 = vmatprep.subr.bf16.mxu0 0
  %3475 = vmatpush1.bf16.msra.mxu0 0
  %3476 = vmatprep.subr.bf16.mxu0 0
  %3477 = vmatpush1.bf16.msra.mxu0 0
  %3478 = vmatprep.subr.bf16.mxu0 0
  %3479 = vmatpush1.bf16.msra.mxu0 0
  %3480 = vmatprep.subr.bf16.mxu0 0
  %3481 = vmatpush1.bf16.msra.mxu0 0
  %3482 = vmatprep.subr.bf16.mxu0 0
  %3483 = vmatpush1.bf16.msra.mxu0 0
  %3484 = vmatprep.subr.bf16.mxu0 0
  %3485 = vmatpush1.bf16.msra.mxu0 0
  %3486 = vmatprep.mubr.bf16.mxu0 0
  %3487 = vmatmul.mubr.bf16.gmra.mrb[0].mxu0 %v3449
  %v3488 = vpop.f32.mrb[0].mxu0
  %v3489 = vadd.f32 %v3341, %v3488
  %v3490 = vpop.f32.mrb[0].mxu0
  %v3491 = vpop.f32.mrb[0].mxu0
  %v3492 = vadd.f32 %v3344, %v3491
  %v3493 = vpop.f32.mrb[0].mxu0
  %3494 = vmatprep.mubr.bf16.mxu0 0
  %3495 = vmatmul.mubr.bf16.gmra.mrb[0].mxu0 %v3279
  %v3496 = vpop.f32.mrb[0].mxu0
  %v3497 = vadd.f32 %v3349, %v3496
  %v3498 = vpop.f32.mrb[0].mxu0
  %v3499 = vpop.f32.mrb[0].mxu0
  %v3500 = vadd.f32 %v3352, %v3499
  %v3501 = vpop.f32.mrb[0].mxu0
  %3502 = vmatprep.mubr.bf16.mxu0 0
  %3503 = vmatmul.mubr.bf16.gmra.mrb[0].mxu0 %v3282
  %v3504 = vpop.f32.mrb[0].mxu0
  %v3505 = vadd.f32 %v3357, %v3504
  %v3506 = vpop.f32.mrb[0].mxu0
  %v3507 = vpop.f32.mrb[0].mxu0
  %v3508 = vadd.f32 %v3360, %v3507
  %v3509 = vpop.f32.mrb[0].mxu0
  %3510 = vmatprep.mubr.bf16.mxu0 0
  %3511 = vmatmul.mubr.bf16.gmra.mrb[0].mxu0 %v3285
  %v3512 = vpop.f32.mrb[0].mxu0
  %v3513 = vadd.f32 %v3365, %v3512
  %v3514 = vpop.f32.mrb[0].mxu0
  %v3515 = vpop.f32.mrb[0].mxu0
  %v3516 = vadd.f32 %v3368, %v3515
  %v3517 = vpop.f32.mrb[0].mxu0
  %3518 = vmatprep.mubr.bf16.mxu0 0
  %3519 = vmatmul.mubr.bf16.gmra.mrb[0].mxu0 %v3288
  %v3520 = vpop.f32.mrb[0].mxu0
  %v3521 = vadd.f32 %v3373, %v3520
  %v3522 = vpop.f32.mrb[0].mxu0
  %v3523 = vpop.f32.mrb[0].mxu0
  %v3524 = vadd.f32 %v3376, %v3523
  %v3525 = vpop.f32.mrb[0].mxu0
  %3526 = vmatprep.mubr.bf16.mxu0 0
  %3527 = vmatmul.mubr.bf16.gmra.mrb[0].mxu0 %v3291
  %v3528 = vpop.f32.mrb[0].mxu0
  %v3529 = vadd.f32 %v3381, %v3528
  %v3530 = vpop.f32.mrb[0].mxu0
  %v3531 = vpop.f32.mrb[0].mxu0
  %v3532 = vadd.f32 %v3384, %v3531
  %v3533 = vpop.f32.mrb[0].mxu0
  %3534 = vmatprep.mubr.bf16.mxu0 0
  %3535 = vmatmul.mubr.bf16.gmra.mrb[0].mxu0 %v3294
  %v3536 = vpop.f32.mrb[0].mxu0
  %v3537 = vadd.f32 %v3389, %v3536
  %v3538 = vpop.f32.mrb[0].mxu0
  %v3539 = vpop.f32.mrb[0].mxu0
  %v3540 = vadd.f32 %v3392, %v3539
  %v3541 = vpop.f32.mrb[0].mxu0
  %3542 = vmatprep.mubr.bf16.mxu0 0
  %3543 = vmatmul.mubr.bf16.gmra.mrb[0].mxu0 %v3297
  %v3544 = vpop.f32.mrb[0].mxu0
  %v3545 = vadd.f32 %v3397, %v3544
  %v3546 = vpop.f32.mrb[0].mxu0
  %v3547 = vpop.f32.mrb[0].mxu0
  %v3548 = vadd.f32 %v3400, %v3547
  %v3549 = vpop.f32.mrb[0].mxu0
  %3550 = vdwg.mxu0
  %s3551 = scalar_lea.vmem %s5, 60
  %v3552 = vld [vmem:[%s3551] sm:$0xf]
  %v3553 = vld [vmem:[%s3551 + $0x4] sm:$0xf]
  %v3554 = vld [vmem:[%s3551 + $0x8] sm:$0xf]
  %v3555 = vld [vmem:[%s3551 + $0xc] sm:$0xf]
  %v3556 = vld [vmem:[%s3551 + $0x10] sm:$0xf]
  %v3557 = vld [vmem:[%s3551 + $0x14] sm:$0xf]
  %v3558 = vld [vmem:[%s3551 + $0x18] sm:$0xf]
  %v3559 = vld [vmem:[%s3551 + $0x1c] sm:$0xf]
  %v3560 = vld [vmem:[%s3551 + $0x20] sm:$0xf]
  %v3561 = vld [vmem:[%s3551 + $0x24] sm:$0xf]
  %v3562 = vld [vmem:[%s3551 + $0x28] sm:$0xf]
  %v3563 = vld [vmem:[%s3551 + $0x2c] sm:$0xf]
  %v3564 = vld [vmem:[%s3551 + $0x30] sm:$0xf]
  %v3565 = vld [vmem:[%s3551 + $0x34] sm:$0xf]
  %v3566 = vld [vmem:[%s3551 + $0x38] sm:$0xf]
  %v3582 = vunpack.c.l.b16 %v3552
  %v3583 = vunpack.c.l.b16 %v3553
  %v3584 = vunpack.c.l.b16 %v3554
  %v3585 = vunpack.c.l.b16 %v3555
  %v3586 = vunpack.c.l.b16 %v3556
  %v3587 = vunpack.c.l.b16 %v3557
  %v3588 = vunpack.c.l.b16 %v3558
  %v3589 = vunpack.c.l.b16 %v3559
  %v3590 = vunpack.c.l.b16 %v3560
  %v3591 = vunpack.c.l.b16 %v3561
  %v3592 = vunpack.c.l.b16 %v3562
  %v3593 = vunpack.c.l.b16 %v3563
  %v3594 = vunpack.c.l.b16 %v3564
  %v3595 = vunpack.c.l.b16 %v3565
  %v3596 = vunpack.c.l.b16 %v3566
  %v3597 = vpack.c.b16 %v3583, %v3582
  %v3598 = vpack.c.b16 %v3585, %v3584
  %v3599 = vpack.c.b16 %v3587, %v3586
  %v3600 = vpack.c.b16 %v3589, %v3588
  %v3601 = vpack.c.b16 %v3591, %v3590
  %v3602 = vpack.c.b16 %v3593, %v3592
  %v3603 = vpack.c.b16 %v3595, %v3594
  %v3604 = vpack.c.b16 %v3596, %v3596
  %v3613 = vsel %vm3302, %v3604, 0
  %3615 = vmatprep.subr.bf16.mxu0 0
  %3616 = vmatpush1.bf16.msra.mxu0 %v3597
  %3617 = vmatprep.subr.bf16.mxu0 0
  %3618 = vmatpush1.bf16.msra.mxu0 %v3598
  %3619 = vmatprep.subr.bf16.mxu0 0
  %3620 = vmatpush1.bf16.msra.mxu0 %v3599
  %3621 = vmatprep.subr.bf16.mxu0 0
  %3622 = vmatpush1.bf16.msra.mxu0 %v3600
  %3623 = vmatprep.subr.bf16.mxu0 0
  %3624 = vmatpush1.bf16.msra.mxu0 %v3601
  %3625 = vmatprep.subr.bf16.mxu0 0
  %3626 = vmatpush1.bf16.msra.mxu0 %v3602
  %3627 = vmatprep.subr.bf16.mxu0 0
  %3628 = vmatpush1.bf16.msra.mxu0 %v3603
  %3629 = vmatprep.subr.bf16.mxu0 0
  %3630 = vmatpush1.bf16.msra.mxu0 %v3613
  %3631 = vmatprep.subr.bf16.mxu0 0
  %3632 = vmatpush1.bf16.msra.mxu0 0
  %3633 = vmatprep.subr.bf16.mxu0 0
  %3634 = vmatpush1.bf16.msra.mxu0 0
  %3635 = vmatprep.subr.bf16.mxu0 0
  %3636 = vmatpush1.bf16.msra.mxu0 0
  %3637 = vmatprep.subr.bf16.mxu0 0
  %3638 = vmatpush1.bf16.msra.mxu0 0
  %3639 = vmatprep.subr.bf16.mxu0 0
  %3640 = vmatpush1.bf16.msra.mxu0 0
  %3641 = vmatprep.subr.bf16.mxu0 0
  %3642 = vmatpush1.bf16.msra.mxu0 0
  %3643 = vmatprep.subr.bf16.mxu0 0
  %3644 = vmatpush1.bf16.msra.mxu0 0
  %3645 = vmatprep.subr.bf16.mxu0 0
  %3646 = vmatpush1.bf16.msra.mxu0 0
  %3647 = vmatprep.mubr.bf16.mxu0 0
  %3648 = vmatmul.mubr.bf16.gmra.mrb[0].mxu0 %v3279
  %v3649 = vpop.f32.mrb[0].mxu0
  %v3650 = vadd.f32 0.0, %v3649
  %v3651 = vpop.f32.mrb[0].mxu0
  %v3652 = vpop.f32.mrb[0].mxu0
  %v3653 = vadd.f32 0.0, %v3652
  %v3654 = vpop.f32.mrb[0].mxu0
  %3655 = vmatprep.mubr.bf16.mxu0 0
  %3656 = vmatmul.mubr.bf16.gmra.mrb[0].mxu0 %v3282
  %v3657 = vpop.f32.mrb[0].mxu0
  %v3658 = vadd.f32 0.0, %v3657
  %v3659 = vpop.f32.mrb[0].mxu0
  %v3660 = vpop.f32.mrb[0].mxu0
  %v3661 = vadd.f32 0.0, %v3660
  %v3662 = vpop.f32.mrb[0].mxu0
  %3663 = vmatprep.mubr.bf16.mxu0 0
  %3664 = vmatmul.mubr.bf16.gmra.mrb[0].mxu0 %v3285
  %v3665 = vpop.f32.mrb[0].mxu0
  %v3666 = vadd.f32 0.0, %v3665
  %v3667 = vpop.f32.mrb[0].mxu0
  %v3668 = vpop.f32.mrb[0].mxu0
  %v3669 = vadd.f32 0.0, %v3668
  %v3670 = vpop.f32.mrb[0].mxu0
  %3671 = vmatprep.mubr.bf16.mxu0 0
  %3672 = vmatmul.mubr.bf16.gmra.mrb[0].mxu0 %v3288
  %v3673 = vpop.f32.mrb[0].mxu0
  %v3674 = vadd.f32 0.0, %v3673
  %v3675 = vpop.f32.mrb[0].mxu0
  %v3676 = vpop.f32.mrb[0].mxu0
  %v3677 = vadd.f32 0.0, %v3676
  %v3678 = vpop.f32.mrb[0].mxu0
  %3679 = vmatprep.mubr.bf16.mxu0 0
  %3680 = vmatmul.mubr.bf16.gmra.mrb[0].mxu0 %v3291
  %v3681 = vpop.f32.mrb[0].mxu0
  %v3682 = vadd.f32 0.0, %v3681
  %v3683 = vpop.f32.mrb[0].mxu0
  %v3684 = vpop.f32.mrb[0].mxu0
  %v3685 = vadd.f32 0.0, %v3684
  %v3686 = vpop.f32.mrb[0].mxu0
  %3687 = vmatprep.mubr.bf16.mxu0 0
  %3688 = vmatmul.mubr.bf16.gmra.mrb[0].mxu0 %v3294
  %v3689 = vpop.f32.mrb[0].mxu0
  %v3690 = vadd.f32 0.0, %v3689
  %v3691 = vpop.f32.mrb[0].mxu0
  %v3692 = vpop.f32.mrb[0].mxu0
  %v3693 = vadd.f32 0.0, %v3692
  %v3694 = vpop.f32.mrb[0].mxu0
  %3695 = vmatprep.mubr.bf16.mxu0 0
  %3696 = vmatmul.mubr.bf16.gmra.mrb[0].mxu0 %v3297
  %v3697 = vpop.f32.mrb[0].mxu0
  %v3698 = vadd.f32 0.0, %v3697
  %v3699 = vpop.f32.mrb[0].mxu0
  %v3700 = vpop.f32.mrb[0].mxu0
  %v3701 = vadd.f32 0.0, %v3700
  %v3702 = vpop.f32.mrb[0].mxu0
  %3703 = vmatprep.mubr.bf16.mxu0 0
  %3704 = vmatmul.mubr.bf16.gmra.mrb[0].mxu0 %v3300
  %v3705 = vpop.f32.mrb[0].mxu0
  %v3706 = vadd.f32 0.0, %v3705
  %v3707 = vpop.f32.mrb[0].mxu0
  %v3708 = vpop.f32.mrb[0].mxu0
  %v3709 = vadd.f32 0.0, %v3708
  %v3710 = vpop.f32.mrb[0].mxu0
  %3711 = vdwg.mxu0
  %v3727 = vunpack.c.l.b16 %v3201
  %v3728 = vunpack.c.l.b16 %v3202
  %v3729 = vunpack.c.l.b16 %v3203
  %v3730 = vunpack.c.l.b16 %v3204
  %v3731 = vunpack.c.l.b16 %v3205
  %v3732 = vunpack.c.l.b16 %v3206
  %v3733 = vunpack.c.l.b16 %v3207
  %v3734 = vunpack.c.l.b16 %v3208
  %v3735 = vunpack.c.l.b16 %v3209
  %v3736 = vunpack.c.l.b16 %v3210
  %v3737 = vunpack.c.l.b16 %v3211
  %v3738 = vunpack.c.l.b16 %v3212
  %v3739 = vunpack.c.l.b16 %v3213
  %v3740 = vunpack.c.l.b16 %v3214
  %v3741 = vunpack.c.l.b16 %v3215
  %v3742 = vpack.c.b16 %v3728, %v3727
  %v3743 = vpack.c.b16 %v3730, %v3729
  %v3744 = vpack.c.b16 %v3732, %v3731
  %v3745 = vpack.c.b16 %v3734, %v3733
  %v3746 = vpack.c.b16 %v3736, %v3735
  %v3747 = vpack.c.b16 %v3738, %v3737
  %v3748 = vpack.c.b16 %v3740, %v3739
  %v3749 = vpack.c.b16 %v3741, %v3741
  %v3758 = vsel %vm3302, %v3749, 0
  %3760 = vmatprep.subr.bf16.mxu0 0
  %3761 = vmatpush1.bf16.msra.mxu0 %v3742
  %3762 = vmatprep.subr.bf16.mxu0 0
  %3763 = vmatpush1.bf16.msra.mxu0 %v3743
  %3764 = vmatprep.subr.bf16.mxu0 0
  %3765 = vmatpush1.bf16.msra.mxu0 %v3744
  %3766 = vmatprep.subr.bf16.mxu0 0
  %3767 = vmatpush1.bf16.msra.mxu0 %v3745
  %3768 = vmatprep.subr.bf16.mxu0 0
  %3769 = vmatpush1.bf16.msra.mxu0 %v3746
  %3770 = vmatprep.subr.bf16.mxu0 0
  %3771 = vmatpush1.bf16.msra.mxu0 %v3747
  %3772 = vmatprep.subr.bf16.mxu0 0
  %3773 = vmatpush1.bf16.msra.mxu0 %v3748
  %3774 = vmatprep.subr.bf16.mxu0 0
  %3775 = vmatpush1.bf16.msra.mxu0 %v3758
  %3776 = vmatprep.subr.bf16.mxu0 0
  %3777 = vmatpush1.bf16.msra.mxu0 0
  %3778 = vmatprep.subr.bf16.mxu0 0
  %3779 = vmatpush1.bf16.msra.mxu0 0
  %3780 = vmatprep.subr.bf16.mxu0 0
  %3781 = vmatpush1.bf16.msra.mxu0 0
  %3782 = vmatprep.subr.bf16.mxu0 0
  %3783 = vmatpush1.bf16.msra.mxu0 0
  %3784 = vmatprep.subr.bf16.mxu0 0
  %3785 = vmatpush1.bf16.msra.mxu0 0
  %3786 = vmatprep.subr.bf16.mxu0 0
  %3787 = vmatpush1.bf16.msra.mxu0 0
  %3788 = vmatprep.subr.bf16.mxu0 0
  %3789 = vmatpush1.bf16.msra.mxu0 0
  %3790 = vmatprep.subr.bf16.mxu0 0
  %3791 = vmatpush1.bf16.msra.mxu0 0
  %3792 = vmatprep.mubr.bf16.mxu0 0
  %3793 = vmatmul.mubr.bf16.gmra.mrb[0].mxu0 %v3449
  %v3794 = vpop.f32.mrb[0].mxu0
  %v3795 = vadd.f32 %v3650, %v3794
  %v3796 = vpop.f32.mrb[0].mxu0
  %v3797 = vpop.f32.mrb[0].mxu0
  %v3798 = vadd.f32 %v3653, %v3797
  %v3799 = vpop.f32.mrb[0].mxu0
  %3800 = vmatprep.mubr.bf16.mxu0 0
  %3801 = vmatmul.mubr.bf16.gmra.mrb[0].mxu0 %v3279
  %v3802 = vpop.f32.mrb[0].mxu0
  %v3803 = vadd.f32 %v3658, %v3802
  %v3804 = vpop.f32.mrb[0].mxu0
  %v3805 = vpop.f32.mrb[0].mxu0
  %v3806 = vadd.f32 %v3661, %v3805
  %v3807 = vpop.f32.mrb[0].mxu0
  %3808 = vmatprep.mubr.bf16.mxu0 0
  %3809 = vmatmul.mubr.bf16.gmra.mrb[0].mxu0 %v3282
  %v3810 = vpop.f32.mrb[0].mxu0
  %v3811 = vadd.f32 %v3666, %v3810
  %v3812 = vpop.f32.mrb[0].mxu0
  %v3813 = vpop.f32.mrb[0].mxu0
  %v3814 = vadd.f32 %v3669, %v3813
  %v3815 = vpop.f32.mrb[0].mxu0
  %3816 = vmatprep.mubr.bf16.mxu0 0
  %3817 = vmatmul.mubr.bf16.gmra.mrb[0].mxu0 %v3285
  %v3818 = vpop.f32.mrb[0].mxu0
  %v3819 = vadd.f32 %v3674, %v3818
  %v3820 = vpop.f32.mrb[0].mxu0
  %v3821 = vpop.f32.mrb[0].mxu0
  %v3822 = vadd.f32 %v3677, %v3821
  %v3823 = vpop.f32.mrb[0].mxu0
  %3824 = vmatprep.mubr.bf16.mxu0 0
  %3825 = vmatmul.mubr.bf16.gmra.mrb[0].mxu0 %v3288
  %v3826 = vpop.f32.mrb[0].mxu0
  %v3827 = vadd.f32 %v3682, %v3826
  %v3828 = vpop.f32.mrb[0].mxu0
  %v3829 = vpop.f32.mrb[0].mxu0
  %v3830 = vadd.f32 %v3685, %v3829
  %v3831 = vpop.f32.mrb[0].mxu0
  %3832 = vmatprep.mubr.bf16.mxu0 0
  %3833 = vmatmul.mubr.bf16.gmra.mrb[0].mxu0 %v3291
  %v3834 = vpop.f32.mrb[0].mxu0
  %v3835 = vadd.f32 %v3690, %v3834
  %v3836 = vpop.f32.mrb[0].mxu0
  %v3837 = vpop.f32.mrb[0].mxu0
  %v3838 = vadd.f32 %v3693, %v3837
  %v3839 = vpop.f32.mrb[0].mxu0
  %3840 = vmatprep.mubr.bf16.mxu0 0
  %3841 = vmatmul.mubr.bf16.gmra.mrb[0].mxu0 %v3294
  %v3842 = vpop.f32.mrb[0].mxu0
  %v3843 = vadd.f32 %v3698, %v3842
  %v3844 = vpop.f32.mrb[0].mxu0
  %v3845 = vpop.f32.mrb[0].mxu0
  %v3846 = vadd.f32 %v3701, %v3845
  %v3847 = vpop.f32.mrb[0].mxu0
  %3848 = vmatprep.mubr.bf16.mxu0 0
  %3849 = vmatmul.mubr.bf16.gmra.mrb[0].mxu0 %v3297
  %v3850 = vpop.f32.mrb[0].mxu0
  %v3851 = vadd.f32 %v3706, %v3850
  %v3852 = vpop.f32.mrb[0].mxu0
  %v3853 = vpop.f32.mrb[0].mxu0
  %v3854 = vadd.f32 %v3709, %v3853
  %v3855 = vpop.f32.mrb[0].mxu0
  %3856 = vdwg.mxu0
  %s3857 = scalar_lea.vmem %s4, 120
  %v3858 = vld [vmem:[%s3857] sm:$0xf]
  %v3859 = vld [vmem:[%s3857 + $0x4] sm:$0xf]
  %v3860 = vld [vmem:[%s3857 + $0x8] sm:$0xf]
  %v3861 = vld [vmem:[%s3857 + $0xc] sm:$0xf]
  %v3862 = vld [vmem:[%s3857 + $0x10] sm:$0xf]
  %v3863 = vld [vmem:[%s3857 + $0x14] sm:$0xf]
  %v3864 = vld [vmem:[%s3857 + $0x18] sm:$0xf]
  %v3865 = vld [vmem:[%s3857 + $0x1c] sm:$0xf]
  %v3866 = vld [vmem:[%s3857 + $0x20] sm:$0xf]
  %v3867 = vld [vmem:[%s3857 + $0x24] sm:$0xf]
  %v3868 = vld [vmem:[%s3857 + $0x28] sm:$0xf]
  %v3869 = vld [vmem:[%s3857 + $0x2c] sm:$0xf]
  %v3870 = vld [vmem:[%s3857 + $0x30] sm:$0xf]
  %v3871 = vld [vmem:[%s3857 + $0x34] sm:$0xf]
  %v3872 = vld [vmem:[%s3857 + $0x38] sm:$0xf]
  %v3888 = vunpack.c.l.b16 %v3858
  %v3889 = vunpack.c.l.b16 %v3859
  %v3890 = vunpack.c.l.b16 %v3860
  %v3891 = vunpack.c.l.b16 %v3861
  %v3892 = vunpack.c.l.b16 %v3862
  %v3893 = vunpack.c.l.b16 %v3863
  %v3894 = vunpack.c.l.b16 %v3864
  %v3895 = vunpack.c.l.b16 %v3865
  %v3896 = vunpack.c.l.b16 %v3866
  %v3897 = vunpack.c.l.b16 %v3867
  %v3898 = vunpack.c.l.b16 %v3868
  %v3899 = vunpack.c.l.b16 %v3869
  %v3900 = vunpack.c.l.b16 %v3870
  %v3901 = vunpack.c.l.b16 %v3871
  %v3902 = vunpack.c.l.b16 %v3872
  %v3903 = vpack.c.b16 %v3889, %v3888
  %v3904 = vpack.c.b16 %v3891, %v3890
  %v3905 = vpack.c.b16 %v3893, %v3892
  %v3906 = vpack.c.b16 %v3895, %v3894
  %v3907 = vpack.c.b16 %v3897, %v3896
  %v3908 = vpack.c.b16 %v3899, %v3898
  %v3909 = vpack.c.b16 %v3901, %v3900
  %v3910 = vpack.c.b16 %v3902, %v3902
  %v3919 = vsel %vm3277, %v3183, 0
  %v3922 = vsel %vm3302, %v3910, 0
  %3924 = vmatprep.subr.bf16.mxu0 0
  %3925 = vmatpush1.bf16.msra.mxu0 %v3903
  %3926 = vmatprep.subr.bf16.mxu0 0
  %3927 = vmatpush1.bf16.msra.mxu0 %v3904
  %3928 = vmatprep.subr.bf16.mxu0 0
  %3929 = vmatpush1.bf16.msra.mxu0 %v3905
  %3930 = vmatprep.subr.bf16.mxu0 0
  %3931 = vmatpush1.bf16.msra.mxu0 %v3906
  %3932 = vmatprep.subr.bf16.mxu0 0
  %3933 = vmatpush1.bf16.msra.mxu0 %v3907
  %3934 = vmatprep.subr.bf16.mxu0 0
  %3935 = vmatpush1.bf16.msra.mxu0 %v3908
  %3936 = vmatprep.subr.bf16.mxu0 0
  %3937 = vmatpush1.bf16.msra.mxu0 %v3909
  %3938 = vmatprep.subr.bf16.mxu0 0
  %3939 = vmatpush1.bf16.msra.mxu0 %v3922
  %3940 = vmatprep.subr.bf16.mxu0 0
  %3941 = vmatpush1.bf16.msra.mxu0 0
  %3942 = vmatprep.subr.bf16.mxu0 0
  %3943 = vmatpush1.bf16.msra.mxu0 0
  %3944 = vmatprep.subr.bf16.mxu0 0
  %3945 = vmatpush1.bf16.msra.mxu0 0
  %3946 = vmatprep.subr.bf16.mxu0 0
  %3947 = vmatpush1.bf16.msra.mxu0 0
  %3948 = vmatprep.subr.bf16.mxu0 0
  %3949 = vmatpush1.bf16.msra.mxu0 0
  %3950 = vmatprep.subr.bf16.mxu0 0
  %3951 = vmatpush1.bf16.msra.mxu0 0
  %3952 = vmatprep.subr.bf16.mxu0 0
  %3953 = vmatpush1.bf16.msra.mxu0 0
  %3954 = vmatprep.subr.bf16.mxu0 0
  %3955 = vmatpush1.bf16.msra.mxu0 0
  %3956 = vmatprep.mubr.bf16.mxu0 0
  %3957 = vmatmul.mubr.bf16.gmra.mrb[0].mxu0 %v3282
  %v3958 = vpop.f32.mrb[0].mxu0
  %v3959 = vadd.f32 0.0, %v3958
  %v3960 = vpop.f32.mrb[0].mxu0
  %v3961 = vpop.f32.mrb[0].mxu0
  %v3962 = vadd.f32 0.0, %v3961
  %v3963 = vpop.f32.mrb[0].mxu0
  %3964 = vmatprep.mubr.bf16.mxu0 0
  %3965 = vmatmul.mubr.bf16.gmra.mrb[0].mxu0 %v3285
  %v3966 = vpop.f32.mrb[0].mxu0
  %v3967 = vadd.f32 0.0, %v3966
  %v3968 = vpop.f32.mrb[0].mxu0
  %v3969 = vpop.f32.mrb[0].mxu0
  %v3970 = vadd.f32 0.0, %v3969
  %v3971 = vpop.f32.mrb[0].mxu0
  %3972 = vmatprep.mubr.bf16.mxu0 0
  %3973 = vmatmul.mubr.bf16.gmra.mrb[0].mxu0 %v3288
  %v3974 = vpop.f32.mrb[0].mxu0
  %v3975 = vadd.f32 0.0, %v3974
  %v3976 = vpop.f32.mrb[0].mxu0
  %v3977 = vpop.f32.mrb[0].mxu0
  %v3978 = vadd.f32 0.0, %v3977
  %v3979 = vpop.f32.mrb[0].mxu0
  %3980 = vmatprep.mubr.bf16.mxu0 0
  %3981 = vmatmul.mubr.bf16.gmra.mrb[0].mxu0 %v3291
  %v3982 = vpop.f32.mrb[0].mxu0
  %v3983 = vadd.f32 0.0, %v3982
  %v3984 = vpop.f32.mrb[0].mxu0
  %v3985 = vpop.f32.mrb[0].mxu0
  %v3986 = vadd.f32 0.0, %v3985
  %v3987 = vpop.f32.mrb[0].mxu0
  %3988 = vmatprep.mubr.bf16.mxu0 0
  %3989 = vmatmul.mubr.bf16.gmra.mrb[0].mxu0 %v3294
  %v3990 = vpop.f32.mrb[0].mxu0
  %v3991 = vadd.f32 0.0, %v3990
  %v3992 = vpop.f32.mrb[0].mxu0
  %v3993 = vpop.f32.mrb[0].mxu0
  %v3994 = vadd.f32 0.0, %v3993
  %v3995 = vpop.f32.mrb[0].mxu0
  %3996 = vmatprep.mubr.bf16.mxu0 0
  %3997 = vmatmul.mubr.bf16.gmra.mrb[0].mxu0 %v3297
  %v3998 = vpop.f32.mrb[0].mxu0
  %v3999 = vadd.f32 0.0, %v3998
  %v4000 = vpop.f32.mrb[0].mxu0
  %v4001 = vpop.f32.mrb[0].mxu0
  %v4002 = vadd.f32 0.0, %v4001
  %v4003 = vpop.f32.mrb[0].mxu0
  %4004 = vmatprep.mubr.bf16.mxu0 0
  %4005 = vmatmul.mubr.bf16.gmra.mrb[0].mxu0 %v3300
  %v4006 = vpop.f32.mrb[0].mxu0
  %v4007 = vadd.f32 0.0, %v4006
  %v4008 = vpop.f32.mrb[0].mxu0
  %v4009 = vpop.f32.mrb[0].mxu0
  %v4010 = vadd.f32 0.0, %v4009
  %v4011 = vpop.f32.mrb[0].mxu0
  %4012 = vmatprep.mubr.bf16.mxu0 0
  %4013 = vmatmul.mubr.bf16.gmra.mrb[0].mxu0 %v3919
  %v4014 = vpop.f32.mrb[0].mxu0
  %v4015 = vadd.f32 0.0, %v4014
  %v4016 = vpop.f32.mrb[0].mxu0
  %v4017 = vpop.f32.mrb[0].mxu0
  %v4018 = vadd.f32 0.0, %v4017
  %v4019 = vpop.f32.mrb[0].mxu0
  %4020 = vdwg.mxu0
  %v4021 = vadd.f32 %v3489, %v3959
  %v4022 = vadd.f32 %v3492, %v3962
  %v4023 = vadd.f32 %v3497, %v3967
  %v4024 = vadd.f32 %v3500, %v3970
  %v4025 = vadd.f32 %v3505, %v3975
  %v4026 = vadd.f32 %v3508, %v3978
  %v4027 = vadd.f32 %v3513, %v3983
  %v4028 = vadd.f32 %v3516, %v3986
  %v4029 = vadd.f32 %v3521, %v3991
  %v4030 = vadd.f32 %v3524, %v3994
  %v4031 = vadd.f32 %v3529, %v3999
  %v4032 = vadd.f32 %v3532, %v4002
  %v4033 = vadd.f32 %v3537, %v4007
  %v4034 = vadd.f32 %v3540, %v4010
  %v4035 = vadd.f32 %v3545, %v4015
  %v4036 = vadd.f32 %v3548, %v4018
  %s4037 = scalar_lea.vmem %s5, 120
  %v4038 = vld [vmem:[%s4037] sm:$0xf]
  %v4039 = vld [vmem:[%s4037 + $0x4] sm:$0xf]
  %v4040 = vld [vmem:[%s4037 + $0x8] sm:$0xf]
  %v4041 = vld [vmem:[%s4037 + $0xc] sm:$0xf]
  %v4042 = vld [vmem:[%s4037 + $0x10] sm:$0xf]
  %v4043 = vld [vmem:[%s4037 + $0x14] sm:$0xf]
  %v4044 = vld [vmem:[%s4037 + $0x18] sm:$0xf]
  %v4045 = vld [vmem:[%s4037 + $0x1c] sm:$0xf]
  %v4046 = vld [vmem:[%s4037 + $0x20] sm:$0xf]
  %v4047 = vld [vmem:[%s4037 + $0x24] sm:$0xf]
  %v4048 = vld [vmem:[%s4037 + $0x28] sm:$0xf]
  %v4049 = vld [vmem:[%s4037 + $0x2c] sm:$0xf]
  %v4050 = vld [vmem:[%s4037 + $0x30] sm:$0xf]
  %v4051 = vld [vmem:[%s4037 + $0x34] sm:$0xf]
  %v4052 = vld [vmem:[%s4037 + $0x38] sm:$0xf]
  %v4068 = vunpack.c.l.b16 %v4038
  %v4069 = vunpack.c.l.b16 %v4039
  %v4070 = vunpack.c.l.b16 %v4040
  %v4071 = vunpack.c.l.b16 %v4041
  %v4072 = vunpack.c.l.b16 %v4042
  %v4073 = vunpack.c.l.b16 %v4043
  %v4074 = vunpack.c.l.b16 %v4044
  %v4075 = vunpack.c.l.b16 %v4045
  %v4076 = vunpack.c.l.b16 %v4046
  %v4077 = vunpack.c.l.b16 %v4047
  %v4078 = vunpack.c.l.b16 %v4048
  %v4079 = vunpack.c.l.b16 %v4049
  %v4080 = vunpack.c.l.b16 %v4050
  %v4081 = vunpack.c.l.b16 %v4051
  %v4082 = vunpack.c.l.b16 %v4052
  %v4083 = vpack.c.b16 %v4069, %v4068
  %v4084 = vpack.c.b16 %v4071, %v4070
  %v4085 = vpack.c.b16 %v4073, %v4072
  %v4086 = vpack.c.b16 %v4075, %v4074
  %v4087 = vpack.c.b16 %v4077, %v4076
  %v4088 = vpack.c.b16 %v4079, %v4078
  %v4089 = vpack.c.b16 %v4081, %v4080
  %v4090 = vpack.c.b16 %v4082, %v4082
  %v4099 = vsel %vm3302, %v4090, 0
  %4101 = vmatprep.subr.bf16.mxu0 0
  %4102 = vmatpush1.bf16.msra.mxu0 %v4083
  %4103 = vmatprep.subr.bf16.mxu0 0
  %4104 = vmatpush1.bf16.msra.mxu0 %v4084
  %4105 = vmatprep.subr.bf16.mxu0 0
  %4106 = vmatpush1.bf16.msra.mxu0 %v4085
  %4107 = vmatprep.subr.bf16.mxu0 0
  %4108 = vmatpush1.bf16.msra.mxu0 %v4086
  %4109 = vmatprep.subr.bf16.mxu0 0
  %4110 = vmatpush1.bf16.msra.mxu0 %v4087
  %4111 = vmatprep.subr.bf16.mxu0 0
  %4112 = vmatpush1.bf16.msra.mxu0 %v4088
  %4113 = vmatprep.subr.bf16.mxu0 0
  %4114 = vmatpush1.bf16.msra.mxu0 %v4089
  %4115 = vmatprep.subr.bf16.mxu0 0
  %4116 = vmatpush1.bf16.msra.mxu0 %v4099
  %4117 = vmatprep.subr.bf16.mxu0 0
  %4118 = vmatpush1.bf16.msra.mxu0 0
  %4119 = vmatprep.subr.bf16.mxu0 0
  %4120 = vmatpush1.bf16.msra.mxu0 0
  %4121 = vmatprep.subr.bf16.mxu0 0
  %4122 = vmatpush1.bf16.msra.mxu0 0
  %4123 = vmatprep.subr.bf16.mxu0 0
  %4124 = vmatpush1.bf16.msra.mxu0 0
  %4125 = vmatprep.subr.bf16.mxu0 0
  %4126 = vmatpush1.bf16.msra.mxu0 0
  %4127 = vmatprep.subr.bf16.mxu0 0
  %4128 = vmatpush1.bf16.msra.mxu0 0
  %4129 = vmatprep.subr.bf16.mxu0 0
  %4130 = vmatpush1.bf16.msra.mxu0 0
  %4131 = vmatprep.subr.bf16.mxu0 0
  %4132 = vmatpush1.bf16.msra.mxu0 0
  %4133 = vmatprep.mubr.bf16.mxu0 0
  %4134 = vmatmul.mubr.bf16.gmra.mrb[0].mxu0 %v3282
  %v4135 = vpop.f32.mrb[0].mxu0
  %v4136 = vadd.f32 0.0, %v4135
  %v4137 = vpop.f32.mrb[0].mxu0
  %v4138 = vpop.f32.mrb[0].mxu0
  %v4139 = vadd.f32 0.0, %v4138
  %v4140 = vpop.f32.mrb[0].mxu0
  %4141 = vmatprep.mubr.bf16.mxu0 0
  %4142 = vmatmul.mubr.bf16.gmra.mrb[0].mxu0 %v3285
  %v4143 = vpop.f32.mrb[0].mxu0
  %v4144 = vadd.f32 0.0, %v4143
  %v4145 = vpop.f32.mrb[0].mxu0
  %v4146 = vpop.f32.mrb[0].mxu0
  %v4147 = vadd.f32 0.0, %v4146
  %v4148 = vpop.f32.mrb[0].mxu0
  %4149 = vmatprep.mubr.bf16.mxu0 0
  %4150 = vmatmul.mubr.bf16.gmra.mrb[0].mxu0 %v3288
  %v4151 = vpop.f32.mrb[0].mxu0
  %v4152 = vadd.f32 0.0, %v4151
  %v4153 = vpop.f32.mrb[0].mxu0
  %v4154 = vpop.f32.mrb[0].mxu0
  %v4155 = vadd.f32 0.0, %v4154
  %v4156 = vpop.f32.mrb[0].mxu0
  %4157 = vmatprep.mubr.bf16.mxu0 0
  %4158 = vmatmul.mubr.bf16.gmra.mrb[0].mxu0 %v3291
  %v4159 = vpop.f32.mrb[0].mxu0
  %v4160 = vadd.f32 0.0, %v4159
  %v4161 = vpop.f32.mrb[0].mxu0
  %v4162 = vpop.f32.mrb[0].mxu0
  %v4163 = vadd.f32 0.0, %v4162
  %v4164 = vpop.f32.mrb[0].mxu0
  %4165 = vmatprep.mubr.bf16.mxu0 0
  %4166 = vmatmul.mubr.bf16.gmra.mrb[0].mxu0 %v3294
  %v4167 = vpop.f32.mrb[0].mxu0
  %v4168 = vadd.f32 0.0, %v4167
  %v4169 = vpop.f32.mrb[0].mxu0
  %v4170 = vpop.f32.mrb[0].mxu0
  %v4171 = vadd.f32 0.0, %v4170
  %v4172 = vpop.f32.mrb[0].mxu0
  %4173 = vmatprep.mubr.bf16.mxu0 0
  %4174 = vmatmul.mubr.bf16.gmra.mrb[0].mxu0 %v3297
  %v4175 = vpop.f32.mrb[0].mxu0
  %v4176 = vadd.f32 0.0, %v4175
  %v4177 = vpop.f32.mrb[0].mxu0
  %v4178 = vpop.f32.mrb[0].mxu0
  %v4179 = vadd.f32 0.0, %v4178
  %v4180 = vpop.f32.mrb[0].mxu0
  %4181 = vmatprep.mubr.bf16.mxu0 0
  %4182 = vmatmul.mubr.bf16.gmra.mrb[0].mxu0 %v3300
  %v4183 = vpop.f32.mrb[0].mxu0
  %v4184 = vadd.f32 0.0, %v4183
  %v4185 = vpop.f32.mrb[0].mxu0
  %v4186 = vpop.f32.mrb[0].mxu0
  %v4187 = vadd.f32 0.0, %v4186
  %v4188 = vpop.f32.mrb[0].mxu0
  %4189 = vmatprep.mubr.bf16.mxu0 0
  %4190 = vmatmul.mubr.bf16.gmra.mrb[0].mxu0 %v3919
  %v4191 = vpop.f32.mrb[0].mxu0
  %v4192 = vadd.f32 0.0, %v4191
  %v4193 = vpop.f32.mrb[0].mxu0
  %v4194 = vpop.f32.mrb[0].mxu0
  %v4195 = vadd.f32 0.0, %v4194
  %v4196 = vpop.f32.mrb[0].mxu0
  %4197 = vdwg.mxu0
  %v4198 = vadd.f32 %v3795, %v4136
  %v4199 = vadd.f32 %v3798, %v4139
  %v4200 = vadd.f32 %v3803, %v4144
  %v4201 = vadd.f32 %v3806, %v4147
  %v4202 = vadd.f32 %v3811, %v4152
  %v4203 = vadd.f32 %v3814, %v4155
  %v4204 = vadd.f32 %v3819, %v4160
  %v4205 = vadd.f32 %v3822, %v4163
  %v4206 = vadd.f32 %v3827, %v4168
  %v4207 = vadd.f32 %v3830, %v4171
  %v4208 = vadd.f32 %v3835, %v4176
  %v4209 = vadd.f32 %v3838, %v4179
  %v4210 = vadd.f32 %v3843, %v4184
  %v4211 = vadd.f32 %v3846, %v4187
  %v4212 = vadd.f32 %v3851, %v4192
  %v4213 = vadd.f32 %v3854, %v4195
  %s4214 = scalar_lea.vmem %s4, 180
  %v4215 = vld [vmem:[%s4214] sm:$0xf]
  %v4216 = vld [vmem:[%s4214 + $0x4] sm:$0xf]
  %v4217 = vld [vmem:[%s4214 + $0x8] sm:$0xf]
  %v4218 = vld [vmem:[%s4214 + $0xc] sm:$0xf]
  %v4219 = vld [vmem:[%s4214 + $0x10] sm:$0xf]
  %v4220 = vld [vmem:[%s4214 + $0x14] sm:$0xf]
  %v4221 = vld [vmem:[%s4214 + $0x18] sm:$0xf]
  %v4222 = vld [vmem:[%s4214 + $0x1c] sm:$0xf]
  %v4223 = vld [vmem:[%s4214 + $0x20] sm:$0xf]
  %v4224 = vld [vmem:[%s4214 + $0x24] sm:$0xf]
  %v4225 = vld [vmem:[%s4214 + $0x28] sm:$0xf]
  %v4226 = vld [vmem:[%s4214 + $0x2c] sm:$0xf]
  %v4227 = vld [vmem:[%s4214 + $0x30] sm:$0xf]
  %v4228 = vld [vmem:[%s4214 + $0x34] sm:$0xf]
  %v4229 = vld [vmem:[%s4214 + $0x38] sm:$0xf]
  %v4245 = vunpack.c.l.b16 %v4215
  %v4246 = vunpack.c.l.b16 %v4216
  %v4247 = vunpack.c.l.b16 %v4217
  %v4248 = vunpack.c.l.b16 %v4218
  %v4249 = vunpack.c.l.b16 %v4219
  %v4250 = vunpack.c.l.b16 %v4220
  %v4251 = vunpack.c.l.b16 %v4221
  %v4252 = vunpack.c.l.b16 %v4222
  %v4253 = vunpack.c.l.b16 %v4223
  %v4254 = vunpack.c.l.b16 %v4224
  %v4255 = vunpack.c.l.b16 %v4225
  %v4256 = vunpack.c.l.b16 %v4226
  %v4257 = vunpack.c.l.b16 %v4227
  %v4258 = vunpack.c.l.b16 %v4228
  %v4259 = vunpack.c.l.b16 %v4229
  %v4260 = vpack.c.b16 %v4246, %v4245
  %v4261 = vpack.c.b16 %v4248, %v4247
  %v4262 = vpack.c.b16 %v4250, %v4249
  %v4263 = vpack.c.b16 %v4252, %v4251
  %v4264 = vpack.c.b16 %v4254, %v4253
  %v4265 = vpack.c.b16 %v4256, %v4255
  %v4266 = vpack.c.b16 %v4258, %v4257
  %v4267 = vpack.c.b16 %v4259, %v4259
  %v4276 = vsel %vm3277, %v3184, 0
  %v4279 = vsel %vm3302, %v4267, 0
  %4281 = vmatprep.subr.bf16.mxu0 0
  %4282 = vmatpush1.bf16.msra.mxu0 %v4260
  %4283 = vmatprep.subr.bf16.mxu0 0
  %4284 = vmatpush1.bf16.msra.mxu0 %v4261
  %4285 = vmatprep.subr.bf16.mxu0 0
  %4286 = vmatpush1.bf16.msra.mxu0 %v4262
  %4287 = vmatprep.subr.bf16.mxu0 0
  %4288 = vmatpush1.bf16.msra.mxu0 %v4263
  %4289 = vmatprep.subr.bf16.mxu0 0
  %4290 = vmatpush1.bf16.msra.mxu0 %v4264
  %4291 = vmatprep.subr.bf16.mxu0 0
  %4292 = vmatpush1.bf16.msra.mxu0 %v4265
  %4293 = vmatprep.subr.bf16.mxu0 0
  %4294 = vmatpush1.bf16.msra.mxu0 %v4266
  %4295 = vmatprep.subr.bf16.mxu0 0
  %4296 = vmatpush1.bf16.msra.mxu0 %v4279
  %4297 = vmatprep.subr.bf16.mxu0 0
  %4298 = vmatpush1.bf16.msra.mxu0 0
  %4299 = vmatprep.subr.bf16.mxu0 0
  %4300 = vmatpush1.bf16.msra.mxu0 0
  %4301 = vmatprep.subr.bf16.mxu0 0
  %4302 = vmatpush1.bf16.msra.mxu0 0
  %4303 = vmatprep.subr.bf16.mxu0 0
  %4304 = vmatpush1.bf16.msra.mxu0 0
  %4305 = vmatprep.subr.bf16.mxu0 0
  %4306 = vmatpush1.bf16.msra.mxu0 0
  %4307 = vmatprep.subr.bf16.mxu0 0
  %4308 = vmatpush1.bf16.msra.mxu0 0
  %4309 = vmatprep.subr.bf16.mxu0 0
  %4310 = vmatpush1.bf16.msra.mxu0 0
  %4311 = vmatprep.subr.bf16.mxu0 0
  %4312 = vmatpush1.bf16.msra.mxu0 0
  %4313 = vmatprep.mubr.bf16.mxu0 0
  %4314 = vmatmul.mubr.bf16.gmra.mrb[0].mxu0 %v3285
  %v4315 = vpop.f32.mrb[0].mxu0
  %v4316 = vadd.f32 0.0, %v4315
  %v4317 = vpop.f32.mrb[0].mxu0
  %v4318 = vpop.f32.mrb[0].mxu0
  %v4319 = vadd.f32 0.0, %v4318
  %v4320 = vpop.f32.mrb[0].mxu0
  %4321 = vmatprep.mubr.bf16.mxu0 0
  %4322 = vmatmul.mubr.bf16.gmra.mrb[0].mxu0 %v3288
  %v4323 = vpop.f32.mrb[0].mxu0
  %v4324 = vadd.f32 0.0, %v4323
  %v4325 = vpop.f32.mrb[0].mxu0
  %v4326 = vpop.f32.mrb[0].mxu0
  %v4327 = vadd.f32 0.0, %v4326
  %v4328 = vpop.f32.mrb[0].mxu0
  %4329 = vmatprep.mubr.bf16.mxu0 0
  %4330 = vmatmul.mubr.bf16.gmra.mrb[0].mxu0 %v3291
  %v4331 = vpop.f32.mrb[0].mxu0
  %v4332 = vadd.f32 0.0, %v4331
  %v4333 = vpop.f32.mrb[0].mxu0
  %v4334 = vpop.f32.mrb[0].mxu0
  %v4335 = vadd.f32 0.0, %v4334
  %v4336 = vpop.f32.mrb[0].mxu0
  %4337 = vmatprep.mubr.bf16.mxu0 0
  %4338 = vmatmul.mubr.bf16.gmra.mrb[0].mxu0 %v3294
  %v4339 = vpop.f32.mrb[0].mxu0
  %v4340 = vadd.f32 0.0, %v4339
  %v4341 = vpop.f32.mrb[0].mxu0
  %v4342 = vpop.f32.mrb[0].mxu0
  %v4343 = vadd.f32 0.0, %v4342
  %v4344 = vpop.f32.mrb[0].mxu0
  %4345 = vmatprep.mubr.bf16.mxu0 0
  %4346 = vmatmul.mubr.bf16.gmra.mrb[0].mxu0 %v3297
  %v4347 = vpop.f32.mrb[0].mxu0
  %v4348 = vadd.f32 0.0, %v4347
  %v4349 = vpop.f32.mrb[0].mxu0
  %v4350 = vpop.f32.mrb[0].mxu0
  %v4351 = vadd.f32 0.0, %v4350
  %v4352 = vpop.f32.mrb[0].mxu0
  %4353 = vmatprep.mubr.bf16.mxu0 0
  %4354 = vmatmul.mubr.bf16.gmra.mrb[0].mxu0 %v3300
  %v4355 = vpop.f32.mrb[0].mxu0
  %v4356 = vadd.f32 0.0, %v4355
  %v4357 = vpop.f32.mrb[0].mxu0
  %v4358 = vpop.f32.mrb[0].mxu0
  %v4359 = vadd.f32 0.0, %v4358
  %v4360 = vpop.f32.mrb[0].mxu0
  %4361 = vmatprep.mubr.bf16.mxu0 0
  %4362 = vmatmul.mubr.bf16.gmra.mrb[0].mxu0 %v3919
  %v4363 = vpop.f32.mrb[0].mxu0
  %v4364 = vadd.f32 0.0, %v4363
  %v4365 = vpop.f32.mrb[0].mxu0
  %v4366 = vpop.f32.mrb[0].mxu0
  %v4367 = vadd.f32 0.0, %v4366
  %v4368 = vpop.f32.mrb[0].mxu0
  %4369 = vmatprep.mubr.bf16.mxu0 0
  %4370 = vmatmul.mubr.bf16.gmra.mrb[0].mxu0 %v4276
  %v4371 = vpop.f32.mrb[0].mxu0
  %v4372 = vadd.f32 0.0, %v4371
  %v4373 = vpop.f32.mrb[0].mxu0
  %v4374 = vpop.f32.mrb[0].mxu0
  %v4375 = vadd.f32 0.0, %v4374
  %v4376 = vpop.f32.mrb[0].mxu0
  %4377 = vdwg.mxu0
  %v4378 = vadd.f32 %v4021, %v4316
  %v4379 = vadd.f32 %v4022, %v4319
  %v4380 = vadd.f32 %v4023, %v4324
  %v4381 = vadd.f32 %v4024, %v4327
  %v4382 = vadd.f32 %v4025, %v4332
  %v4383 = vadd.f32 %v4026, %v4335
  %v4384 = vadd.f32 %v4027, %v4340
  %v4385 = vadd.f32 %v4028, %v4343
  %v4386 = vadd.f32 %v4029, %v4348
  %v4387 = vadd.f32 %v4030, %v4351
  %v4388 = vadd.f32 %v4031, %v4356
  %v4389 = vadd.f32 %v4032, %v4359
  %v4390 = vadd.f32 %v4033, %v4364
  %v4391 = vadd.f32 %v4034, %v4367
  %v4392 = vadd.f32 %v4035, %v4372
  %v4393 = vadd.f32 %v4036, %v4375
  %s4394 = scalar_lea.vmem %s5, 180
  %v4395 = vld [vmem:[%s4394] sm:$0xf]
  %v4396 = vld [vmem:[%s4394 + $0x4] sm:$0xf]
  %v4397 = vld [vmem:[%s4394 + $0x8] sm:$0xf]
  %v4398 = vld [vmem:[%s4394 + $0xc] sm:$0xf]
  %v4399 = vld [vmem:[%s4394 + $0x10] sm:$0xf]
  %v4400 = vld [vmem:[%s4394 + $0x14] sm:$0xf]
  %v4401 = vld [vmem:[%s4394 + $0x18] sm:$0xf]
  %v4402 = vld [vmem:[%s4394 + $0x1c] sm:$0xf]
  %v4403 = vld [vmem:[%s4394 + $0x20] sm:$0xf]
  %v4404 = vld [vmem:[%s4394 + $0x24] sm:$0xf]
  %v4405 = vld [vmem:[%s4394 + $0x28] sm:$0xf]
  %v4406 = vld [vmem:[%s4394 + $0x2c] sm:$0xf]
  %v4407 = vld [vmem:[%s4394 + $0x30] sm:$0xf]
  %v4408 = vld [vmem:[%s4394 + $0x34] sm:$0xf]
  %v4409 = vld [vmem:[%s4394 + $0x38] sm:$0xf]
  %v4425 = vunpack.c.l.b16 %v4395
  %v4426 = vunpack.c.l.b16 %v4396
  %v4427 = vunpack.c.l.b16 %v4397
  %v4428 = vunpack.c.l.b16 %v4398
  %v4429 = vunpack.c.l.b16 %v4399
  %v4430 = vunpack.c.l.b16 %v4400
  %v4431 = vunpack.c.l.b16 %v4401
  %v4432 = vunpack.c.l.b16 %v4402
  %v4433 = vunpack.c.l.b16 %v4403
  %v4434 = vunpack.c.l.b16 %v4404
  %v4435 = vunpack.c.l.b16 %v4405
  %v4436 = vunpack.c.l.b16 %v4406
  %v4437 = vunpack.c.l.b16 %v4407
  %v4438 = vunpack.c.l.b16 %v4408
  %v4439 = vunpack.c.l.b16 %v4409
  %v4440 = vpack.c.b16 %v4426, %v4425
  %v4441 = vpack.c.b16 %v4428, %v4427
  %v4442 = vpack.c.b16 %v4430, %v4429
  %v4443 = vpack.c.b16 %v4432, %v4431
  %v4444 = vpack.c.b16 %v4434, %v4433
  %v4445 = vpack.c.b16 %v4436, %v4435
  %v4446 = vpack.c.b16 %v4438, %v4437
  %v4447 = vpack.c.b16 %v4439, %v4439
  %v4456 = vsel %vm3302, %v4447, 0
  %4458 = vmatprep.subr.bf16.mxu0 0
  %4459 = vmatpush1.bf16.msra.mxu0 %v4440
  %4460 = vmatprep.subr.bf16.mxu0 0
  %4461 = vmatpush1.bf16.msra.mxu0 %v4441
  %4462 = vmatprep.subr.bf16.mxu0 0
  %4463 = vmatpush1.bf16.msra.mxu0 %v4442
  %4464 = vmatprep.subr.bf16.mxu0 0
  %4465 = vmatpush1.bf16.msra.mxu0 %v4443
  %4466 = vmatprep.subr.bf16.mxu0 0
  %4467 = vmatpush1.bf16.msra.mxu0 %v4444
  %4468 = vmatprep.subr.bf16.mxu0 0
  %4469 = vmatpush1.bf16.msra.mxu0 %v4445
  %4470 = vmatprep.subr.bf16.mxu0 0
  %4471 = vmatpush1.bf16.msra.mxu0 %v4446
  %4472 = vmatprep.subr.bf16.mxu0 0
  %4473 = vmatpush1.bf16.msra.mxu0 %v4456
  %4474 = vmatprep.subr.bf16.mxu0 0
  %4475 = vmatpush1.bf16.msra.mxu0 0
  %4476 = vmatprep.subr.bf16.mxu0 0
  %4477 = vmatpush1.bf16.msra.mxu0 0
  %4478 = vmatprep.subr.bf16.mxu0 0
  %4479 = vmatpush1.bf16.msra.mxu0 0
  %4480 = vmatprep.subr.bf16.mxu0 0
  %4481 = vmatpush1.bf16.msra.mxu0 0
  %4482 = vmatprep.subr.bf16.mxu0 0
  %4483 = vmatpush1.bf16.msra.mxu0 0
  %4484 = vmatprep.subr.bf16.mxu0 0
  %4485 = vmatpush1.bf16.msra.mxu0 0
  %4486 = vmatprep.subr.bf16.mxu0 0
  %4487 = vmatpush1.bf16.msra.mxu0 0
  %4488 = vmatprep.subr.bf16.mxu0 0
  %4489 = vmatpush1.bf16.msra.mxu0 0
  %4490 = vmatprep.mubr.bf16.mxu0 0
  %4491 = vmatmul.mubr.bf16.gmra.mrb[0].mxu0 %v3285
  %v4492 = vpop.f32.mrb[0].mxu0
  %v4493 = vadd.f32 0.0, %v4492
  %v4494 = vpop.f32.mrb[0].mxu0
  %v4495 = vpop.f32.mrb[0].mxu0
  %v4496 = vadd.f32 0.0, %v4495
  %v4497 = vpop.f32.mrb[0].mxu0
  %4498 = vmatprep.mubr.bf16.mxu0 0
  %4499 = vmatmul.mubr.bf16.gmra.mrb[0].mxu0 %v3288
  %v4500 = vpop.f32.mrb[0].mxu0
  %v4501 = vadd.f32 0.0, %v4500
  %v4502 = vpop.f32.mrb[0].mxu0
  %v4503 = vpop.f32.mrb[0].mxu0
  %v4504 = vadd.f32 0.0, %v4503
  %v4505 = vpop.f32.mrb[0].mxu0
  %4506 = vmatprep.mubr.bf16.mxu0 0
  %4507 = vmatmul.mubr.bf16.gmra.mrb[0].mxu0 %v3291
  %v4508 = vpop.f32.mrb[0].mxu0
  %v4509 = vadd.f32 0.0, %v4508
  %v4510 = vpop.f32.mrb[0].mxu0
  %v4511 = vpop.f32.mrb[0].mxu0
  %v4512 = vadd.f32 0.0, %v4511
  %v4513 = vpop.f32.mrb[0].mxu0
  %4514 = vmatprep.mubr.bf16.mxu0 0
  %4515 = vmatmul.mubr.bf16.gmra.mrb[0].mxu0 %v3294
  %v4516 = vpop.f32.mrb[0].mxu0
  %v4517 = vadd.f32 0.0, %v4516
  %v4518 = vpop.f32.mrb[0].mxu0
  %v4519 = vpop.f32.mrb[0].mxu0
  %v4520 = vadd.f32 0.0, %v4519
  %v4521 = vpop.f32.mrb[0].mxu0
  %4522 = vmatprep.mubr.bf16.mxu0 0
  %4523 = vmatmul.mubr.bf16.gmra.mrb[0].mxu0 %v3297
  %v4524 = vpop.f32.mrb[0].mxu0
  %v4525 = vadd.f32 0.0, %v4524
  %v4526 = vpop.f32.mrb[0].mxu0
  %v4527 = vpop.f32.mrb[0].mxu0
  %v4528 = vadd.f32 0.0, %v4527
  %v4529 = vpop.f32.mrb[0].mxu0
  %4530 = vmatprep.mubr.bf16.mxu0 0
  %4531 = vmatmul.mubr.bf16.gmra.mrb[0].mxu0 %v3300
  %v4532 = vpop.f32.mrb[0].mxu0
  %v4533 = vadd.f32 0.0, %v4532
  %v4534 = vpop.f32.mrb[0].mxu0
  %v4535 = vpop.f32.mrb[0].mxu0
  %v4536 = vadd.f32 0.0, %v4535
  %v4537 = vpop.f32.mrb[0].mxu0
  %4538 = vmatprep.mubr.bf16.mxu0 0
  %4539 = vmatmul.mubr.bf16.gmra.mrb[0].mxu0 %v3919
  %v4540 = vpop.f32.mrb[0].mxu0
  %v4541 = vadd.f32 0.0, %v4540
  %v4542 = vpop.f32.mrb[0].mxu0
  %v4543 = vpop.f32.mrb[0].mxu0
  %v4544 = vadd.f32 0.0, %v4543
  %v4545 = vpop.f32.mrb[0].mxu0
  %4546 = vmatprep.mubr.bf16.mxu0 0
  %4547 = vmatmul.mubr.bf16.gmra.mrb[0].mxu0 %v4276
  %v4548 = vpop.f32.mrb[0].mxu0
  %v4549 = vadd.f32 0.0, %v4548
  %v4550 = vpop.f32.mrb[0].mxu0
  %v4551 = vpop.f32.mrb[0].mxu0
  %v4552 = vadd.f32 0.0, %v4551
  %v4553 = vpop.f32.mrb[0].mxu0
  %4554 = vdwg.mxu0
  %v4555 = vadd.f32 %v4198, %v4493
  %v4556 = vadd.f32 %v4199, %v4496
  %v4557 = vadd.f32 %v4200, %v4501
  %v4558 = vadd.f32 %v4201, %v4504
  %v4559 = vadd.f32 %v4202, %v4509
  %v4560 = vadd.f32 %v4203, %v4512
  %v4561 = vadd.f32 %v4204, %v4517
  %v4562 = vadd.f32 %v4205, %v4520
  %v4563 = vadd.f32 %v4206, %v4525
  %v4564 = vadd.f32 %v4207, %v4528
  %v4565 = vadd.f32 %v4208, %v4533
  %v4566 = vadd.f32 %v4209, %v4536
  %v4567 = vadd.f32 %v4210, %v4541
  %v4568 = vadd.f32 %v4211, %v4544
  %v4569 = vadd.f32 %v4212, %v4549
  %v4570 = vadd.f32 %v4213, %v4552
  %s4571 = scalar_lea.vmem %s4, 240
  %v4572 = vld [vmem:[%s4571] sm:$0xf]
  %v4573 = vld [vmem:[%s4571 + $0x4] sm:$0xf]
  %v4574 = vld [vmem:[%s4571 + $0x8] sm:$0xf]
  %v4575 = vld [vmem:[%s4571 + $0xc] sm:$0xf]
  %v4576 = vld [vmem:[%s4571 + $0x10] sm:$0xf]
  %v4577 = vld [vmem:[%s4571 + $0x14] sm:$0xf]
  %v4578 = vld [vmem:[%s4571 + $0x18] sm:$0xf]
  %v4579 = vld [vmem:[%s4571 + $0x1c] sm:$0xf]
  %v4580 = vld [vmem:[%s4571 + $0x20] sm:$0xf]
  %v4581 = vld [vmem:[%s4571 + $0x24] sm:$0xf]
  %v4582 = vld [vmem:[%s4571 + $0x28] sm:$0xf]
  %v4583 = vld [vmem:[%s4571 + $0x2c] sm:$0xf]
  %v4584 = vld [vmem:[%s4571 + $0x30] sm:$0xf]
  %v4585 = vld [vmem:[%s4571 + $0x34] sm:$0xf]
  %v4586 = vld [vmem:[%s4571 + $0x38] sm:$0xf]
  %v4602 = vunpack.c.l.b16 %v4572
  %v4603 = vunpack.c.l.b16 %v4573
  %v4604 = vunpack.c.l.b16 %v4574
  %v4605 = vunpack.c.l.b16 %v4575
  %v4606 = vunpack.c.l.b16 %v4576
  %v4607 = vunpack.c.l.b16 %v4577
  %v4608 = vunpack.c.l.b16 %v4578
  %v4609 = vunpack.c.l.b16 %v4579
  %v4610 = vunpack.c.l.b16 %v4580
  %v4611 = vunpack.c.l.b16 %v4581
  %v4612 = vunpack.c.l.b16 %v4582
  %v4613 = vunpack.c.l.b16 %v4583
  %v4614 = vunpack.c.l.b16 %v4584
  %v4615 = vunpack.c.l.b16 %v4585
  %v4616 = vunpack.c.l.b16 %v4586
  %v4617 = vpack.c.b16 %v4603, %v4602
  %v4618 = vpack.c.b16 %v4605, %v4604
  %v4619 = vpack.c.b16 %v4607, %v4606
  %v4620 = vpack.c.b16 %v4609, %v4608
  %v4621 = vpack.c.b16 %v4611, %v4610
  %v4622 = vpack.c.b16 %v4613, %v4612
  %v4623 = vpack.c.b16 %v4615, %v4614
  %v4624 = vpack.c.b16 %v4616, %v4616
  %v4633 = vsel %vm3277, %v3185, 0
  %v4636 = vsel %vm3302, %v4624, 0
  %4638 = vmatprep.subr.bf16.mxu0 0
  %4639 = vmatpush1.bf16.msra.mxu0 %v4617
  %4640 = vmatprep.subr.bf16.mxu0 0
  %4641 = vmatpush1.bf16.msra.mxu0 %v4618
  %4642 = vmatprep.subr.bf16.mxu0 0
  %4643 = vmatpush1.bf16.msra.mxu0 %v4619
  %4644 = vmatprep.subr.bf16.mxu0 0
  %4645 = vmatpush1.bf16.msra.mxu0 %v4620
  %4646 = vmatprep.subr.bf16.mxu0 0
  %4647 = vmatpush1.bf16.msra.mxu0 %v4621
  %4648 = vmatprep.subr.bf16.mxu0 0
  %4649 = vmatpush1.bf16.msra.mxu0 %v4622
  %4650 = vmatprep.subr.bf16.mxu0 0
  %4651 = vmatpush1.bf16.msra.mxu0 %v4623
  %4652 = vmatprep.subr.bf16.mxu0 0
  %4653 = vmatpush1.bf16.msra.mxu0 %v4636
  %4654 = vmatprep.subr.bf16.mxu0 0
  %4655 = vmatpush1.bf16.msra.mxu0 0
  %4656 = vmatprep.subr.bf16.mxu0 0
  %4657 = vmatpush1.bf16.msra.mxu0 0
  %4658 = vmatprep.subr.bf16.mxu0 0
  %4659 = vmatpush1.bf16.msra.mxu0 0
  %4660 = vmatprep.subr.bf16.mxu0 0
  %4661 = vmatpush1.bf16.msra.mxu0 0
  %4662 = vmatprep.subr.bf16.mxu0 0
  %4663 = vmatpush1.bf16.msra.mxu0 0
  %4664 = vmatprep.subr.bf16.mxu0 0
  %4665 = vmatpush1.bf16.msra.mxu0 0
  %4666 = vmatprep.subr.bf16.mxu0 0
  %4667 = vmatpush1.bf16.msra.mxu0 0
  %4668 = vmatprep.subr.bf16.mxu0 0
  %4669 = vmatpush1.bf16.msra.mxu0 0
  %4670 = vmatprep.mubr.bf16.mxu0 0
  %4671 = vmatmul.mubr.bf16.gmra.mrb[0].mxu0 %v3288
  %v4672 = vpop.f32.mrb[0].mxu0
  %v4673 = vadd.f32 0.0, %v4672
  %v4674 = vpop.f32.mrb[0].mxu0
  %v4675 = vpop.f32.mrb[0].mxu0
  %v4676 = vadd.f32 0.0, %v4675
  %v4677 = vpop.f32.mrb[0].mxu0
  %4678 = vmatprep.mubr.bf16.mxu0 0
  %4679 = vmatmul.mubr.bf16.gmra.mrb[0].mxu0 %v3291
  %v4680 = vpop.f32.mrb[0].mxu0
  %v4681 = vadd.f32 0.0, %v4680
  %v4682 = vpop.f32.mrb[0].mxu0
  %v4683 = vpop.f32.mrb[0].mxu0
  %v4684 = vadd.f32 0.0, %v4683
  %v4685 = vpop.f32.mrb[0].mxu0
  %4686 = vmatprep.mubr.bf16.mxu0 0
  %4687 = vmatmul.mubr.bf16.gmra.mrb[0].mxu0 %v3294
  %v4688 = vpop.f32.mrb[0].mxu0
  %v4689 = vadd.f32 0.0, %v4688
  %v4690 = vpop.f32.mrb[0].mxu0
  %v4691 = vpop.f32.mrb[0].mxu0
  %v4692 = vadd.f32 0.0, %v4691
  %v4693 = vpop.f32.mrb[0].mxu0
  %4694 = vmatprep.mubr.bf16.mxu0 0
  %4695 = vmatmul.mubr.bf16.gmra.mrb[0].mxu0 %v3297
  %v4696 = vpop.f32.mrb[0].mxu0
  %v4697 = vadd.f32 0.0, %v4696
  %v4698 = vpop.f32.mrb[0].mxu0
  %v4699 = vpop.f32.mrb[0].mxu0
  %v4700 = vadd.f32 0.0, %v4699
  %v4701 = vpop.f32.mrb[0].mxu0
  %4702 = vmatprep.mubr.bf16.mxu0 0
  %4703 = vmatmul.mubr.bf16.gmra.mrb[0].mxu0 %v3300
  %v4704 = vpop.f32.mrb[0].mxu0
  %v4705 = vadd.f32 0.0, %v4704
  %v4706 = vpop.f32.mrb[0].mxu0
  %v4707 = vpop.f32.mrb[0].mxu0
  %v4708 = vadd.f32 0.0, %v4707
  %v4709 = vpop.f32.mrb[0].mxu0
  %4710 = vmatprep.mubr.bf16.mxu0 0
  %4711 = vmatmul.mubr.bf16.gmra.mrb[0].mxu0 %v3919
  %v4712 = vpop.f32.mrb[0].mxu0
  %v4713 = vadd.f32 0.0, %v4712
  %v4714 = vpop.f32.mrb[0].mxu0
  %v4715 = vpop.f32.mrb[0].mxu0
  %v4716 = vadd.f32 0.0, %v4715
  %v4717 = vpop.f32.mrb[0].mxu0
  %4718 = vmatprep.mubr.bf16.mxu0 0
  %4719 = vmatmul.mubr.bf16.gmra.mrb[0].mxu0 %v4276
  %v4720 = vpop.f32.mrb[0].mxu0
  %v4721 = vadd.f32 0.0, %v4720
  %v4722 = vpop.f32.mrb[0].mxu0
  %v4723 = vpop.f32.mrb[0].mxu0
  %v4724 = vadd.f32 0.0, %v4723
  %v4725 = vpop.f32.mrb[0].mxu0
  %4726 = vmatprep.mubr.bf16.mxu0 0
  %4727 = vmatmul.mubr.bf16.gmra.mrb[0].mxu0 %v4633
  %v4728 = vpop.f32.mrb[0].mxu0
  %v4729 = vadd.f32 0.0, %v4728
  %v4730 = vpop.f32.mrb[0].mxu0
  %v4731 = vpop.f32.mrb[0].mxu0
  %v4732 = vadd.f32 0.0, %v4731
  %v4733 = vpop.f32.mrb[0].mxu0
  %4734 = vdwg.mxu0
  %v4735 = vadd.f32 %v4378, %v4673
  %v4736 = vadd.f32 %v4379, %v4676
  %v4737 = vadd.f32 %v4380, %v4681
  %v4738 = vadd.f32 %v4381, %v4684
  %v4739 = vadd.f32 %v4382, %v4689
  %v4740 = vadd.f32 %v4383, %v4692
  %v4741 = vadd.f32 %v4384, %v4697
  %v4742 = vadd.f32 %v4385, %v4700
  %v4743 = vadd.f32 %v4386, %v4705
  %v4744 = vadd.f32 %v4387, %v4708
  %v4745 = vadd.f32 %v4388, %v4713
  %v4746 = vadd.f32 %v4389, %v4716
  %v4747 = vadd.f32 %v4390, %v4721
  %v4748 = vadd.f32 %v4391, %v4724
  %v4749 = vadd.f32 %v4392, %v4729
  %v4750 = vadd.f32 %v4393, %v4732
  %s4751 = scalar_lea.vmem %s5, 240
  %v4752 = vld [vmem:[%s4751] sm:$0xf]
  %v4753 = vld [vmem:[%s4751 + $0x4] sm:$0xf]
  %v4754 = vld [vmem:[%s4751 + $0x8] sm:$0xf]
  %v4755 = vld [vmem:[%s4751 + $0xc] sm:$0xf]
  %v4756 = vld [vmem:[%s4751 + $0x10] sm:$0xf]
  %v4757 = vld [vmem:[%s4751 + $0x14] sm:$0xf]
  %v4758 = vld [vmem:[%s4751 + $0x18] sm:$0xf]
  %v4759 = vld [vmem:[%s4751 + $0x1c] sm:$0xf]
  %v4760 = vld [vmem:[%s4751 + $0x20] sm:$0xf]
  %v4761 = vld [vmem:[%s4751 + $0x24] sm:$0xf]
  %v4762 = vld [vmem:[%s4751 + $0x28] sm:$0xf]
  %v4763 = vld [vmem:[%s4751 + $0x2c] sm:$0xf]
  %v4764 = vld [vmem:[%s4751 + $0x30] sm:$0xf]
  %v4765 = vld [vmem:[%s4751 + $0x34] sm:$0xf]
  %v4766 = vld [vmem:[%s4751 + $0x38] sm:$0xf]
  %v4782 = vunpack.c.l.b16 %v4752
  %v4783 = vunpack.c.l.b16 %v4753
  %v4784 = vunpack.c.l.b16 %v4754
  %v4785 = vunpack.c.l.b16 %v4755
  %v4786 = vunpack.c.l.b16 %v4756
  %v4787 = vunpack.c.l.b16 %v4757
  %v4788 = vunpack.c.l.b16 %v4758
  %v4789 = vunpack.c.l.b16 %v4759
  %v4790 = vunpack.c.l.b16 %v4760
  %v4791 = vunpack.c.l.b16 %v4761
  %v4792 = vunpack.c.l.b16 %v4762
  %v4793 = vunpack.c.l.b16 %v4763
  %v4794 = vunpack.c.l.b16 %v4764
  %v4795 = vunpack.c.l.b16 %v4765
  %v4796 = vunpack.c.l.b16 %v4766
  %v4797 = vpack.c.b16 %v4783, %v4782
  %v4798 = vpack.c.b16 %v4785, %v4784
  %v4799 = vpack.c.b16 %v4787, %v4786
  %v4800 = vpack.c.b16 %v4789, %v4788
  %v4801 = vpack.c.b16 %v4791, %v4790
  %v4802 = vpack.c.b16 %v4793, %v4792
  %v4803 = vpack.c.b16 %v4795, %v4794
  %v4804 = vpack.c.b16 %v4796, %v4796
  %v4813 = vsel %vm3302, %v4804, 0
  %4815 = vmatprep.subr.bf16.mxu0 0
  %4816 = vmatpush1.bf16.msra.mxu0 %v4797
  %4817 = vmatprep.subr.bf16.mxu0 0
  %4818 = vmatpush1.bf16.msra.mxu0 %v4798
  %4819 = vmatprep.subr.bf16.mxu0 0
  %4820 = vmatpush1.bf16.msra.mxu0 %v4799
  %4821 = vmatprep.subr.bf16.mxu0 0
  %4822 = vmatpush1.bf16.msra.mxu0 %v4800
  %4823 = vmatprep.subr.bf16.mxu0 0
  %4824 = vmatpush1.bf16.msra.mxu0 %v4801
  %4825 = vmatprep.subr.bf16.mxu0 0
  %4826 = vmatpush1.bf16.msra.mxu0 %v4802
  %4827 = vmatprep.subr.bf16.mxu0 0
  %4828 = vmatpush1.bf16.msra.mxu0 %v4803
  %4829 = vmatprep.subr.bf16.mxu0 0
  %4830 = vmatpush1.bf16.msra.mxu0 %v4813
  %4831 = vmatprep.subr.bf16.mxu0 0
  %4832 = vmatpush1.bf16.msra.mxu0 0
  %4833 = vmatprep.subr.bf16.mxu0 0
  %4834 = vmatpush1.bf16.msra.mxu0 0
  %4835 = vmatprep.subr.bf16.mxu0 0
  %4836 = vmatpush1.bf16.msra.mxu0 0
  %4837 = vmatprep.subr.bf16.mxu0 0
  %4838 = vmatpush1.bf16.msra.mxu0 0
  %4839 = vmatprep.subr.bf16.mxu0 0
  %4840 = vmatpush1.bf16.msra.mxu0 0
  %4841 = vmatprep.subr.bf16.mxu0 0
  %4842 = vmatpush1.bf16.msra.mxu0 0
  %4843 = vmatprep.subr.bf16.mxu0 0
  %4844 = vmatpush1.bf16.msra.mxu0 0
  %4845 = vmatprep.subr.bf16.mxu0 0
  %4846 = vmatpush1.bf16.msra.mxu0 0
  %4847 = vmatprep.mubr.bf16.mxu0 0
  %4848 = vmatmul.mubr.bf16.gmra.mrb[0].mxu0 %v3288
  %v4849 = vpop.f32.mrb[0].mxu0
  %v4850 = vadd.f32 0.0, %v4849
  %v4851 = vpop.f32.mrb[0].mxu0
  %v4852 = vpop.f32.mrb[0].mxu0
  %v4853 = vadd.f32 0.0, %v4852
  %v4854 = vpop.f32.mrb[0].mxu0
  %4855 = vmatprep.mubr.bf16.mxu0 0
  %4856 = vmatmul.mubr.bf16.gmra.mrb[0].mxu0 %v3291
  %v4857 = vpop.f32.mrb[0].mxu0
  %v4858 = vadd.f32 0.0, %v4857
  %v4859 = vpop.f32.mrb[0].mxu0
  %v4860 = vpop.f32.mrb[0].mxu0
  %v4861 = vadd.f32 0.0, %v4860
  %v4862 = vpop.f32.mrb[0].mxu0
  %4863 = vmatprep.mubr.bf16.mxu0 0
  %4864 = vmatmul.mubr.bf16.gmra.mrb[0].mxu0 %v3294
  %v4865 = vpop.f32.mrb[0].mxu0
  %v4866 = vadd.f32 0.0, %v4865
  %v4867 = vpop.f32.mrb[0].mxu0
  %v4868 = vpop.f32.mrb[0].mxu0
  %v4869 = vadd.f32 0.0, %v4868
  %v4870 = vpop.f32.mrb[0].mxu0
  %4871 = vmatprep.mubr.bf16.mxu0 0
  %4872 = vmatmul.mubr.bf16.gmra.mrb[0].mxu0 %v3297
  %v4873 = vpop.f32.mrb[0].mxu0
  %v4874 = vadd.f32 0.0, %v4873
  %v4875 = vpop.f32.mrb[0].mxu0
  %v4876 = vpop.f32.mrb[0].mxu0
  %v4877 = vadd.f32 0.0, %v4876
  %v4878 = vpop.f32.mrb[0].mxu0
  %4879 = vmatprep.mubr.bf16.mxu0 0
  %4880 = vmatmul.mubr.bf16.gmra.mrb[0].mxu0 %v3300
  %v4881 = vpop.f32.mrb[0].mxu0
  %v4882 = vadd.f32 0.0, %v4881
  %v4883 = vpop.f32.mrb[0].mxu0
  %v4884 = vpop.f32.mrb[0].mxu0
  %v4885 = vadd.f32 0.0, %v4884
  %v4886 = vpop.f32.mrb[0].mxu0
  %4887 = vmatprep.mubr.bf16.mxu0 0
  %4888 = vmatmul.mubr.bf16.gmra.mrb[0].mxu0 %v3919
  %v4889 = vpop.f32.mrb[0].mxu0
  %v4890 = vadd.f32 0.0, %v4889
  %v4891 = vpop.f32.mrb[0].mxu0
  %v4892 = vpop.f32.mrb[0].mxu0
  %v4893 = vadd.f32 0.0, %v4892
  %v4894 = vpop.f32.mrb[0].mxu0
  %4895 = vmatprep.mubr.bf16.mxu0 0
  %4896 = vmatmul.mubr.bf16.gmra.mrb[0].mxu0 %v4276
  %v4897 = vpop.f32.mrb[0].mxu0
  %v4898 = vadd.f32 0.0, %v4897
  %v4899 = vpop.f32.mrb[0].mxu0
  %v4900 = vpop.f32.mrb[0].mxu0
  %v4901 = vadd.f32 0.0, %v4900
  %v4902 = vpop.f32.mrb[0].mxu0
  %4903 = vmatprep.mubr.bf16.mxu0 0
  %4904 = vmatmul.mubr.bf16.gmra.mrb[0].mxu0 %v4633
  %v4905 = vpop.f32.mrb[0].mxu0
  %v4906 = vadd.f32 0.0, %v4905
  %v4907 = vpop.f32.mrb[0].mxu0
  %v4908 = vpop.f32.mrb[0].mxu0
  %v4909 = vadd.f32 0.0, %v4908
  %v4910 = vpop.f32.mrb[0].mxu0
  %4911 = vdwg.mxu0
  %v4912 = vadd.f32 %v4555, %v4850
  %v4913 = vadd.f32 %v4556, %v4853
  %v4914 = vadd.f32 %v4557, %v4858
  %v4915 = vadd.f32 %v4558, %v4861
  %v4916 = vadd.f32 %v4559, %v4866
  %v4917 = vadd.f32 %v4560, %v4869
  %v4918 = vadd.f32 %v4561, %v4874
  %v4919 = vadd.f32 %v4562, %v4877
  %v4920 = vadd.f32 %v4563, %v4882
  %v4921 = vadd.f32 %v4564, %v4885
  %v4922 = vadd.f32 %v4565, %v4890
  %v4923 = vadd.f32 %v4566, %v4893
  %v4924 = vadd.f32 %v4567, %v4898
  %v4925 = vadd.f32 %v4568, %v4901
  %v4926 = vadd.f32 %v4569, %v4906
  %v4927 = vadd.f32 %v4570, %v4909
  %v4928 = vmax.f32 %v4735, %v4912
  %v4929 = vmax.f32 %v4736, %v4913
  %v4930 = vmax.f32 %v4737, %v4914
  %v4931 = vmax.f32 %v4738, %v4915
  %v4932 = vmax.f32 %v4739, %v4916
  %v4933 = vmax.f32 %v4740, %v4917
  %v4934 = vmax.f32 %v4741, %v4918
  %v4935 = vmax.f32 %v4742, %v4919
  %v4936 = vmax.f32 %v4743, %v4920
  %v4937 = vmax.f32 %v4744, %v4921
  %v4938 = vmax.f32 %v4745, %v4922
  %v4939 = vmax.f32 %v4746, %v4923
  %v4940 = vmax.f32 %v4747, %v4924
  %v4941 = vmax.f32 %v4748, %v4925
  %v4942 = vmax.f32 %v4749, %v4926
  %v4943 = vmax.f32 %v4750, %v4927
  %v4944 = vmax.f32 %v4928, %v4930
  %v4945 = vmax.f32 %v4929, %v4931
  %v4946 = vmax.f32 %v4932, %v4934
  %v4947 = vmax.f32 %v4933, %v4935
  %v4948 = vmax.f32 %v4936, %v4938
  %v4949 = vmax.f32 %v4937, %v4939
  %v4950 = vmax.f32 %v4940, %v4942
  %v4951 = vmax.f32 %v4941, %v4943
  %v4952 = vld [vmem:[%s6] sm:$0x1]
  %v4954 = vlaneseq
  %v4955 = vshrl.u32 %v4954, 7
  %v4956 = vsub.s32 0, %v4955
  %v4957 = vrot.slane %v4952, %v4956
  %v4959 = vadd.f32 %v4944, %v4957
  %v4960 = vadd.f32 %v4945, %v4957
  %v4961 = vadd.f32 %v4946, %v4957
  %v4962 = vadd.f32 %v4947, %v4957
  %v4963 = vadd.f32 %v4948, %v4957
  %v4964 = vadd.f32 %v4949, %v4957
  %v4965 = vadd.f32 %v4950, %v4957
  %v4966 = vadd.f32 %v4951, %v4957
  %v4967 = vmax.f32 %v4959, 0.0
  %v4968 = vmax.f32 %v4960, 0.0
  %v4969 = vmax.f32 %v4961, 0.0
  %v4970 = vmax.f32 %v4962, 0.0
  %v4971 = vmax.f32 %v4963, 0.0
  %v4972 = vmax.f32 %v4964, 0.0
  %v4973 = vmax.f32 %v4965, 0.0
  %v4974 = vmax.f32 %v4966, 0.0
  %v4975 = vpack.c.bf16 %v4968, %v4967
  %v4976 = vpack.c.bf16 %v4970, %v4969
  %v4977 = vpack.c.bf16 %v4972, %v4971
  %v4978 = vpack.c.bf16 %v4974, %v4973
  %v4979 = vld [vmem:[%s7] sm:$0xf]
  %v4980 = vld [vmem:[%s7 + $0x4] sm:$0xf]
  %v4981 = vld [vmem:[%s7 + $0x8] sm:$0xf]
  %v4982 = vld [vmem:[%s7 + $0xc] sm:$0xf]
  %v4983 = vld [vmem:[%s7 + $0x10] sm:$0xf]
  %v4984 = vld [vmem:[%s7 + $0x14] sm:$0xf]
  %v4985 = vld [vmem:[%s7 + $0x18] sm:$0xf]
  %v4986 = vld [vmem:[%s7 + $0x1c] sm:$0xf]
  %v4987 = vld [vmem:[%s7 + $0x20] sm:$0xf]
  %v4988 = vld [vmem:[%s7 + $0x24] sm:$0xf]
  %s4989 = scalar_lea.vmem %s7, 40
  %v4990 = vld [vmem:[%s4989] sm:$0xf]
  %v4991 = vld [vmem:[%s4989 + $0x4] sm:$0xf]
  %v4992 = vld [vmem:[%s4989 + $0x8] sm:$0xf]
  %v4993 = vld [vmem:[%s4989 + $0xc] sm:$0xf]
  %v4994 = vld [vmem:[%s4989 + $0x10] sm:$0xf]
  %v4995 = vld [vmem:[%s4989 + $0x14] sm:$0xf]
  %v4996 = vld [vmem:[%s4989 + $0x18] sm:$0xf]
  %v4997 = vld [vmem:[%s4989 + $0x1c] sm:$0xf]
  %v4998 = vld [vmem:[%s4989 + $0x20] sm:$0xf]
  %v4999 = vld [vmem:[%s4989 + $0x24] sm:$0xf]
  %v5010 = vunpack.c.l.b16 %v4990
  %v5011 = vunpack.c.l.b16 %v4991
  %v5012 = vunpack.c.l.b16 %v4992
  %v5013 = vunpack.c.l.b16 %v4993
  %v5014 = vunpack.c.l.b16 %v4994
  %v5015 = vunpack.c.l.b16 %v4995
  %v5016 = vunpack.c.l.b16 %v4996
  %v5017 = vunpack.c.l.b16 %v4997
  %v5018 = vunpack.c.l.b16 %v4998
  %v5019 = vunpack.c.l.b16 %v4999
  %v5020 = vpack.c.b16 %v5011, %v5010
  %v5021 = vpack.c.b16 %v5013, %v5012
  %v5022 = vpack.c.b16 %v5015, %v5014
  %v5023 = vpack.c.b16 %v5017, %v5016
  %v5024 = vpack.c.b16 %v5019, %v5018
  %vm5030 = vcmask 654336
  %v5032 = vsel %vm5030, %v4976, 0
  %5034 = vmatprep.subr.bf16.mxu0 0
  %5035 = vmatpush1.bf16.msra.mxu0 %v5020
  %5036 = vmatprep.subr.bf16.mxu0 0
  %5037 = vmatpush1.bf16.msra.mxu0 %v5021
  %5038 = vmatprep.subr.bf16.mxu0 0
  %5039 = vmatpush1.bf16.msra.mxu0 %v5022
  %5040 = vmatprep.subr.bf16.mxu0 0
  %5041 = vmatpush1.bf16.msra.mxu0 %v5023
  %5042 = vmatprep.subr.bf16.mxu0 0
  %5043 = vmatpush1.bf16.msra.mxu0 %v5024
  %5044 = vmatprep.subr.bf16.mxu0 0
  %5045 = vmatpush1.bf16.msra.mxu0 0
  %5046 = vmatprep.subr.bf16.mxu0 0
  %5047 = vmatpush1.bf16.msra.mxu0 0
  %5048 = vmatprep.subr.bf16.mxu0 0
  %5049 = vmatpush1.bf16.msra.mxu0 0
  %5050 = vmatprep.subr.bf16.mxu0 0
  %5051 = vmatpush1.bf16.msra.mxu0 0
  %5052 = vmatprep.subr.bf16.mxu0 0
  %5053 = vmatpush1.bf16.msra.mxu0 0
  %5054 = vmatprep.subr.bf16.mxu0 0
  %5055 = vmatpush1.bf16.msra.mxu0 0
  %5056 = vmatprep.subr.bf16.mxu0 0
  %5057 = vmatpush1.bf16.msra.mxu0 0
  %5058 = vmatprep.subr.bf16.mxu0 0
  %5059 = vmatpush1.bf16.msra.mxu0 0
  %5060 = vmatprep.subr.bf16.mxu0 0
  %5061 = vmatpush1.bf16.msra.mxu0 0
  %5062 = vmatprep.subr.bf16.mxu0 0
  %5063 = vmatpush1.bf16.msra.mxu0 0
  %5064 = vmatprep.subr.bf16.mxu0 0
  %5065 = vmatpush1.bf16.msra.mxu0 0
  %5066 = vmatprep.mubr.bf16.mxu0 0
  %5067 = vmatmul.mubr.bf16.gmra.mrb[0].mxu0 %v5032
  %v5068 = vpop.f32.mrb[0].mxu0
  %v5069 = vadd.f32 0.0, %v5068
  %v5070 = vpop.f32.mrb[0].mxu0
  %v5071 = vpop.f32.mrb[0].mxu0
  %v5072 = vadd.f32 0.0, %v5071
  %v5073 = vpop.f32.mrb[0].mxu0
  %5074 = vdwg.mxu0
  %v5085 = vunpack.c.l.b16 %v4979
  %v5086 = vunpack.c.l.b16 %v4980
  %v5087 = vunpack.c.l.b16 %v4981
  %v5088 = vunpack.c.l.b16 %v4982
  %v5089 = vunpack.c.l.b16 %v4983
  %v5090 = vunpack.c.l.b16 %v4984
  %v5091 = vunpack.c.l.b16 %v4985
  %v5092 = vunpack.c.l.b16 %v4986
  %v5093 = vunpack.c.l.b16 %v4987
  %v5094 = vunpack.c.l.b16 %v4988
  %v5095 = vpack.c.b16 %v5086, %v5085
  %v5096 = vpack.c.b16 %v5088, %v5087
  %v5097 = vpack.c.b16 %v5090, %v5089
  %v5098 = vpack.c.b16 %v5092, %v5091
  %v5099 = vpack.c.b16 %v5094, %v5093
  %v5106 = vsel %vm5030, %v4975, 0
  %5108 = vmatprep.subr.bf16.mxu0 0
  %5109 = vmatpush1.bf16.msra.mxu0 %v5095
  %5110 = vmatprep.subr.bf16.mxu0 0
  %5111 = vmatpush1.bf16.msra.mxu0 %v5096
  %5112 = vmatprep.subr.bf16.mxu0 0
  %5113 = vmatpush1.bf16.msra.mxu0 %v5097
  %5114 = vmatprep.subr.bf16.mxu0 0
  %5115 = vmatpush1.bf16.msra.mxu0 %v5098
  %5116 = vmatprep.subr.bf16.mxu0 0
  %5117 = vmatpush1.bf16.msra.mxu0 %v5099
  %5118 = vmatprep.subr.bf16.mxu0 0
  %5119 = vmatpush1.bf16.msra.mxu0 0
  %5120 = vmatprep.subr.bf16.mxu0 0
  %5121 = vmatpush1.bf16.msra.mxu0 0
  %5122 = vmatprep.subr.bf16.mxu0 0
  %5123 = vmatpush1.bf16.msra.mxu0 0
  %5124 = vmatprep.subr.bf16.mxu0 0
  %5125 = vmatpush1.bf16.msra.mxu0 0
  %5126 = vmatprep.subr.bf16.mxu0 0
  %5127 = vmatpush1.bf16.msra.mxu0 0
  %5128 = vmatprep.subr.bf16.mxu0 0
  %5129 = vmatpush1.bf16.msra.mxu0 0
  %5130 = vmatprep.subr.bf16.mxu0 0
  %5131 = vmatpush1.bf16.msra.mxu0 0
  %5132 = vmatprep.subr.bf16.mxu0 0
  %5133 = vmatpush1.bf16.msra.mxu0 0
  %5134 = vmatprep.subr.bf16.mxu0 0
  %5135 = vmatpush1.bf16.msra.mxu0 0
  %5136 = vmatprep.subr.bf16.mxu0 0
  %5137 = vmatpush1.bf16.msra.mxu0 0
  %5138 = vmatprep.subr.bf16.mxu0 0
  %5139 = vmatpush1.bf16.msra.mxu0 0
  %5140 = vmatprep.mubr.bf16.mxu0 0
  %5141 = vmatmul.mubr.bf16.gmra.mrb[0].mxu0 %v5106
  %v5142 = vpop.f32.mrb[0].mxu0
  %v5143 = vadd.f32 %v5069, %v5142
  %v5144 = vpop.f32.mrb[0].mxu0
  %v5145 = vpop.f32.mrb[0].mxu0
  %v5146 = vadd.f32 %v5072, %v5145
  %v5147 = vpop.f32.mrb[0].mxu0
  %5148 = vdwg.mxu0
  %s5149 = scalar_lea.vmem %s7, 80
  %v5150 = vld [vmem:[%s5149] sm:$0xf]
  %v5151 = vld [vmem:[%s5149 + $0x4] sm:$0xf]
  %v5152 = vld [vmem:[%s5149 + $0x8] sm:$0xf]
  %v5153 = vld [vmem:[%s5149 + $0xc] sm:$0xf]
  %v5154 = vld [vmem:[%s5149 + $0x10] sm:$0xf]
  %v5155 = vld [vmem:[%s5149 + $0x14] sm:$0xf]
  %v5156 = vld [vmem:[%s5149 + $0x18] sm:$0xf]
  %v5157 = vld [vmem:[%s5149 + $0x1c] sm:$0xf]
  %v5158 = vld [vmem:[%s5149 + $0x20] sm:$0xf]
  %v5159 = vld [vmem:[%s5149 + $0x24] sm:$0xf]
  %v5170 = vunpack.c.l.b16 %v5150
  %v5171 = vunpack.c.l.b16 %v5151
  %v5172 = vunpack.c.l.b16 %v5152
  %v5173 = vunpack.c.l.b16 %v5153
  %v5174 = vunpack.c.l.b16 %v5154
  %v5175 = vunpack.c.l.b16 %v5155
  %v5176 = vunpack.c.l.b16 %v5156
  %v5177 = vunpack.c.l.b16 %v5157
  %v5178 = vunpack.c.l.b16 %v5158
  %v5179 = vunpack.c.l.b16 %v5159
  %v5180 = vpack.c.b16 %v5171, %v5170
  %v5181 = vpack.c.b16 %v5173, %v5172
  %v5182 = vpack.c.b16 %v5175, %v5174
  %v5183 = vpack.c.b16 %v5177, %v5176
  %v5184 = vpack.c.b16 %v5179, %v5178
  %v5191 = vsel %vm5030, %v4977, 0
  %5193 = vmatprep.subr.bf16.mxu0 0
  %5194 = vmatpush1.bf16.msra.mxu0 %v5180
  %5195 = vmatprep.subr.bf16.mxu0 0
  %5196 = vmatpush1.bf16.msra.mxu0 %v5181
  %5197 = vmatprep.subr.bf16.mxu0 0
  %5198 = vmatpush1.bf16.msra.mxu0 %v5182
  %5199 = vmatprep.subr.bf16.mxu0 0
  %5200 = vmatpush1.bf16.msra.mxu0 %v5183
  %5201 = vmatprep.subr.bf16.mxu0 0
  %5202 = vmatpush1.bf16.msra.mxu0 %v5184
  %5203 = vmatprep.subr.bf16.mxu0 0
  %5204 = vmatpush1.bf16.msra.mxu0 0
  %5205 = vmatprep.subr.bf16.mxu0 0
  %5206 = vmatpush1.bf16.msra.mxu0 0
  %5207 = vmatprep.subr.bf16.mxu0 0
  %5208 = vmatpush1.bf16.msra.mxu0 0
  %5209 = vmatprep.subr.bf16.mxu0 0
  %5210 = vmatpush1.bf16.msra.mxu0 0
  %5211 = vmatprep.subr.bf16.mxu0 0
  %5212 = vmatpush1.bf16.msra.mxu0 0
  %5213 = vmatprep.subr.bf16.mxu0 0
  %5214 = vmatpush1.bf16.msra.mxu0 0
  %5215 = vmatprep.subr.bf16.mxu0 0
  %5216 = vmatpush1.bf16.msra.mxu0 0
  %5217 = vmatprep.subr.bf16.mxu0 0
  %5218 = vmatpush1.bf16.msra.mxu0 0
  %5219 = vmatprep.subr.bf16.mxu0 0
  %5220 = vmatpush1.bf16.msra.mxu0 0
  %5221 = vmatprep.subr.bf16.mxu0 0
  %5222 = vmatpush1.bf16.msra.mxu0 0
  %5223 = vmatprep.subr.bf16.mxu0 0
  %5224 = vmatpush1.bf16.msra.mxu0 0
  %5225 = vmatprep.mubr.bf16.mxu0 0
  %5226 = vmatmul.mubr.bf16.gmra.mrb[0].mxu0 %v5191
  %v5227 = vpop.f32.mrb[0].mxu0
  %v5228 = vadd.f32 0.0, %v5227
  %v5229 = vpop.f32.mrb[0].mxu0
  %v5230 = vpop.f32.mrb[0].mxu0
  %v5231 = vadd.f32 0.0, %v5230
  %v5232 = vpop.f32.mrb[0].mxu0
  %5233 = vdwg.mxu0
  %v5234 = vadd.f32 %v5143, %v5228
  %v5235 = vadd.f32 %v5146, %v5231
  %s5236 = scalar_lea.vmem %s7, 120
  %v5237 = vld [vmem:[%s5236] sm:$0xf]
  %v5238 = vld [vmem:[%s5236 + $0x4] sm:$0xf]
  %v5239 = vld [vmem:[%s5236 + $0x8] sm:$0xf]
  %v5240 = vld [vmem:[%s5236 + $0xc] sm:$0xf]
  %v5241 = vld [vmem:[%s5236 + $0x10] sm:$0xf]
  %v5242 = vld [vmem:[%s5236 + $0x14] sm:$0xf]
  %v5243 = vld [vmem:[%s5236 + $0x18] sm:$0xf]
  %v5244 = vld [vmem:[%s5236 + $0x1c] sm:$0xf]
  %v5245 = vld [vmem:[%s5236 + $0x20] sm:$0xf]
  %v5246 = vld [vmem:[%s5236 + $0x24] sm:$0xf]
  %v5257 = vunpack.c.l.b16 %v5237
  %v5258 = vunpack.c.l.b16 %v5238
  %v5259 = vunpack.c.l.b16 %v5239
  %v5260 = vunpack.c.l.b16 %v5240
  %v5261 = vunpack.c.l.b16 %v5241
  %v5262 = vunpack.c.l.b16 %v5242
  %v5263 = vunpack.c.l.b16 %v5243
  %v5264 = vunpack.c.l.b16 %v5244
  %v5265 = vunpack.c.l.b16 %v5245
  %v5266 = vunpack.c.l.b16 %v5246
  %v5267 = vpack.c.b16 %v5258, %v5257
  %v5268 = vpack.c.b16 %v5260, %v5259
  %v5269 = vpack.c.b16 %v5262, %v5261
  %v5270 = vpack.c.b16 %v5264, %v5263
  %v5271 = vpack.c.b16 %v5266, %v5265
  %v5278 = vsel %vm5030, %v4978, 0
  %5280 = vmatprep.subr.bf16.mxu0 0
  %5281 = vmatpush1.bf16.msra.mxu0 %v5267
  %5282 = vmatprep.subr.bf16.mxu0 0
  %5283 = vmatpush1.bf16.msra.mxu0 %v5268
  %5284 = vmatprep.subr.bf16.mxu0 0
  %5285 = vmatpush1.bf16.msra.mxu0 %v5269
  %5286 = vmatprep.subr.bf16.mxu0 0
  %5287 = vmatpush1.bf16.msra.mxu0 %v5270
  %5288 = vmatprep.subr.bf16.mxu0 0
  %5289 = vmatpush1.bf16.msra.mxu0 %v5271
  %5290 = vmatprep.subr.bf16.mxu0 0
  %5291 = vmatpush1.bf16.msra.mxu0 0
  %5292 = vmatprep.subr.bf16.mxu0 0
  %5293 = vmatpush1.bf16.msra.mxu0 0
  %5294 = vmatprep.subr.bf16.mxu0 0
  %5295 = vmatpush1.bf16.msra.mxu0 0
  %5296 = vmatprep.subr.bf16.mxu0 0
  %5297 = vmatpush1.bf16.msra.mxu0 0
  %5298 = vmatprep.subr.bf16.mxu0 0
  %5299 = vmatpush1.bf16.msra.mxu0 0
  %5300 = vmatprep.subr.bf16.mxu0 0
  %5301 = vmatpush1.bf16.msra.mxu0 0
  %5302 = vmatprep.subr.bf16.mxu0 0
  %5303 = vmatpush1.bf16.msra.mxu0 0
  %5304 = vmatprep.subr.bf16.mxu0 0
  %5305 = vmatpush1.bf16.msra.mxu0 0
  %5306 = vmatprep.subr.bf16.mxu0 0
  %5307 = vmatpush1.bf16.msra.mxu0 0
  %5308 = vmatprep.subr.bf16.mxu0 0
  %5309 = vmatpush1.bf16.msra.mxu0 0
  %5310 = vmatprep.subr.bf16.mxu0 0
  %5311 = vmatpush1.bf16.msra.mxu0 0
  %5312 = vmatprep.mubr.bf16.mxu0 0
  %5313 = vmatmul.mubr.bf16.gmra.mrb[0].mxu0 %v5278
  %v5314 = vpop.f32.mrb[0].mxu0
  %v5315 = vadd.f32 0.0, %v5314
  %v5316 = vpop.f32.mrb[0].mxu0
  %v5317 = vpop.f32.mrb[0].mxu0
  %v5318 = vadd.f32 0.0, %v5317
  %v5319 = vpop.f32.mrb[0].mxu0
  %5320 = vdwg.mxu0
  %v5321 = vadd.f32 %v5234, %v5315
  %v5322 = vadd.f32 %v5235, %v5318
  %v5323 = vld [vmem:[%s8] sm:$0x1]
  %v5325 = vlaneseq
  %v5326 = vshrl.u32 %v5325, 7
  %v5327 = vsub.s32 0, %v5326
  %v5328 = vrot.slane %v5323, %v5327
  %v5330 = vadd.f32 %v5321, %v5328
  %v5331 = vadd.f32 %v5322, %v5328
  %v5332 = vmax.f32 %v5330, 0.0
  %v5333 = vmax.f32 %v5331, 0.0
  %v5334 = vpack.c.bf16 %v5333, %v5332
  %v5335 = vld [vmem:[%s9] sm:$0xf]
  %v5336 = vld [vmem:[%s9 + $0x4] sm:$0xf]
  %v5337 = vld [vmem:[%s9 + $0x8] sm:$0xf]
  %v5338 = vld [vmem:[%s9 + $0xc] sm:$0xf]
  %v5339 = vld [vmem:[%s9 + $0x10] sm:$0xf]
  %v5340 = vld [vmem:[%s9 + $0x14] sm:$0xf]
  %v5341 = vld [vmem:[%s9 + $0x18] sm:$0xf]
  %v5342 = vld [vmem:[%s9 + $0x1c] sm:$0xf]
  %v5343 = vld [vmem:[%s9 + $0x20] sm:$0xf]
  %v5344 = vld [vmem:[%s9 + $0x24] sm:$0xf]
  %v5345 = vld [vmem:[%s9 + $0x28] sm:$0xf]
  %v5346 = vld [vmem:[%s9 + $0x2c] sm:$0xf]
  %v5347 = vld [vmem:[%s9 + $0x30] sm:$0xf]
  %v5348 = vld [vmem:[%s9 + $0x34] sm:$0xf]
  %v5349 = vld [vmem:[%s9 + $0x38] sm:$0xf]
  %v5350 = vld [vmem:[%s9 + $0x3c] sm:$0xf]
  %v5351 = vld [vmem:[%s10] sm:$0x1]
  %v5353 = vlaneseq
  %v5354 = vshrl.u32 %v5353, 7
  %v5355 = vsub.s32 0, %v5354
  %v5356 = vrot.slane %v5351, %v5355
  %v5374 = vunpack.c.l.b16 %v5335
  %v5375 = vunpack.c.l.b16 %v5336
  %v5376 = vunpack.c.l.b16 %v5337
  %v5377 = vunpack.c.l.b16 %v5338
  %v5378 = vunpack.c.l.b16 %v5339
  %v5379 = vunpack.c.l.b16 %v5340
  %v5380 = vunpack.c.l.b16 %v5341
  %v5381 = vunpack.c.l.b16 %v5342
  %v5382 = vunpack.c.l.b16 %v5343
  %v5383 = vunpack.c.l.b16 %v5344
  %v5384 = vunpack.c.l.b16 %v5345
  %v5385 = vunpack.c.l.b16 %v5346
  %v5386 = vunpack.c.l.b16 %v5347
  %v5387 = vunpack.c.l.b16 %v5348
  %v5388 = vunpack.c.l.b16 %v5349
  %v5389 = vunpack.c.l.b16 %v5350
  %v5390 = vpack.c.b16 %v5375, %v5374
  %v5391 = vpack.c.b16 %v5377, %v5376
  %v5392 = vpack.c.b16 %v5379, %v5378
  %v5393 = vpack.c.b16 %v5381, %v5380
  %v5394 = vpack.c.b16 %v5383, %v5382
  %v5395 = vpack.c.b16 %v5385, %v5384
  %v5396 = vpack.c.b16 %v5387, %v5386
  %v5397 = vpack.c.b16 %v5389, %v5388
  %5406 = vmatprep.subr.bf16.mxu0 0
  %5407 = vmatpush1.bf16.msra.mxu0 %v5390
  %5408 = vmatprep.subr.bf16.mxu0 0
  %5409 = vmatpush1.bf16.msra.mxu0 %v5391
  %5410 = vmatprep.subr.bf16.mxu0 0
  %5411 = vmatpush1.bf16.msra.mxu0 %v5392
  %5412 = vmatprep.subr.bf16.mxu0 0
  %5413 = vmatpush1.bf16.msra.mxu0 %v5393
  %5414 = vmatprep.subr.bf16.mxu0 0
  %5415 = vmatpush1.bf16.msra.mxu0 %v5394
  %5416 = vmatprep.subr.bf16.mxu0 0
  %5417 = vmatpush1.bf16.msra.mxu0 %v5395
  %5418 = vmatprep.subr.bf16.mxu0 0
  %5419 = vmatpush1.bf16.msra.mxu0 %v5396
  %5420 = vmatprep.subr.bf16.mxu0 0
  %5421 = vmatpush1.bf16.msra.mxu0 %v5397
  %5422 = vmatprep.subr.bf16.mxu0 0
  %5423 = vmatpush1.bf16.msra.mxu0 0
  %5424 = vmatprep.subr.bf16.mxu0 0
  %5425 = vmatpush1.bf16.msra.mxu0 0
  %5426 = vmatprep.subr.bf16.mxu0 0
  %5427 = vmatpush1.bf16.msra.mxu0 0
  %5428 = vmatprep.subr.bf16.mxu0 0
  %5429 = vmatpush1.bf16.msra.mxu0 0
  %5430 = vmatprep.subr.bf16.mxu0 0
  %5431 = vmatpush1.bf16.msra.mxu0 0
  %5432 = vmatprep.subr.bf16.mxu0 0
  %5433 = vmatpush1.bf16.msra.mxu0 0
  %5434 = vmatprep.subr.bf16.mxu0 0
  %5435 = vmatpush1.bf16.msra.mxu0 0
  %5436 = vmatprep.subr.bf16.mxu0 0
  %5437 = vmatpush1.bf16.msra.mxu0 0
  %5438 = vmatprep.mubr.bf16.mxu0 0
  %5439 = vmatmul.mubr.bf16.gmra.mrb[0].mxu0 %v5334
  %v5440 = vpop.f32.mrb[0].mxu0
  %v5441 = vadd.f32 %v5356, %v5440
  %v5442 = vpop.f32.mrb[0].mxu0
  %v5443 = vpop.f32.mrb[0].mxu0
  %v5444 = vadd.f32 %v5356, %v5443
  %v5445 = vpop.f32.mrb[0].mxu0
  %5446 = vdwg.mxu0
  %5447 = vmax.xlane.f32.xlu0 %v5441
  %v5448 = vpop.xlane.xlu0 %5447
  %5449 = vmax.xlane.f32.xlu0 %v5444
  %v5450 = vpop.xlane.xlu0 %5449
  %v5451 = vsub.f32 %v5441, %v5448
  %v5452 = vsub.f32 %v5444, %v5450
  %v5453 = vmul.f32 %v5451, 1.442695
  %v5454 = vpow.pop %v5453
  %v5455 = vmul.f32 %v5452, 1.442695
  %v5456 = vpow.pop %v5455
  %5457 = vadd.xlane.f32.xlu0 %v5454
  %v5458 = vpop.xlane.xlu0 %5457
  %5459 = vadd.xlane.f32.xlu0 %v5456
  %v5460 = vpop.xlane.xlu0 %5459
  %v5461 = vlog2.pop %v5458
  %v5462 = vmul.f32 %v5461, 0.6931472
  %v5463 = vlog2.pop %v5460
  %v5464 = vmul.f32 %v5463, 0.6931472
  %v5465 = vsub.f32 %v5451, %v5462
  %v5466 = vsub.f32 %v5452, %v5464
  %5467 = vst [vmem:[%s11] sm:$0xff] %v5465
  %5468 = vst [vmem:[%s11 + $0x8] sm:$0xff] %v5466
  // Predicated region
  $region46: #{lenet_forward.1} parent=0 // pred_check
    _
  $region47: #{lenet_forward.1} parent=0 // pred_check_branch
    %5470 = sbr.rel (0) target = $region49
  $region48: #{lenet_forward.1} parent=0 // pred_region
    _
  $region49: #{lenet_forward.1} parent=0 // pred_fallthru
    _
  // Predicated region
  $region50: #{lenet_forward.1} parent=0 // pred_check
    _
  $region51: #{lenet_forward.1} parent=0 // pred_check_branch
    %5472 = sbr.rel (0) target = $region53
  $region52: #{lenet_forward.1} parent=0 // pred_region
    _
  $region53: #{lenet_forward.1} parent=0 // pred_fallthru
    _

</llo_original>
